<compile_context>
chip_gen: v5e
topology: v5e:2x2
jax: 0.10.0
libtpu: 0.0.40
codegen_flags: <defaults>
</compile_context>

<pallas_src>
import functools
import math

import jax
import jax.numpy as jnp
from jax.experimental import pallas as pl
from jax.experimental.pallas import tpu as pltpu


def _full_spec(shape):
    """Single whole-array block (grid-less kernel)."""
    return pl.BlockSpec(shape, lambda: (0,) * len(shape))


# ---------------------------------------------------------------------------
# The fused forward kernel
# ---------------------------------------------------------------------------

def convnet_fused_kernel(xp_ref, w1_ref, g1_ref, bt1_ref,
                         w2_ref, g2_ref, bt2_ref,
                         fc1w_ref, fc1b_ref, fc2w_ref, fc2b_ref,
                         out_ref, x2pad_ref, flat_ref, *, batch, width):
    f32 = jnp.float32
    eps = 1e-5
    c1, c2 = 32, 64
    hp1 = width + 2              # padded input spatial            (18)
    p1 = (hp1 - 1) // 2          # pool1 output spatial            (8)
    hp2 = p1 + 2                 # padded layer-2 spatial          (10)
    p2 = (hp2 - 1) // 2          # pool2 output spatial            (4)
    r1, r2 = hp1 * hp1, hp2 * hp2
    nv1 = batch * (hp1 - 1) ** 2   # valid conv1 positions (B*17*17)
    nv2 = batch * (hp2 - 1) ** 2   # valid conv2 positions (B*9*9)

    def conv_bn_relu(z, shift, cout, nvalid, g, beta):
        # z: (rows, 4*cout) = padded slab @ [W00|W01|W10|W11].
        # conv output row m = sum_k z[m + off_k, block k], offsets {0,1,shift,shift+1}.
        # Seam rows (which would mix neighbouring image rows / images) are exactly
        # zero because every tap they read lies in the zero padding ring, so
        # full-array sums equal sums over the nvalid real positions.
        L = z.shape[0] - shift - 1
        y = (z[0:L,                     0 * cout:1 * cout] +
             z[1:L + 1,                 1 * cout:2 * cout] +
             z[shift:L + shift,         2 * cout:3 * cout] +
             z[shift + 1:L + shift + 1, 3 * cout:4 * cout])
        inv_n = 1.0 / nvalid
        mean = jnp.sum(y, axis=0, keepdims=True) * inv_n
        var = jnp.sum(y * y, axis=0, keepdims=True) * inv_n - mean * mean
        yn = (y - mean) * jax.lax.rsqrt(var + eps) * g + beta
        return jnp.maximum(yn, 0.0)

    def pool_windows(a, shift):
        # MaxPool2d(2,2) step 1: elementwise max of the 4 window corners
        # (row shifts 0, 1, shift, shift+1).  Step 2 (keep every other row)
        # is done by the callers via a one-hot selection matmul / row picks.
        L = a.shape[0] - shift - 1
        return jnp.maximum(jnp.maximum(a[0:L], a[1:L + 1]),
                           jnp.maximum(a[shift:L + shift],
                                       a[shift + 1:L + shift + 1]))

    # ------- layer 1: conv(2->32, k2, s1, p1) + BN + ReLU + maxpool ---------
    z1 = jnp.dot(xp_ref[...], w1_ref[...], preferred_element_type=f32)   # (B*324, 128)
    a1 = conv_bn_relu(z1, hp1, c1, nv1, g1_ref[...], bt1_ref[...])       # (629, 32)
    m1 = pool_windows(a1, hp1)                                           # (610, 32)

    # Scatter pooled rows into the zero-padded layer-2 slab (VMEM scratch only).
    x2pad_ref[...] = jnp.zeros((batch * r2, c1), f32)
    rr = jax.lax.broadcasted_iota(jnp.int32, (p1, 2 * p1), 0)
    cc = jax.lax.broadcasted_iota(jnp.int32, (p1, 2 * p1), 1)
    sel_even = (cc == 2 * rr).astype(f32)                                # (8, 16) even-row picker
    for b in range(batch):
        for i in range(p1):
            src = b * r1 + (2 * i) * hp1
            pooled = jnp.dot(sel_even, m1[src:src + 2 * p1, :],
                             preferred_element_type=f32)                 # (8, 32)
            dst = b * r2 + (i + 1) * hp2 + 1
            x2pad_ref[dst:dst + p1, :] = pooled

    # ------- layer 2: conv(32->64, k2, s1, p1) + BN + ReLU + maxpool --------
    z2 = jnp.dot(x2pad_ref[...], w2_ref[...], preferred_element_type=f32)  # (B*100, 256)
    a2 = conv_bn_relu(z2, hp2, c2, nv2, g2_ref[...], bt2_ref[...])         # (189, 64)
    m2 = pool_windows(a2, hp2)                                             # (178, 64)

    # Pooled rows -> (B, P2*P2*64) fc1 input in NHWC order (fc1_w rows were
    # permuted at init so this matches PyTorch's NCHW flatten exactly).
    for b in range(batch):
        for i in range(p2):
            for j in range(p2):
                src = b * r2 + (2 * i) * hp2 + 2 * j
                col = (i * p2 + j) * c2
                flat_ref[b:b + 1, col:col + c2] = m2[src:src + 1, :]

    # ------- fc1 + ReLU, fc2  (only this result ever hits HBM) --------------
    h = jnp.dot(flat_ref[...], fc1w_ref[...],
                preferred_element_type=f32) + fc1b_ref[...]
    h = jnp.maximum(h, 0.0)
    out_ref[...] = jnp.dot(h, fc2w_ref[...],
                           preferred_element_type=f32) + fc2b_ref[...]


# ---------------------------------------------------------------------------
# Wrapper
# ---------------------------------------------------------------------------

def convnet_forward(x_nchw, params, *, num_action):
    batch, cin, width, _ = x_nchw.shape
    hp1 = width + 2
    p1 = (hp1 - 1) // 2
    hp2 = p1 + 2
    p2 = (hp2 - 1) // 2
    feat = 64 * p2 * p2

    # Tiny layout-only prologue in XLA (a couple of KB): NCHW->NHWC, zero-pad
    # the spatial ring (padding=1) and the channel dim 2->8 so the conv1
    # matmul gets a clean K=8 contraction.  Everything else is one Pallas call.
    x = jnp.transpose(x_nchw.astype(jnp.float32), (0, 2, 3, 1))
    xp = jnp.pad(x, ((0, 0), (1, 1), (1, 1), (0, 0)))
    xp2d = jnp.pad(xp.reshape(batch * hp1 * hp1, cin), ((0, 0), (0, 8 - cin)))

    args = (xp2d, params["w1"], params["g1"], params["beta1"],
            params["w2"], params["g2"], params["beta2"],
            params["fc1_w"], params["fc1_b"], params["fc2_w"], params["fc2_b"])

    return pl.pallas_call(
        functools.partial(convnet_fused_kernel, batch=batch, width=width),
        out_shape=jax.ShapeDtypeStruct((batch, num_action), jnp.float32),
        in_specs=[_full_spec(a.shape) for a in args],
        out_specs=_full_spec((batch, num_action)),
        scratch_shapes=[
            pltpu.VMEM((batch * hp2 * hp2, 32), jnp.float32),  # zero-padded layer-2 slab
            pltpu.VMEM((batch, feat), jnp.float32),            # fc1 input (NHWC flatten)
        ],
    )(*args)


# ---------------------------------------------------------------------------
# Parameter construction (xavier weights, kernel-friendly layouts)
# ---------------------------------------------------------------------------

def init_params(key, input_width, num_hidden, num_action):
    p1 = ((input_width + 2) - 1) // 2
    p2 = ((p1 + 2) - 1) // 2
    feature_size = 64 * p2 * p2
    ks = jax.random.split(key, 6)

    def xavier(k, shape, fan_in, fan_out):
        b = math.sqrt(6.0 / (fan_in + fan_out))
        return jax.random.uniform(k, shape, jnp.float32, -b, b)

    # torch-layout weights
    w1_t = xavier(ks[0], (32, 2, 2, 2), 2 * 4, 32 * 4)          # (Cout, Cin, kh, kw)
    w2_t = xavier(ks[1], (64, 32, 2, 2), 32 * 4, 64 * 4)
    fc1_t = xavier(ks[2], (num_hidden, feature_size), feature_size, num_hidden)
    fc2_t = xavier(ks[3], (num_action, num_hidden), num_hidden, num_action)
    fc1_b = jax.random.uniform(ks[4], (1, num_hidden), jnp.float32,
                               -1 / math.sqrt(feature_size), 1 / math.sqrt(feature_size))
    fc2_b = jax.random.uniform(ks[5], (1, num_action), jnp.float32,
                               -1 / math.sqrt(num_hidden), 1 / math.sqrt(num_hidden))
    # Note: the conv biases of the PyTorch module cancel exactly under
    # training-mode BatchNorm (they shift both the activation and its batch
    # mean), so they are not kernel inputs.

    # (Cout, Cin, 2, 2) -> (Cin, 4*Cout): taps concatenated along the output axis
    # in (di,dj) order (0,0),(0,1),(1,0),(1,1) to match the in-kernel row shifts.
    def pack_conv(wt):
        blocks = [wt[:, :, di, dj].T for (di, dj) in ((0, 0), (0, 1), (1, 0), (1, 1))]
        return jnp.concatenate(blocks, axis=1)

    w1 = jnp.pad(pack_conv(w1_t), ((0, 6), (0, 0)))   # (8, 128), K padded 2->8
    w2 = pack_conv(w2_t)                              # (32, 256)

    # Fold PyTorch's NCHW flatten into a row permutation of fc1's weight:
    # kernel row index = (i*P2 + j)*64 + c  <->  torch column = c*P2*P2 + i*P2 + j.
    fc1_w = jnp.transpose(fc1_t.reshape(num_hidden, 64, p2, p2),
                          (2, 3, 1, 0)).reshape(feature_size, num_hidden)
    fc2_w = fc2_t.T

    return dict(
        w1=w1, g1=jnp.ones((1, 32), jnp.float32), beta1=jnp.zeros((1, 32), jnp.float32),
        w2=w2, g2=jnp.ones((1, 64), jnp.float32), beta2=jnp.zeros((1, 64), jnp.float32),
        fc1_w=fc1_w, fc1_b=fc1_b, fc2_w=fc2_w, fc2_b=fc2_b,
    )


# ---------------------------------------------------------------------------

if __name__ == "__main__":
    input_width = 16
    num_hidden = 32
    num_action = 4
    batch = 2

    key = jax.random.PRNGKey(0)
    k_params, k_x = jax.random.split(key)
    params = init_params(k_params, input_width, num_hidden, num_action)

    x = jax.random.normal(k_x, (batch, 2, input_width, input_width), jnp.float32)

    fwd = jax.jit(functools.partial(convnet_forward, num_action=num_action))
    out = fwd(x, params)
    jax.block_until_ready(out)

    assert out.shape == (batch, num_action), out.shape
    assert bool(jnp.isfinite(out).all())
    print("KERNEL_OK")
</pallas_src>

<mosaic_0001>
module attributes {stable_mosaic.version = 11 : i64} {
  func.func @convnet_fused_kernel(%arg0: memref<648x8xf32, #tpu.memory_space<vmem>>, %arg1: memref<8x128xf32, #tpu.memory_space<vmem>>, %arg2: memref<1x32xf32, #tpu.memory_space<vmem>>, %arg3: memref<1x32xf32, #tpu.memory_space<vmem>>, %arg4: memref<32x256xf32, #tpu.memory_space<vmem>>, %arg5: memref<1x64xf32, #tpu.memory_space<vmem>>, %arg6: memref<1x64xf32, #tpu.memory_space<vmem>>, %arg7: memref<1024x32xf32, #tpu.memory_space<vmem>>, %arg8: memref<1x32xf32, #tpu.memory_space<vmem>>, %arg9: memref<32x4xf32, #tpu.memory_space<vmem>>, %arg10: memref<1x4xf32, #tpu.memory_space<vmem>>, %arg11: memref<2x4xf32, #tpu.memory_space<vmem>>, %arg12: memref<200x32xf32, #tpu.memory_space<vmem>>, %arg13: memref<2x1024xf32, #tpu.memory_space<vmem>>) attributes {dimension_semantics = [], scalar_prefetch = 0 : i64, scratch_operands = 2 : i64, tpu.core_type = #tpu.core_type<tc>} {
    %c0 = arith.constant 0 : index
    %c0_0 = arith.constant 0 : index
    %0 = vector.load %arg0[%c0, %c0_0] : memref<648x8xf32, #tpu.memory_space<vmem>>, vector<648x8xf32>
    %c0_1 = arith.constant 0 : index
    %c0_2 = arith.constant 0 : index
    %1 = vector.load %arg1[%c0_1, %c0_2] : memref<8x128xf32, #tpu.memory_space<vmem>>, vector<8x128xf32>
    %cst = arith.constant dense<0.000000e+00> : vector<648x128xf32>
    %2 = tpu.matmul %0, %1, %cst {dimension_numbers = #tpu.dot_dimension_numbers<[1], [0], [0], [1], [0, 0, 1, 1], [], []>} : vector<648x8xf32>, vector<8x128xf32>, vector<648x128xf32> -> vector<648x128xf32>
    %c0_3 = arith.constant 0 : index
    %c0_4 = arith.constant 0 : index
    %3 = vector.load %arg2[%c0_3, %c0_4] : memref<1x32xf32, #tpu.memory_space<vmem>>, vector<1x32xf32>
    %c0_5 = arith.constant 0 : index
    %c0_6 = arith.constant 0 : index
    %4 = vector.load %arg3[%c0_5, %c0_6] : memref<1x32xf32, #tpu.memory_space<vmem>>, vector<1x32xf32>
    %5 = vector.extract_strided_slice %2 {offsets = [0, 0], sizes = [629, 32], strides = [1, 1]} : vector<648x128xf32> to vector<629x32xf32>
    %6 = vector.extract_strided_slice %2 {offsets = [1, 32], sizes = [629, 32], strides = [1, 1]} : vector<648x128xf32> to vector<629x32xf32>
    %7 = arith.addf %5, %6 : vector<629x32xf32>
    %8 = vector.extract_strided_slice %2 {offsets = [18, 64], sizes = [629, 32], strides = [1, 1]} : vector<648x128xf32> to vector<629x32xf32>
    %9 = arith.addf %7, %8 : vector<629x32xf32>
    %10 = vector.extract_strided_slice %2 {offsets = [19, 96], sizes = [629, 32], strides = [1, 1]} : vector<648x128xf32> to vector<629x32xf32>
    %11 = arith.addf %9, %10 : vector<629x32xf32>
    %cst_7 = arith.constant dense<0.000000e+00> : vector<32xf32>
    %12 = vector.multi_reduction <add>, %11, %cst_7 [0] : vector<629x32xf32> to vector<32xf32>
    %13 = vector.shape_cast %12 : vector<32xf32> to vector<1x32xf32>
    %cst_8 = arith.constant 0.00173010386 : f32
    %14 = vector.broadcast %cst_8 : f32 to vector<1x32xf32>
    %15 = arith.mulf %13, %14 : vector<1x32xf32>
    %16 = arith.mulf %11, %11 : vector<629x32xf32>
    %cst_9 = arith.constant dense<0.000000e+00> : vector<32xf32>
    %17 = vector.multi_reduction <add>, %16, %cst_9 [0] : vector<629x32xf32> to vector<32xf32>
    %18 = vector.shape_cast %17 : vector<32xf32> to vector<1x32xf32>
    %cst_10 = arith.constant 0.00173010386 : f32
    %19 = vector.broadcast %cst_10 : f32 to vector<1x32xf32>
    %20 = arith.mulf %18, %19 : vector<1x32xf32>
    %21 = arith.mulf %15, %15 : vector<1x32xf32>
    %22 = arith.subf %20, %21 : vector<1x32xf32>
    %23 = vector.broadcast %15 : vector<1x32xf32> to vector<629x32xf32>
    %24 = arith.subf %11, %23 : vector<629x32xf32>
    %cst_11 = arith.constant 9.99999974E-6 : f32
    %25 = vector.broadcast %cst_11 : f32 to vector<1x32xf32>
    %26 = arith.addf %22, %25 : vector<1x32xf32>
    %27 = math.rsqrt %26 : vector<1x32xf32>
    %28 = vector.broadcast %27 : vector<1x32xf32> to vector<629x32xf32>
    %29 = arith.mulf %24, %28 : vector<629x32xf32>
    %30 = vector.broadcast %3 : vector<1x32xf32> to vector<629x32xf32>
    %31 = arith.mulf %29, %30 : vector<629x32xf32>
    %32 = vector.broadcast %4 : vector<1x32xf32> to vector<629x32xf32>
    %33 = arith.addf %31, %32 : vector<629x32xf32>
    %cst_12 = arith.constant 0.000000e+00 : f32
    %34 = vector.broadcast %cst_12 : f32 to vector<629x32xf32>
    %35 = arith.maximumf %33, %34 : vector<629x32xf32>
    %36 = vector.extract_strided_slice %35 {offsets = [0, 0], sizes = [610, 32], strides = [1, 1]} : vector<629x32xf32> to vector<610x32xf32>
    %37 = vector.extract_strided_slice %35 {offsets = [1, 0], sizes = [610, 32], strides = [1, 1]} : vector<629x32xf32> to vector<610x32xf32>
    %38 = arith.maximumf %36, %37 : vector<610x32xf32>
    %39 = vector.extract_strided_slice %35 {offsets = [18, 0], sizes = [610, 32], strides = [1, 1]} : vector<629x32xf32> to vector<610x32xf32>
    %40 = vector.extract_strided_slice %35 {offsets = [19, 0], sizes = [610, 32], strides = [1, 1]} : vector<629x32xf32> to vector<610x32xf32>
    %41 = arith.maximumf %39, %40 : vector<610x32xf32>
    %42 = arith.maximumf %38, %41 : vector<610x32xf32>
    %cst_13 = arith.constant 0.000000e+00 : f32
    %43 = vector.broadcast %cst_13 : f32 to vector<200x32xf32>
    %c0_14 = arith.constant 0 : index
    %c0_15 = arith.constant 0 : index
    %44 = vector.load %arg12[%c0_14, %c0_15] : memref<200x32xf32, #tpu.memory_space<vmem>>, vector<200x32xf32>
    tpu.vector_store %arg12[%c0_14, %c0_15], %43 {strides = array<i32>} : memref<200x32xf32, #tpu.memory_space<vmem>>, vector<200x32xf32>,
    %45 = tpu.iota {dimensions = array<i32: 0>} : vector<8x16xi32>
    %46 = tpu.iota {dimensions = array<i32: 1>} : vector<8x16xi32>
    %c2_i32 = arith.constant 2 : i32
    %47 = vector.broadcast %c2_i32 : i32 to vector<8x16xi32>
    %48 = arith.muli %47, %45 : vector<8x16xi32>
    %49 = arith.cmpi eq, %46, %48 : vector<8x16xi32>
    %50 = arith.extui %49 : vector<8x16xi1> to vector<8x16xi32>
    %51 = arith.sitofp %50 : vector<8x16xi32> to vector<8x16xf32>
    %52 = vector.extract_strided_slice %42 {offsets = [0, 0], sizes = [16, 32], strides = [1, 1]} : vector<610x32xf32> to vector<16x32xf32>
    %cst_16 = arith.constant dense<0.000000e+00> : vector<8x32xf32>
    %53 = tpu.matmul %51, %52, %cst_16 {dimension_numbers = #tpu.dot_dimension_numbers<[1], [0], [0], [1], [0, 0, 1, 1], [], []>} : vector<8x16xf32>, vector<16x32xf32>, vector<8x32xf32> -> vector<8x32xf32>
    %c11 = arith.constant 11 : index
    %c0_17 = arith.constant 0 : index
    %54 = vector.load %arg12[%c11, %c0_17] : memref<200x32xf32, #tpu.memory_space<vmem>>, vector<8x32xf32>
    tpu.vector_store %arg12[%c11, %c0_17], %53 {strides = array<i32>} : memref<200x32xf32, #tpu.memory_space<vmem>>, vector<8x32xf32>,
    %55 = vector.extract_strided_slice %42 {offsets = [36, 0], sizes = [16, 32], strides = [1, 1]} : vector<610x32xf32> to vector<16x32xf32>
    %cst_18 = arith.constant dense<0.000000e+00> : vector<8x32xf32>
    %56 = tpu.matmul %51, %55, %cst_18 {dimension_numbers = #tpu.dot_dimension_numbers<[1], [0], [0], [1], [0, 0, 1, 1], [], []>} : vector<8x16xf32>, vector<16x32xf32>, vector<8x32xf32> -> vector<8x32xf32>
    %c21 = arith.constant 21 : index
    %c0_19 = arith.constant 0 : index
    %57 = vector.load %arg12[%c21, %c0_19] : memref<200x32xf32, #tpu.memory_space<vmem>>, vector<8x32xf32>
    tpu.vector_store %arg12[%c21, %c0_19], %56 {strides = array<i32>} : memref<200x32xf32, #tpu.memory_space<vmem>>, vector<8x32xf32>,
    %58 = vector.extract_strided_slice %42 {offsets = [72, 0], sizes = [16, 32], strides = [1, 1]} : vector<610x32xf32> to vector<16x32xf32>
    %cst_20 = arith.constant dense<0.000000e+00> : vector<8x32xf32>
    %59 = tpu.matmul %51, %58, %cst_20 {dimension_numbers = #tpu.dot_dimension_numbers<[1], [0], [0], [1], [0, 0, 1, 1], [], []>} : vector<8x16xf32>, vector<16x32xf32>, vector<8x32xf32> -> vector<8x32xf32>
    %c31 = arith.constant 31 : index
    %c0_21 = arith.constant 0 : index
    %60 = vector.load %arg12[%c31, %c0_21] : memref<200x32xf32, #tpu.memory_space<vmem>>, vector<8x32xf32>
    tpu.vector_store %arg12[%c31, %c0_21], %59 {strides = array<i32>} : memref<200x32xf32, #tpu.memory_space<vmem>>, vector<8x32xf32>,
    %61 = vector.extract_strided_slice %42 {offsets = [108, 0], sizes = [16, 32], strides = [1, 1]} : vector<610x32xf32> to vector<16x32xf32>
    %cst_22 = arith.constant dense<0.000000e+00> : vector<8x32xf32>
    %62 = tpu.matmul %51, %61, %cst_22 {dimension_numbers = #tpu.dot_dimension_numbers<[1], [0], [0], [1], [0, 0, 1, 1], [], []>} : vector<8x16xf32>, vector<16x32xf32>, vector<8x32xf32> -> vector<8x32xf32>
    %c41 = arith.constant 41 : index
    %c0_23 = arith.constant 0 : index
    %63 = vector.load %arg12[%c41, %c0_23] : memref<200x32xf32, #tpu.memory_space<vmem>>, vector<8x32xf32>
    tpu.vector_store %arg12[%c41, %c0_23], %62 {strides = array<i32>} : memref<200x32xf32, #tpu.memory_space<vmem>>, vector<8x32xf32>,
    %64 = vector.extract_strided_slice %42 {offsets = [144, 0], sizes = [16, 32], strides = [1, 1]} : vector<610x32xf32> to vector<16x32xf32>
    %cst_24 = arith.constant dense<0.000000e+00> : vector<8x32xf32>
    %65 = tpu.matmul %51, %64, %cst_24 {dimension_numbers = #tpu.dot_dimension_numbers<[1], [0], [0], [1], [0, 0, 1, 1], [], []>} : vector<8x16xf32>, vector<16x32xf32>, vector<8x32xf32> -> vector<8x32xf32>
    %c51 = arith.constant 51 : index
    %c0_25 = arith.constant 0 : index
    %66 = vector.load %arg12[%c51, %c0_25] : memref<200x32xf32, #tpu.memory_space<vmem>>, vector<8x32xf32>
    tpu.vector_store %arg12[%c51, %c0_25], %65 {strides = array<i32>} : memref<200x32xf32, #tpu.memory_space<vmem>>, vector<8x32xf32>,
    %67 = vector.extract_strided_slice %42 {offsets = [180, 0], sizes = [16, 32], strides = [1, 1]} : vector<610x32xf32> to vector<16x32xf32>
    %cst_26 = arith.constant dense<0.000000e+00> : vector<8x32xf32>
    %68 = tpu.matmul %51, %67, %cst_26 {dimension_numbers = #tpu.dot_dimension_numbers<[1], [0], [0], [1], [0, 0, 1, 1], [], []>} : vector<8x16xf32>, vector<16x32xf32>, vector<8x32xf32> -> vector<8x32xf32>
    %c61 = arith.constant 61 : index
    %c0_27 = arith.constant 0 : index
    %69 = vector.load %arg12[%c61, %c0_27] : memref<200x32xf32, #tpu.memory_space<vmem>>, vector<8x32xf32>
    tpu.vector_store %arg12[%c61, %c0_27], %68 {strides = array<i32>} : memref<200x32xf32, #tpu.memory_space<vmem>>, vector<8x32xf32>,
    %70 = vector.extract_strided_slice %42 {offsets = [216, 0], sizes = [16, 32], strides = [1, 1]} : vector<610x32xf32> to vector<16x32xf32>
    %cst_28 = arith.constant dense<0.000000e+00> : vector<8x32xf32>
    %71 = tpu.matmul %51, %70, %cst_28 {dimension_numbers = #tpu.dot_dimension_numbers<[1], [0], [0], [1], [0, 0, 1, 1], [], []>} : vector<8x16xf32>, vector<16x32xf32>, vector<8x32xf32> -> vector<8x32xf32>
    %c71 = arith.constant 71 : index
    %c0_29 = arith.constant 0 : index
    %72 = vector.load %arg12[%c71, %c0_29] : memref<200x32xf32, #tpu.memory_space<vmem>>, vector<8x32xf32>
    tpu.vector_store %arg12[%c71, %c0_29], %71 {strides = array<i32>} : memref<200x32xf32, #tpu.memory_space<vmem>>, vector<8x32xf32>,
    %73 = vector.extract_strided_slice %42 {offsets = [252, 0], sizes = [16, 32], strides = [1, 1]} : vector<610x32xf32> to vector<16x32xf32>
    %cst_30 = arith.constant dense<0.000000e+00> : vector<8x32xf32>
    %74 = tpu.matmul %51, %73, %cst_30 {dimension_numbers = #tpu.dot_dimension_numbers<[1], [0], [0], [1], [0, 0, 1, 1], [], []>} : vector<8x16xf32>, vector<16x32xf32>, vector<8x32xf32> -> vector<8x32xf32>
    %c81 = arith.constant 81 : index
    %c0_31 = arith.constant 0 : index
    %75 = vector.load %arg12[%c81, %c0_31] : memref<200x32xf32, #tpu.memory_space<vmem>>, vector<8x32xf32>
    tpu.vector_store %arg12[%c81, %c0_31], %74 {strides = array<i32>} : memref<200x32xf32, #tpu.memory_space<vmem>>, vector<8x32xf32>,
    %76 = vector.extract_strided_slice %42 {offsets = [324, 0], sizes = [16, 32], strides = [1, 1]} : vector<610x32xf32> to vector<16x32xf32>
    %cst_32 = arith.constant dense<0.000000e+00> : vector<8x32xf32>
    %77 = tpu.matmul %51, %76, %cst_32 {dimension_numbers = #tpu.dot_dimension_numbers<[1], [0], [0], [1], [0, 0, 1, 1], [], []>} : vector<8x16xf32>, vector<16x32xf32>, vector<8x32xf32> -> vector<8x32xf32>
    %c111 = arith.constant 111 : index
    %c0_33 = arith.constant 0 : index
    %78 = vector.load %arg12[%c111, %c0_33] : memref<200x32xf32, #tpu.memory_space<vmem>>, vector<8x32xf32>
    tpu.vector_store %arg12[%c111, %c0_33], %77 {strides = array<i32>} : memref<200x32xf32, #tpu.memory_space<vmem>>, vector<8x32xf32>,
    %79 = vector.extract_strided_slice %42 {offsets = [360, 0], sizes = [16, 32], strides = [1, 1]} : vector<610x32xf32> to vector<16x32xf32>
    %cst_34 = arith.constant dense<0.000000e+00> : vector<8x32xf32>
    %80 = tpu.matmul %51, %79, %cst_34 {dimension_numbers = #tpu.dot_dimension_numbers<[1], [0], [0], [1], [0, 0, 1, 1], [], []>} : vector<8x16xf32>, vector<16x32xf32>, vector<8x32xf32> -> vector<8x32xf32>
    %c121 = arith.constant 121 : index
    %c0_35 = arith.constant 0 : index
    %81 = vector.load %arg12[%c121, %c0_35] : memref<200x32xf32, #tpu.memory_space<vmem>>, vector<8x32xf32>
    tpu.vector_store %arg12[%c121, %c0_35], %80 {strides = array<i32>} : memref<200x32xf32, #tpu.memory_space<vmem>>, vector<8x32xf32>,
    %82 = vector.extract_strided_slice %42 {offsets = [396, 0], sizes = [16, 32], strides = [1, 1]} : vector<610x32xf32> to vector<16x32xf32>
    %cst_36 = arith.constant dense<0.000000e+00> : vector<8x32xf32>
    %83 = tpu.matmul %51, %82, %cst_36 {dimension_numbers = #tpu.dot_dimension_numbers<[1], [0], [0], [1], [0, 0, 1, 1], [], []>} : vector<8x16xf32>, vector<16x32xf32>, vector<8x32xf32> -> vector<8x32xf32>
    %c131 = arith.constant 131 : index
    %c0_37 = arith.constant 0 : index
    %84 = vector.load %arg12[%c131, %c0_37] : memref<200x32xf32, #tpu.memory_space<vmem>>, vector<8x32xf32>
    tpu.vector_store %arg12[%c131, %c0_37], %83 {strides = array<i32>} : memref<200x32xf32, #tpu.memory_space<vmem>>, vector<8x32xf32>,
    %85 = vector.extract_strided_slice %42 {offsets = [432, 0], sizes = [16, 32], strides = [1, 1]} : vector<610x32xf32> to vector<16x32xf32>
    %cst_38 = arith.constant dense<0.000000e+00> : vector<8x32xf32>
    %86 = tpu.matmul %51, %85, %cst_38 {dimension_numbers = #tpu.dot_dimension_numbers<[1], [0], [0], [1], [0, 0, 1, 1], [], []>} : vector<8x16xf32>, vector<16x32xf32>, vector<8x32xf32> -> vector<8x32xf32>
    %c141 = arith.constant 141 : index
    %c0_39 = arith.constant 0 : index
    %87 = vector.load %arg12[%c141, %c0_39] : memref<200x32xf32, #tpu.memory_space<vmem>>, vector<8x32xf32>
    tpu.vector_store %arg12[%c141, %c0_39], %86 {strides = array<i32>} : memref<200x32xf32, #tpu.memory_space<vmem>>, vector<8x32xf32>,
    %88 = vector.extract_strided_slice %42 {offsets = [468, 0], sizes = [16, 32], strides = [1, 1]} : vector<610x32xf32> to vector<16x32xf32>
    %cst_40 = arith.constant dense<0.000000e+00> : vector<8x32xf32>
    %89 = tpu.matmul %51, %88, %cst_40 {dimension_numbers = #tpu.dot_dimension_numbers<[1], [0], [0], [1], [0, 0, 1, 1], [], []>} : vector<8x16xf32>, vector<16x32xf32>, vector<8x32xf32> -> vector<8x32xf32>
    %c151 = arith.constant 151 : index
    %c0_41 = arith.constant 0 : index
    %90 = vector.load %arg12[%c151, %c0_41] : memref<200x32xf32, #tpu.memory_space<vmem>>, vector<8x32xf32>
    tpu.vector_store %arg12[%c151, %c0_41], %89 {strides = array<i32>} : memref<200x32xf32, #tpu.memory_space<vmem>>, vector<8x32xf32>,
    %91 = vector.extract_strided_slice %42 {offsets = [504, 0], sizes = [16, 32], strides = [1, 1]} : vector<610x32xf32> to vector<16x32xf32>
    %cst_42 = arith.constant dense<0.000000e+00> : vector<8x32xf32>
    %92 = tpu.matmul %51, %91, %cst_42 {dimension_numbers = #tpu.dot_dimension_numbers<[1], [0], [0], [1], [0, 0, 1, 1], [], []>} : vector<8x16xf32>, vector<16x32xf32>, vector<8x32xf32> -> vector<8x32xf32>
    %c161 = arith.constant 161 : index
    %c0_43 = arith.constant 0 : index
    %93 = vector.load %arg12[%c161, %c0_43] : memref<200x32xf32, #tpu.memory_space<vmem>>, vector<8x32xf32>
    tpu.vector_store %arg12[%c161, %c0_43], %92 {strides = array<i32>} : memref<200x32xf32, #tpu.memory_space<vmem>>, vector<8x32xf32>,
    %94 = vector.extract_strided_slice %42 {offsets = [540, 0], sizes = [16, 32], strides = [1, 1]} : vector<610x32xf32> to vector<16x32xf32>
    %cst_44 = arith.constant dense<0.000000e+00> : vector<8x32xf32>
    %95 = tpu.matmul %51, %94, %cst_44 {dimension_numbers = #tpu.dot_dimension_numbers<[1], [0], [0], [1], [0, 0, 1, 1], [], []>} : vector<8x16xf32>, vector<16x32xf32>, vector<8x32xf32> -> vector<8x32xf32>
    %c171 = arith.constant 171 : index
    %c0_45 = arith.constant 0 : index
    %96 = vector.load %arg12[%c171, %c0_45] : memref<200x32xf32, #tpu.memory_space<vmem>>, vector<8x32xf32>
    tpu.vector_store %arg12[%c171, %c0_45], %95 {strides = array<i32>} : memref<200x32xf32, #tpu.memory_space<vmem>>, vector<8x32xf32>,
    %97 = vector.extract_strided_slice %42 {offsets = [576, 0], sizes = [16, 32], strides = [1, 1]} : vector<610x32xf32> to vector<16x32xf32>
    %cst_46 = arith.constant dense<0.000000e+00> : vector<8x32xf32>
    %98 = tpu.matmul %51, %97, %cst_46 {dimension_numbers = #tpu.dot_dimension_numbers<[1], [0], [0], [1], [0, 0, 1, 1], [], []>} : vector<8x16xf32>, vector<16x32xf32>, vector<8x32xf32> -> vector<8x32xf32>
    %c181 = arith.constant 181 : index
    %c0_47 = arith.constant 0 : index
    %99 = vector.load %arg12[%c181, %c0_47] : memref<200x32xf32, #tpu.memory_space<vmem>>, vector<8x32xf32>
    tpu.vector_store %arg12[%c181, %c0_47], %98 {strides = array<i32>} : memref<200x32xf32, #tpu.memory_space<vmem>>, vector<8x32xf32>,
    %c0_48 = arith.constant 0 : index
    %c0_49 = arith.constant 0 : index
    %100 = vector.load %arg12[%c0_48, %c0_49] : memref<200x32xf32, #tpu.memory_space<vmem>>, vector<200x32xf32>
    %c0_50 = arith.constant 0 : index
    %c0_51 = arith.constant 0 : index
    %101 = vector.load %arg4[%c0_50, %c0_51] : memref<32x256xf32, #tpu.memory_space<vmem>>, vector<32x256xf32>
    %cst_52 = arith.constant dense<0.000000e+00> : vector<200x256xf32>
    %102 = tpu.matmul %100, %101, %cst_52 {dimension_numbers = #tpu.dot_dimension_numbers<[1], [0], [0], [1], [0, 0, 1, 1], [], []>} : vector<200x32xf32>, vector<32x256xf32>, vector<200x256xf32> -> vector<200x256xf32>
    %c0_53 = arith.constant 0 : index
    %c0_54 = arith.constant 0 : index
    %103 = vector.load %arg5[%c0_53, %c0_54] : memref<1x64xf32, #tpu.memory_space<vmem>>, vector<1x64xf32>
    %c0_55 = arith.constant 0 : index
    %c0_56 = arith.constant 0 : index
    %104 = vector.load %arg6[%c0_55, %c0_56] : memref<1x64xf32, #tpu.memory_space<vmem>>, vector<1x64xf32>
    %105 = vector.extract_strided_slice %102 {offsets = [0, 0], sizes = [189, 64], strides = [1, 1]} : vector<200x256xf32> to vector<189x64xf32>
    %106 = vector.extract_strided_slice %102 {offsets = [1, 64], sizes = [189, 64], strides = [1, 1]} : vector<200x256xf32> to vector<189x64xf32>
    %107 = arith.addf %105, %106 : vector<189x64xf32>
    %108 = vector.extract_strided_slice %102 {offsets = [10, 128], sizes = [189, 64], strides = [1, 1]} : vector<200x256xf32> to vector<189x64xf32>
    %109 = arith.addf %107, %108 : vector<189x64xf32>
    %110 = vector.extract_strided_slice %102 {offsets = [11, 192], sizes = [189, 64], strides = [1, 1]} : vector<200x256xf32> to vector<189x64xf32>
    %111 = arith.addf %109, %110 : vector<189x64xf32>
    %cst_57 = arith.constant dense<0.000000e+00> : vector<64xf32>
    %112 = vector.multi_reduction <add>, %111, %cst_57 [0] : vector<189x64xf32> to vector<64xf32>
    %113 = vector.shape_cast %112 : vector<64xf32> to vector<1x64xf32>
    %cst_58 = arith.constant 0.00617283955 : f32
    %114 = vector.broadcast %cst_58 : f32 to vector<1x64xf32>
    %115 = arith.mulf %113, %114 : vector<1x64xf32>
    %116 = arith.mulf %111, %111 : vector<189x64xf32>
    %cst_59 = arith.constant dense<0.000000e+00> : vector<64xf32>
    %117 = vector.multi_reduction <add>, %116, %cst_59 [0] : vector<189x64xf32> to vector<64xf32>
    %118 = vector.shape_cast %117 : vector<64xf32> to vector<1x64xf32>
    %cst_60 = arith.constant 0.00617283955 : f32
    %119 = vector.broadcast %cst_60 : f32 to vector<1x64xf32>
    %120 = arith.mulf %118, %119 : vector<1x64xf32>
    %121 = arith.mulf %115, %115 : vector<1x64xf32>
    %122 = arith.subf %120, %121 : vector<1x64xf32>
    %123 = vector.broadcast %115 : vector<1x64xf32> to vector<189x64xf32>
    %124 = arith.subf %111, %123 : vector<189x64xf32>
    %cst_61 = arith.constant 9.99999974E-6 : f32
    %125 = vector.broadcast %cst_61 : f32 to vector<1x64xf32>
    %126 = arith.addf %122, %125 : vector<1x64xf32>
    %127 = math.rsqrt %126 : vector<1x64xf32>
    %128 = vector.broadcast %127 : vector<1x64xf32> to vector<189x64xf32>
    %129 = arith.mulf %124, %128 : vector<189x64xf32>
    %130 = vector.broadcast %103 : vector<1x64xf32> to vector<189x64xf32>
    %131 = arith.mulf %129, %130 : vector<189x64xf32>
    %132 = vector.broadcast %104 : vector<1x64xf32> to vector<189x64xf32>
    %133 = arith.addf %131, %132 : vector<189x64xf32>
    %cst_62 = arith.constant 0.000000e+00 : f32
    %134 = vector.broadcast %cst_62 : f32 to vector<189x64xf32>
    %135 = arith.maximumf %133, %134 : vector<189x64xf32>
    %136 = vector.extract_strided_slice %135 {offsets = [0, 0], sizes = [178, 64], strides = [1, 1]} : vector<189x64xf32> to vector<178x64xf32>
    %137 = vector.extract_strided_slice %135 {offsets = [1, 0], sizes = [178, 64], strides = [1, 1]} : vector<189x64xf32> to vector<178x64xf32>
    %138 = arith.maximumf %136, %137 : vector<178x64xf32>
    %139 = vector.extract_strided_slice %135 {offsets = [10, 0], sizes = [178, 64], strides = [1, 1]} : vector<189x64xf32> to vector<178x64xf32>
    %140 = vector.extract_strided_slice %135 {offsets = [11, 0], sizes = [178, 64], strides = [1, 1]} : vector<189x64xf32> to vector<178x64xf32>
    %141 = arith.maximumf %139, %140 : vector<178x64xf32>
    %142 = arith.maximumf %138, %141 : vector<178x64xf32>
    %143 = vector.extract_strided_slice %142 {offsets = [0, 0], sizes = [1, 64], strides = [1, 1]} : vector<178x64xf32> to vector<1x64xf32>
    %c0_63 = arith.constant 0 : index
    %c0_64 = arith.constant 0 : index
    %144 = vector.load %arg13[%c0_63, %c0_64] : memref<2x1024xf32, #tpu.memory_space<vmem>>, vector<1x64xf32>
    tpu.vector_store %arg13[%c0_63, %c0_64], %143 {strides = array<i32>} : memref<2x1024xf32, #tpu.memory_space<vmem>>, vector<1x64xf32>,
    %145 = vector.extract_strided_slice %142 {offsets = [2, 0], sizes = [1, 64], strides = [1, 1]} : vector<178x64xf32> to vector<1x64xf32>
    %c0_65 = arith.constant 0 : index
    %c64 = arith.constant 64 : index
    %146 = vector.load %arg13[%c0_65, %c64] : memref<2x1024xf32, #tpu.memory_space<vmem>>, vector<1x64xf32>
    tpu.vector_store %arg13[%c0_65, %c64], %145 {strides = array<i32>} : memref<2x1024xf32, #tpu.memory_space<vmem>>, vector<1x64xf32>,
    %147 = vector.extract_strided_slice %142 {offsets = [4, 0], sizes = [1, 64], strides = [1, 1]} : vector<178x64xf32> to vector<1x64xf32>
    %c0_66 = arith.constant 0 : index
    %c128 = arith.constant 128 : index
    %148 = vector.load %arg13[%c0_66, %c128] : memref<2x1024xf32, #tpu.memory_space<vmem>>, vector<1x64xf32>
    tpu.vector_store %arg13[%c0_66, %c128], %147 {strides = array<i32>} : memref<2x1024xf32, #tpu.memory_space<vmem>>, vector<1x64xf32>,
    %149 = vector.extract_strided_slice %142 {offsets = [6, 0], sizes = [1, 64], strides = [1, 1]} : vector<178x64xf32> to vector<1x64xf32>
    %c0_67 = arith.constant 0 : index
    %c192 = arith.constant 192 : index
    %150 = vector.load %arg13[%c0_67, %c192] : memref<2x1024xf32, #tpu.memory_space<vmem>>, vector<1x64xf32>
    tpu.vector_store %arg13[%c0_67, %c192], %149 {strides = array<i32>} : memref<2x1024xf32, #tpu.memory_space<vmem>>, vector<1x64xf32>,
    %151 = vector.extract_strided_slice %142 {offsets = [20, 0], sizes = [1, 64], strides = [1, 1]} : vector<178x64xf32> to vector<1x64xf32>
    %c0_68 = arith.constant 0 : index
    %c256 = arith.constant 256 : index
    %152 = vector.load %arg13[%c0_68, %c256] : memref<2x1024xf32, #tpu.memory_space<vmem>>, vector<1x64xf32>
    tpu.vector_store %arg13[%c0_68, %c256], %151 {strides = array<i32>} : memref<2x1024xf32, #tpu.memory_space<vmem>>, vector<1x64xf32>,
    %153 = vector.extract_strided_slice %142 {offsets = [22, 0], sizes = [1, 64], strides = [1, 1]} : vector<178x64xf32> to vector<1x64xf32>
    %c0_69 = arith.constant 0 : index
    %c320 = arith.constant 320 : index
    %154 = vector.load %arg13[%c0_69, %c320] : memref<2x1024xf32, #tpu.memory_space<vmem>>, vector<1x64xf32>
    tpu.vector_store %arg13[%c0_69, %c320], %153 {strides = array<i32>} : memref<2x1024xf32, #tpu.memory_space<vmem>>, vector<1x64xf32>,
    %155 = vector.extract_strided_slice %142 {offsets = [24, 0], sizes = [1, 64], strides = [1, 1]} : vector<178x64xf32> to vector<1x64xf32>
    %c0_70 = arith.constant 0 : index
    %c384 = arith.constant 384 : index
    %156 = vector.load %arg13[%c0_70, %c384] : memref<2x1024xf32, #tpu.memory_space<vmem>>, vector<1x64xf32>
    tpu.vector_store %arg13[%c0_70, %c384], %155 {strides = array<i32>} : memref<2x1024xf32, #tpu.memory_space<vmem>>, vector<1x64xf32>,
    %157 = vector.extract_strided_slice %142 {offsets = [26, 0], sizes = [1, 64], strides = [1, 1]} : vector<178x64xf32> to vector<1x64xf32>
    %c0_71 = arith.constant 0 : index
    %c448 = arith.constant 448 : index
    %158 = vector.load %arg13[%c0_71, %c448] : memref<2x1024xf32, #tpu.memory_space<vmem>>, vector<1x64xf32>
    tpu.vector_store %arg13[%c0_71, %c448], %157 {strides = array<i32>} : memref<2x1024xf32, #tpu.memory_space<vmem>>, vector<1x64xf32>,
    %159 = vector.extract_strided_slice %142 {offsets = [40, 0], sizes = [1, 64], strides = [1, 1]} : vector<178x64xf32> to vector<1x64xf32>
    %c0_72 = arith.constant 0 : index
    %c512 = arith.constant 512 : index
    %160 = vector.load %arg13[%c0_72, %c512] : memref<2x1024xf32, #tpu.memory_space<vmem>>, vector<1x64xf32>
    tpu.vector_store %arg13[%c0_72, %c512], %159 {strides = array<i32>} : memref<2x1024xf32, #tpu.memory_space<vmem>>, vector<1x64xf32>,
    %161 = vector.extract_strided_slice %142 {offsets = [42, 0], sizes = [1, 64], strides = [1, 1]} : vector<178x64xf32> to vector<1x64xf32>
    %c0_73 = arith.constant 0 : index
    %c576 = arith.constant 576 : index
    %162 = vector.load %arg13[%c0_73, %c576] : memref<2x1024xf32, #tpu.memory_space<vmem>>, vector<1x64xf32>
    tpu.vector_store %arg13[%c0_73, %c576], %161 {strides = array<i32>} : memref<2x1024xf32, #tpu.memory_space<vmem>>, vector<1x64xf32>,
    %163 = vector.extract_strided_slice %142 {offsets = [44, 0], sizes = [1, 64], strides = [1, 1]} : vector<178x64xf32> to vector<1x64xf32>
    %c0_74 = arith.constant 0 : index
    %c640 = arith.constant 640 : index
    %164 = vector.load %arg13[%c0_74, %c640] : memref<2x1024xf32, #tpu.memory_space<vmem>>, vector<1x64xf32>
    tpu.vector_store %arg13[%c0_74, %c640], %163 {strides = array<i32>} : memref<2x1024xf32, #tpu.memory_space<vmem>>, vector<1x64xf32>,
    %165 = vector.extract_strided_slice %142 {offsets = [46, 0], sizes = [1, 64], strides = [1, 1]} : vector<178x64xf32> to vector<1x64xf32>
    %c0_75 = arith.constant 0 : index
    %c704 = arith.constant 704 : index
    %166 = vector.load %arg13[%c0_75, %c704] : memref<2x1024xf32, #tpu.memory_space<vmem>>, vector<1x64xf32>
    tpu.vector_store %arg13[%c0_75, %c704], %165 {strides = array<i32>} : memref<2x1024xf32, #tpu.memory_space<vmem>>, vector<1x64xf32>,
    %167 = vector.extract_strided_slice %142 {offsets = [60, 0], sizes = [1, 64], strides = [1, 1]} : vector<178x64xf32> to vector<1x64xf32>
    %c0_76 = arith.constant 0 : index
    %c768 = arith.constant 768 : index
    %168 = vector.load %arg13[%c0_76, %c768] : memref<2x1024xf32, #tpu.memory_space<vmem>>, vector<1x64xf32>
    tpu.vector_store %arg13[%c0_76, %c768], %167 {strides = array<i32>} : memref<2x1024xf32, #tpu.memory_space<vmem>>, vector<1x64xf32>,
    %169 = vector.extract_strided_slice %142 {offsets = [62, 0], sizes = [1, 64], strides = [1, 1]} : vector<178x64xf32> to vector<1x64xf32>
    %c0_77 = arith.constant 0 : index
    %c832 = arith.constant 832 : index
    %170 = vector.load %arg13[%c0_77, %c832] : memref<2x1024xf32, #tpu.memory_space<vmem>>, vector<1x64xf32>
    tpu.vector_store %arg13[%c0_77, %c832], %169 {strides = array<i32>} : memref<2x1024xf32, #tpu.memory_space<vmem>>, vector<1x64xf32>,
    %171 = vector.extract_strided_slice %142 {offsets = [64, 0], sizes = [1, 64], strides = [1, 1]} : vector<178x64xf32> to vector<1x64xf32>
    %c0_78 = arith.constant 0 : index
    %c896 = arith.constant 896 : index
    %172 = vector.load %arg13[%c0_78, %c896] : memref<2x1024xf32, #tpu.memory_space<vmem>>, vector<1x64xf32>
    tpu.vector_store %arg13[%c0_78, %c896], %171 {strides = array<i32>} : memref<2x1024xf32, #tpu.memory_space<vmem>>, vector<1x64xf32>,
    %173 = vector.extract_strided_slice %142 {offsets = [66, 0], sizes = [1, 64], strides = [1, 1]} : vector<178x64xf32> to vector<1x64xf32>
    %c0_79 = arith.constant 0 : index
    %c960 = arith.constant 960 : index
    %174 = vector.load %arg13[%c0_79, %c960] : memref<2x1024xf32, #tpu.memory_space<vmem>>, vector<1x64xf32>
    tpu.vector_store %arg13[%c0_79, %c960], %173 {strides = array<i32>} : memref<2x1024xf32, #tpu.memory_space<vmem>>, vector<1x64xf32>,
    %175 = vector.extract_strided_slice %142 {offsets = [100, 0], sizes = [1, 64], strides = [1, 1]} : vector<178x64xf32> to vector<1x64xf32>
    %c1 = arith.constant 1 : index
    %c0_80 = arith.constant 0 : index
    %176 = vector.load %arg13[%c1, %c0_80] : memref<2x1024xf32, #tpu.memory_space<vmem>>, vector<1x64xf32>
    tpu.vector_store %arg13[%c1, %c0_80], %175 {strides = array<i32>} : memref<2x1024xf32, #tpu.memory_space<vmem>>, vector<1x64xf32>,
    %177 = vector.extract_strided_slice %142 {offsets = [102, 0], sizes = [1, 64], strides = [1, 1]} : vector<178x64xf32> to vector<1x64xf32>
    %c1_81 = arith.constant 1 : index
    %c64_82 = arith.constant 64 : index
    %178 = vector.load %arg13[%c1_81, %c64_82] : memref<2x1024xf32, #tpu.memory_space<vmem>>, vector<1x64xf32>
    tpu.vector_store %arg13[%c1_81, %c64_82], %177 {strides = array<i32>} : memref<2x1024xf32, #tpu.memory_space<vmem>>, vector<1x64xf32>,
    %179 = vector.extract_strided_slice %142 {offsets = [104, 0], sizes = [1, 64], strides = [1, 1]} : vector<178x64xf32> to vector<1x64xf32>
    %c1_83 = arith.constant 1 : index
    %c128_84 = arith.constant 128 : index
    %180 = vector.load %arg13[%c1_83, %c128_84] : memref<2x1024xf32, #tpu.memory_space<vmem>>, vector<1x64xf32>
    tpu.vector_store %arg13[%c1_83, %c128_84], %179 {strides = array<i32>} : memref<2x1024xf32, #tpu.memory_space<vmem>>, vector<1x64xf32>,
    %181 = vector.extract_strided_slice %142 {offsets = [106, 0], sizes = [1, 64], strides = [1, 1]} : vector<178x64xf32> to vector<1x64xf32>
    %c1_85 = arith.constant 1 : index
    %c192_86 = arith.constant 192 : index
    %182 = vector.load %arg13[%c1_85, %c192_86] : memref<2x1024xf32, #tpu.memory_space<vmem>>, vector<1x64xf32>
    tpu.vector_store %arg13[%c1_85, %c192_86], %181 {strides = array<i32>} : memref<2x1024xf32, #tpu.memory_space<vmem>>, vector<1x64xf32>,
    %183 = vector.extract_strided_slice %142 {offsets = [120, 0], sizes = [1, 64], strides = [1, 1]} : vector<178x64xf32> to vector<1x64xf32>
    %c1_87 = arith.constant 1 : index
    %c256_88 = arith.constant 256 : index
    %184 = vector.load %arg13[%c1_87, %c256_88] : memref<2x1024xf32, #tpu.memory_space<vmem>>, vector<1x64xf32>
    tpu.vector_store %arg13[%c1_87, %c256_88], %183 {strides = array<i32>} : memref<2x1024xf32, #tpu.memory_space<vmem>>, vector<1x64xf32>,
    %185 = vector.extract_strided_slice %142 {offsets = [122, 0], sizes = [1, 64], strides = [1, 1]} : vector<178x64xf32> to vector<1x64xf32>
    %c1_89 = arith.constant 1 : index
    %c320_90 = arith.constant 320 : index
    %186 = vector.load %arg13[%c1_89, %c320_90] : memref<2x1024xf32, #tpu.memory_space<vmem>>, vector<1x64xf32>
    tpu.vector_store %arg13[%c1_89, %c320_90], %185 {strides = array<i32>} : memref<2x1024xf32, #tpu.memory_space<vmem>>, vector<1x64xf32>,
    %187 = vector.extract_strided_slice %142 {offsets = [124, 0], sizes = [1, 64], strides = [1, 1]} : vector<178x64xf32> to vector<1x64xf32>
    %c1_91 = arith.constant 1 : index
    %c384_92 = arith.constant 384 : index
    %188 = vector.load %arg13[%c1_91, %c384_92] : memref<2x1024xf32, #tpu.memory_space<vmem>>, vector<1x64xf32>
    tpu.vector_store %arg13[%c1_91, %c384_92], %187 {strides = array<i32>} : memref<2x1024xf32, #tpu.memory_space<vmem>>, vector<1x64xf32>,
    %189 = vector.extract_strided_slice %142 {offsets = [126, 0], sizes = [1, 64], strides = [1, 1]} : vector<178x64xf32> to vector<1x64xf32>
    %c1_93 = arith.constant 1 : index
    %c448_94 = arith.constant 448 : index
    %190 = vector.load %arg13[%c1_93, %c448_94] : memref<2x1024xf32, #tpu.memory_space<vmem>>, vector<1x64xf32>
    tpu.vector_store %arg13[%c1_93, %c448_94], %189 {strides = array<i32>} : memref<2x1024xf32, #tpu.memory_space<vmem>>, vector<1x64xf32>,
    %191 = vector.extract_strided_slice %142 {offsets = [140, 0], sizes = [1, 64], strides = [1, 1]} : vector<178x64xf32> to vector<1x64xf32>
    %c1_95 = arith.constant 1 : index
    %c512_96 = arith.constant 512 : index
    %192 = vector.load %arg13[%c1_95, %c512_96] : memref<2x1024xf32, #tpu.memory_space<vmem>>, vector<1x64xf32>
    tpu.vector_store %arg13[%c1_95, %c512_96], %191 {strides = array<i32>} : memref<2x1024xf32, #tpu.memory_space<vmem>>, vector<1x64xf32>,
    %193 = vector.extract_strided_slice %142 {offsets = [142, 0], sizes = [1, 64], strides = [1, 1]} : vector<178x64xf32> to vector<1x64xf32>
    %c1_97 = arith.constant 1 : index
    %c576_98 = arith.constant 576 : index
    %194 = vector.load %arg13[%c1_97, %c576_98] : memref<2x1024xf32, #tpu.memory_space<vmem>>, vector<1x64xf32>
    tpu.vector_store %arg13[%c1_97, %c576_98], %193 {strides = array<i32>} : memref<2x1024xf32, #tpu.memory_space<vmem>>, vector<1x64xf32>,
    %195 = vector.extract_strided_slice %142 {offsets = [144, 0], sizes = [1, 64], strides = [1, 1]} : vector<178x64xf32> to vector<1x64xf32>
    %c1_99 = arith.constant 1 : index
    %c640_100 = arith.constant 640 : index
    %196 = vector.load %arg13[%c1_99, %c640_100] : memref<2x1024xf32, #tpu.memory_space<vmem>>, vector<1x64xf32>
    tpu.vector_store %arg13[%c1_99, %c640_100], %195 {strides = array<i32>} : memref<2x1024xf32, #tpu.memory_space<vmem>>, vector<1x64xf32>,
    %197 = vector.extract_strided_slice %142 {offsets = [146, 0], sizes = [1, 64], strides = [1, 1]} : vector<178x64xf32> to vector<1x64xf32>
    %c1_101 = arith.constant 1 : index
    %c704_102 = arith.constant 704 : index
    %198 = vector.load %arg13[%c1_101, %c704_102] : memref<2x1024xf32, #tpu.memory_space<vmem>>, vector<1x64xf32>
    tpu.vector_store %arg13[%c1_101, %c704_102], %197 {strides = array<i32>} : memref<2x1024xf32, #tpu.memory_space<vmem>>, vector<1x64xf32>,
    %199 = vector.extract_strided_slice %142 {offsets = [160, 0], sizes = [1, 64], strides = [1, 1]} : vector<178x64xf32> to vector<1x64xf32>
    %c1_103 = arith.constant 1 : index
    %c768_104 = arith.constant 768 : index
    %200 = vector.load %arg13[%c1_103, %c768_104] : memref<2x1024xf32, #tpu.memory_space<vmem>>, vector<1x64xf32>
    tpu.vector_store %arg13[%c1_103, %c768_104], %199 {strides = array<i32>} : memref<2x1024xf32, #tpu.memory_space<vmem>>, vector<1x64xf32>,
    %201 = vector.extract_strided_slice %142 {offsets = [162, 0], sizes = [1, 64], strides = [1, 1]} : vector<178x64xf32> to vector<1x64xf32>
    %c1_105 = arith.constant 1 : index
    %c832_106 = arith.constant 832 : index
    %202 = vector.load %arg13[%c1_105, %c832_106] : memref<2x1024xf32, #tpu.memory_space<vmem>>, vector<1x64xf32>
    tpu.vector_store %arg13[%c1_105, %c832_106], %201 {strides = array<i32>} : memref<2x1024xf32, #tpu.memory_space<vmem>>, vector<1x64xf32>,
    %203 = vector.extract_strided_slice %142 {offsets = [164, 0], sizes = [1, 64], strides = [1, 1]} : vector<178x64xf32> to vector<1x64xf32>
    %c1_107 = arith.constant 1 : index
    %c896_108 = arith.constant 896 : index
    %204 = vector.load %arg13[%c1_107, %c896_108] : memref<2x1024xf32, #tpu.memory_space<vmem>>, vector<1x64xf32>
    tpu.vector_store %arg13[%c1_107, %c896_108], %203 {strides = array<i32>} : memref<2x1024xf32, #tpu.memory_space<vmem>>, vector<1x64xf32>,
    %205 = vector.extract_strided_slice %142 {offsets = [166, 0], sizes = [1, 64], strides = [1, 1]} : vector<178x64xf32> to vector<1x64xf32>
    %c1_109 = arith.constant 1 : index
    %c960_110 = arith.constant 960 : index
    %206 = vector.load %arg13[%c1_109, %c960_110] : memref<2x1024xf32, #tpu.memory_space<vmem>>, vector<1x64xf32>
    tpu.vector_store %arg13[%c1_109, %c960_110], %205 {strides = array<i32>} : memref<2x1024xf32, #tpu.memory_space<vmem>>, vector<1x64xf32>,
    %c0_111 = arith.constant 0 : index
    %c0_112 = arith.constant 0 : index
    %207 = vector.load %arg13[%c0_111, %c0_112] : memref<2x1024xf32, #tpu.memory_space<vmem>>, vector<2x1024xf32>
    %c0_113 = arith.constant 0 : index
    %c0_114 = arith.constant 0 : index
    %208 = vector.load %arg7[%c0_113, %c0_114] : memref<1024x32xf32, #tpu.memory_space<vmem>>, vector<1024x32xf32>
    %cst_115 = arith.constant dense<0.000000e+00> : vector<2x32xf32>
    %209 = tpu.matmul %207, %208, %cst_115 {dimension_numbers = #tpu.dot_dimension_numbers<[1], [0], [0], [1], [0, 0, 1, 1], [], []>} : vector<2x1024xf32>, vector<1024x32xf32>, vector<2x32xf32> -> vector<2x32xf32>
    %c0_116 = arith.constant 0 : index
    %c0_117 = arith.constant 0 : index
    %210 = vector.load %arg8[%c0_116, %c0_117] : memref<1x32xf32, #tpu.memory_space<vmem>>, vector<1x32xf32>
    %211 = vector.broadcast %210 : vector<1x32xf32> to vector<2x32xf32>
    %212 = arith.addf %209, %211 : vector<2x32xf32>
    %cst_118 = arith.constant 0.000000e+00 : f32
    %213 = vector.broadcast %cst_118 : f32 to vector<2x32xf32>
    %214 = arith.maximumf %212, %213 : vector<2x32xf32>
    %c0_119 = arith.constant 0 : index
    %c0_120 = arith.constant 0 : index
    %215 = vector.load %arg9[%c0_119, %c0_120] : memref<32x4xf32, #tpu.memory_space<vmem>>, vector<32x4xf32>
    %cst_121 = arith.constant dense<0.000000e+00> : vector<2x4xf32>
    %216 = tpu.matmul %214, %215, %cst_121 {dimension_numbers = #tpu.dot_dimension_numbers<[1], [0], [0], [1], [0, 0, 1, 1], [], []>} : vector<2x32xf32>, vector<32x4xf32>, vector<2x4xf32> -> vector<2x4xf32>
    %c0_122 = arith.constant 0 : index
    %c0_123 = arith.constant 0 : index
    %217 = vector.load %arg10[%c0_122, %c0_123] : memref<1x4xf32, #tpu.memory_space<vmem>>, vector<1x4xf32>
    %218 = vector.broadcast %217 : vector<1x4xf32> to vector<2x4xf32>
    %219 = arith.addf %216, %218 : vector<2x4xf32>
    %c0_124 = arith.constant 0 : index
    %c0_125 = arith.constant 0 : index
    %220 = vector.load %arg11[%c0_124, %c0_125] : memref<2x4xf32, #tpu.memory_space<vmem>>, vector<2x4xf32>
    tpu.vector_store %arg11[%c0_124, %c0_125], %219 {strides = array<i32>} : memref<2x4xf32, #tpu.memory_space<vmem>>, vector<2x4xf32>,
    return
  }
}

</mosaic_0001>

<llo_original>
// kernel: convnet_forward.1
$region0: #{convnet_forward.1}
  #allocation0 [shape = 'u32[]', space=smem, size = 0x4, offset = 0x4, fixed_abs, tag = 'smem constant byte address 0x4 - core index']
  #allocation1 [shape = 'u32[72,128]{1,0:T(1,128)}', space=vmem, size = 0x9000, scoped, tag = 'internal scratch']
  #allocation2 [shape = 'f32[200,32]{1,0:T(8,128)}', space=vmem, size = 0x19000, scoped, tag = 'scratch operand']
  #allocation3 [shape = 'f32[2,1024]{1,0:T(2,128)}', space=vmem, size = 0x2000, scoped, tag = 'scratch operand']
  %s0 = inlined_call_operand.vmem [shape: f32[648,8], index: 0, kind: input, shape index: {}]
  %s1 = inlined_call_operand.vmem [shape: f32[8,128], index: 1, kind: input, shape index: {}]
  %s2 = inlined_call_operand.vmem [shape: f32[1,32], index: 2, kind: input, shape index: {}]
  %s3 = inlined_call_operand.vmem [shape: f32[1,32], index: 3, kind: input, shape index: {}]
  %s4 = inlined_call_operand.vmem [shape: f32[32,256], index: 4, kind: input, shape index: {}]
  %s5 = inlined_call_operand.vmem [shape: f32[1,64], index: 5, kind: input, shape index: {}]
  %s6 = inlined_call_operand.vmem [shape: f32[1,64], index: 6, kind: input, shape index: {}]
  %s7 = inlined_call_operand.vmem [shape: f32[1024,32], index: 7, kind: input, shape index: {}]
  %s8 = inlined_call_operand.vmem [shape: f32[1,32], index: 8, kind: input, shape index: {}]
  %s9 = inlined_call_operand.vmem [shape: f32[32,4], index: 9, kind: input, shape index: {}]
  %s10 = inlined_call_operand.vmem [shape: f32[1,4], index: 10, kind: input, shape index: {}]
  %s11 = inlined_call_operand.hbm [shape: f32[2,4], index: 11, kind: output, shape index: {}]
  %s12 = sld [smem:[#allocation0]]
  $region54: #{convnet_forward.1} parent=0
    _
  %s14 = ssub.s32 1, %s12
  %s15 = scalar_select 0, %s14, %s12
  $region1: #{convnet_forward.1} parent=0
    #allocation4 [shape = 'u8[1024]{0}', space=vmem, size = 0x400, scoped, tag = 'output window, operand 0, single buffered']
    #allocation5 [shape = 's32[1]{0}', space=sflag, size = 0x4, scoped, tag = 'scoped memory for convnet_forward.1']
    %16 = vsyncpa [#allocation5], 0
    // Predicated region
    $region2: #{convnet_forward.1} parent=1 // pred_check
      _
    $region3: #{convnet_forward.1} parent=1 // pred_check_branch
      %18 = sbr.rel (0) target = $region5
    $region4: #{convnet_forward.1} parent=1 // pred_region
      _
    $region5: #{convnet_forward.1} parent=1 // pred_fallthru
      _
    // Predicated region
    $region6: #{convnet_forward.1} parent=1 // pred_check
      _
    $region7: #{convnet_forward.1} parent=1 // pred_check_branch
      %20 = sbr.rel (0) target = $region9
    $region8: #{convnet_forward.1} parent=1 // pred_region
      _
    $region9: #{convnet_forward.1} parent=1 // pred_fallthru
      _
    // Predicated region
    $region10: #{convnet_forward.1} parent=1 // pred_check
      _
    $region11: #{convnet_forward.1} parent=1 // pred_check_branch
      %22 = sbr.rel (0) target = $region13
    $region12: #{convnet_forward.1} parent=1 // pred_region
      _
    $region13: #{convnet_forward.1} parent=1 // pred_fallthru
      _
    // Predicated region
    $region14: #{convnet_forward.1} parent=1 // pred_check
      _
    $region15: #{convnet_forward.1} parent=1 // pred_check_branch
      %24 = sbr.rel (0) target = $region17
    $region16: #{convnet_forward.1} parent=1 // pred_region
      _
    $region17: #{convnet_forward.1} parent=1 // pred_fallthru
      _
    // Predicated region
    $region18: #{convnet_forward.1} parent=1 // pred_check
      _
    $region19: #{convnet_forward.1} parent=1 // pred_check_branch
      %26 = sbr.rel (0) target = $region21
    $region20: #{convnet_forward.1} parent=1 // pred_region
      _
    $region21: #{convnet_forward.1} parent=1 // pred_fallthru
      _
    // Predicated region
    $region22: #{convnet_forward.1} parent=1 // pred_check
      _
    $region23: #{convnet_forward.1} parent=1 // pred_check_branch
      %28 = sbr.rel (0) target = $region25
    $region24: #{convnet_forward.1} parent=1 // pred_region
      _
    $region25: #{convnet_forward.1} parent=1 // pred_fallthru
      _
    // Predicated region
    $region26: #{convnet_forward.1} parent=1 // pred_check
      _
    $region27: #{convnet_forward.1} parent=1 // pred_check_branch
      %30 = sbr.rel (0) target = $region29
    $region28: #{convnet_forward.1} parent=1 // pred_region
      _
    $region29: #{convnet_forward.1} parent=1 // pred_fallthru
      _
    // Predicated region
    $region30: #{convnet_forward.1} parent=1 // pred_check
      _
    $region31: #{convnet_forward.1} parent=1 // pred_check_branch
      %32 = sbr.rel (0) target = $region33
    $region32: #{convnet_forward.1} parent=1 // pred_region
      _
    $region33: #{convnet_forward.1} parent=1 // pred_fallthru
      _
    // Predicated region
    $region34: #{convnet_forward.1} parent=1 // pred_check
      _
    $region35: #{convnet_forward.1} parent=1 // pred_check_branch
      %34 = sbr.rel (0) target = $region37
    $region36: #{convnet_forward.1} parent=1 // pred_region
      _
    $region37: #{convnet_forward.1} parent=1 // pred_fallthru
      _
    // Predicated region
    $region38: #{convnet_forward.1} parent=1 // pred_check
      _
    $region39: #{convnet_forward.1} parent=1 // pred_check_branch
      %36 = sbr.rel (0) target = $region41
    $region40: #{convnet_forward.1} parent=1 // pred_region
      _
    $region41: #{convnet_forward.1} parent=1 // pred_fallthru
      _
    // Predicated region
    $region42: #{convnet_forward.1} parent=1 // pred_check
      _
    $region43: #{convnet_forward.1} parent=1 // pred_check_branch
      %38 = sbr.rel (0) target = $region45
    $region44: #{convnet_forward.1} parent=1 // pred_region
      _
    $region45: #{convnet_forward.1} parent=1 // pred_fallthru
      _
    %v39 = vld [vmem:[%s0] sm:$0xff]
    %v40 = vld [vmem:[%s0 + $0x8] sm:$0xff]
    %v41 = vld [vmem:[%s0 + $0x10] sm:$0xff]
    %v42 = vld [vmem:[%s0 + $0x18] sm:$0xff]
    %v43 = vld [vmem:[%s0 + $0x20] sm:$0xff]
    %v44 = vld [vmem:[%s0 + $0x28] sm:$0xff]
    %v45 = vld [vmem:[%s0 + $0x30] sm:$0xff]
    %v46 = vld [vmem:[%s0 + $0x38] sm:$0xff]
    %v47 = vld [vmem:[%s0 + $0x40] sm:$0xff]
    %v48 = vld [vmem:[%s0 + $0x48] sm:$0xff]
    %v49 = vld [vmem:[%s0 + $0x50] sm:$0xff]
    %v50 = vld [vmem:[%s0 + $0x58] sm:$0xff]
    %v51 = vld [vmem:[%s0 + $0x60] sm:$0xff]
    %v52 = vld [vmem:[%s0 + $0x68] sm:$0xff]
    %v53 = vld [vmem:[%s0 + $0x70] sm:$0xff]
    %v54 = vld [vmem:[%s0 + $0x78] sm:$0xff]
    %v55 = vld [vmem:[%s0 + $0x80] sm:$0xff]
    %v56 = vld [vmem:[%s0 + $0x88] sm:$0xff]
    %v57 = vld [vmem:[%s0 + $0x90] sm:$0xff]
    %v58 = vld [vmem:[%s0 + $0x98] sm:$0xff]
    %v59 = vld [vmem:[%s0 + $0xa0] sm:$0xff]
    %v60 = vld [vmem:[%s0 + $0xa8] sm:$0xff]
    %v61 = vld [vmem:[%s0 + $0xb0] sm:$0xff]
    %v62 = vld [vmem:[%s0 + $0xb8] sm:$0xff]
    %v63 = vld [vmem:[%s0 + $0xc0] sm:$0xff]
    %v64 = vld [vmem:[%s0 + $0xc8] sm:$0xff]
    %v65 = vld [vmem:[%s0 + $0xd0] sm:$0xff]
    %v66 = vld [vmem:[%s0 + $0xd8] sm:$0xff]
    %v67 = vld [vmem:[%s0 + $0xe0] sm:$0xff]
    %v68 = vld [vmem:[%s0 + $0xe8] sm:$0xff]
    %v69 = vld [vmem:[%s0 + $0xf0] sm:$0xff]
    %v70 = vld [vmem:[%s0 + $0xf8] sm:$0xff]
    %v71 = vld [vmem:[%s0 + $0x100] sm:$0xff]
    %v72 = vld [vmem:[%s0 + $0x108] sm:$0xff]
    %v73 = vld [vmem:[%s0 + $0x110] sm:$0xff]
    %v74 = vld [vmem:[%s0 + $0x118] sm:$0xff]
    %v75 = vld [vmem:[%s0 + $0x120] sm:$0xff]
    %v76 = vld [vmem:[%s0 + $0x128] sm:$0xff]
    %v77 = vld [vmem:[%s0 + $0x130] sm:$0xff]
    %v78 = vld [vmem:[%s0 + $0x138] sm:$0xff]
    %v79 = vld [vmem:[%s0 + $0x140] sm:$0xff]
    %v80 = vld [vmem:[%s0 + $0x148] sm:$0xff]
    %v81 = vld [vmem:[%s0 + $0x150] sm:$0xff]
    %v82 = vld [vmem:[%s0 + $0x158] sm:$0xff]
    %v83 = vld [vmem:[%s0 + $0x160] sm:$0xff]
    %v84 = vld [vmem:[%s0 + $0x168] sm:$0xff]
    %v85 = vld [vmem:[%s0 + $0x170] sm:$0xff]
    %v86 = vld [vmem:[%s0 + $0x178] sm:$0xff]
    %v87 = vld [vmem:[%s0 + $0x180] sm:$0xff]
    %v88 = vld [vmem:[%s0 + $0x188] sm:$0xff]
    %v89 = vld [vmem:[%s0 + $0x190] sm:$0xff]
    %v90 = vld [vmem:[%s0 + $0x198] sm:$0xff]
    %v91 = vld [vmem:[%s0 + $0x1a0] sm:$0xff]
    %v92 = vld [vmem:[%s0 + $0x1a8] sm:$0xff]
    %v93 = vld [vmem:[%s0 + $0x1b0] sm:$0xff]
    %v94 = vld [vmem:[%s0 + $0x1b8] sm:$0xff]
    %v95 = vld [vmem:[%s0 + $0x1c0] sm:$0xff]
    %v96 = vld [vmem:[%s0 + $0x1c8] sm:$0xff]
    %v97 = vld [vmem:[%s0 + $0x1d0] sm:$0xff]
    %v98 = vld [vmem:[%s0 + $0x1d8] sm:$0xff]
    %v99 = vld [vmem:[%s0 + $0x1e0] sm:$0xff]
    %v100 = vld [vmem:[%s0 + $0x1e8] sm:$0xff]
    %v101 = vld [vmem:[%s0 + $0x1f0] sm:$0xff]
    %v102 = vld [vmem:[%s0 + $0x1f8] sm:$0xff]
    %v103 = vld [vmem:[%s0 + $0x200] sm:$0xff]
    %v104 = vld [vmem:[%s0 + $0x208] sm:$0xff]
    %v105 = vld [vmem:[%s0 + $0x210] sm:$0xff]
    %v106 = vld [vmem:[%s0 + $0x218] sm:$0xff]
    %v107 = vld [vmem:[%s0 + $0x220] sm:$0xff]
    %v108 = vld [vmem:[%s0 + $0x228] sm:$0xff]
    %v109 = vld [vmem:[%s0 + $0x230] sm:$0xff]
    %v110 = vld [vmem:[%s0 + $0x238] sm:$0xff]
    %v111 = vld [vmem:[%s0 + $0x240] sm:$0xff]
    %v112 = vld [vmem:[%s0 + $0x248] sm:$0xff]
    %v113 = vld [vmem:[%s0 + $0x250] sm:$0xff]
    %v114 = vld [vmem:[%s0 + $0x258] sm:$0xff]
    %v115 = vld [vmem:[%s0 + $0x260] sm:$0xff]
    %v116 = vld [vmem:[%s0 + $0x268] sm:$0xff]
    %v117 = vld [vmem:[%s0 + $0x270] sm:$0xff]
    %v118 = vld [vmem:[%s0 + $0x278] sm:$0xff]
    %v119 = vld [vmem:[%s0 + $0x280] sm:$0xff]
    %v120 = vld [vmem:[%s1] sm:$0xff]
    %vm121 = vcmask 64512
    %v123 = vsel %vm121, %v39, 0
    %v126 = vsel %vm121, %v40, 0
    %v129 = vsel %vm121, %v41, 0
    %v132 = vsel %vm121, %v42, 0
    %v135 = vsel %vm121, %v43, 0
    %v138 = vsel %vm121, %v44, 0
    %v141 = vsel %vm121, %v45, 0
    %v144 = vsel %vm121, %v46, 0
    %v147 = vsel %vm121, %v47, 0
    %v150 = vsel %vm121, %v48, 0
    %v153 = vsel %vm121, %v49, 0
    %v156 = vsel %vm121, %v50, 0
    %v159 = vsel %vm121, %v51, 0
    %v162 = vsel %vm121, %v52, 0
    %v165 = vsel %vm121, %v53, 0
    %v168 = vsel %vm121, %v54, 0
    %v171 = vsel %vm121, %v55, 0
    %v174 = vsel %vm121, %v56, 0
    %v177 = vsel %vm121, %v57, 0
    %v180 = vsel %vm121, %v58, 0
    %v183 = vsel %vm121, %v59, 0
    %v186 = vsel %vm121, %v60, 0
    %v189 = vsel %vm121, %v61, 0
    %v192 = vsel %vm121, %v62, 0
    %v195 = vsel %vm121, %v63, 0
    %v198 = vsel %vm121, %v64, 0
    %v201 = vsel %vm121, %v65, 0
    %v204 = vsel %vm121, %v66, 0
    %v207 = vsel %vm121, %v67, 0
    %v210 = vsel %vm121, %v68, 0
    %v213 = vsel %vm121, %v69, 0
    %v216 = vsel %vm121, %v70, 0
    %v219 = vsel %vm121, %v71, 0
    %v222 = vsel %vm121, %v72, 0
    %v225 = vsel %vm121, %v73, 0
    %v228 = vsel %vm121, %v74, 0
    %v231 = vsel %vm121, %v75, 0
    %v234 = vsel %vm121, %v76, 0
    %v237 = vsel %vm121, %v77, 0
    %v240 = vsel %vm121, %v78, 0
    %v243 = vsel %vm121, %v79, 0
    %v246 = vsel %vm121, %v80, 0
    %v249 = vsel %vm121, %v81, 0
    %v252 = vsel %vm121, %v82, 0
    %v255 = vsel %vm121, %v83, 0
    %v258 = vsel %vm121, %v84, 0
    %v261 = vsel %vm121, %v85, 0
    %v264 = vsel %vm121, %v86, 0
    %v267 = vsel %vm121, %v87, 0
    %v270 = vsel %vm121, %v88, 0
    %v273 = vsel %vm121, %v89, 0
    %v276 = vsel %vm121, %v90, 0
    %v279 = vsel %vm121, %v91, 0
    %v282 = vsel %vm121, %v92, 0
    %v285 = vsel %vm121, %v93, 0
    %v288 = vsel %vm121, %v94, 0
    %v291 = vsel %vm121, %v95, 0
    %v294 = vsel %vm121, %v96, 0
    %v297 = vsel %vm121, %v97, 0
    %v300 = vsel %vm121, %v98, 0
    %v303 = vsel %vm121, %v99, 0
    %v306 = vsel %vm121, %v100, 0
    %v309 = vsel %vm121, %v101, 0
    %v312 = vsel %vm121, %v102, 0
    %v315 = vsel %vm121, %v103, 0
    %v318 = vsel %vm121, %v104, 0
    %v321 = vsel %vm121, %v105, 0
    %v324 = vsel %vm121, %v106, 0
    %v327 = vsel %vm121, %v107, 0
    %v330 = vsel %vm121, %v108, 0
    %v333 = vsel %vm121, %v109, 0
    %v336 = vsel %vm121, %v110, 0
    %v339 = vsel %vm121, %v111, 0
    %v342 = vsel %vm121, %v112, 0
    %v345 = vsel %vm121, %v113, 0
    %v348 = vsel %vm121, %v114, 0
    %v351 = vsel %vm121, %v115, 0
    %v354 = vsel %vm121, %v116, 0
    %v357 = vsel %vm121, %v117, 0
    %v360 = vsel %vm121, %v118, 0
    %v363 = vsel %vm121, %v119, 0
    %365 = vmatpush.msra.mxu0 0.0
    %366 = vmatpush.msra.mxu0 0.0
    %367 = vmatpush.msra.mxu0 0.0
    %368 = vmatpush.msra.mxu0 0.0
    %369 = vmatpush.msra.mxu0 0.0
    %370 = vmatpush.msra.mxu0 0.0
    %371 = vmatpush.msra.mxu0 0.0
    %372 = vmatpush.msra.mxu0 0.0
    %373 = vmatpush.msra.mxu0 0.0
    %374 = vmatpush.msra.mxu0 0.0
    %375 = vmatpush.msra.mxu0 0.0
    %376 = vmatpush.msra.mxu0 0.0
    %377 = vmatpush.msra.mxu0 0.0
    %378 = vmatpush.msra.mxu0 0.0
    %379 = vmatpush.msra.mxu0 0.0
    %380 = vmatpush.msra.mxu0 %v120
    %381 = vmatmul.f32.gmra.mxu0 %v123
    %v382 = vpop.f32.mrf.mxu0
    %v383 = vadd.f32 0.0, %v382
    %384 = vmatmul.f32.gmra.mxu0 %v126
    %v385 = vpop.f32.mrf.mxu0
    %v386 = vadd.f32 0.0, %v385
    %387 = vmatmul.f32.gmra.mxu0 %v129
    %v388 = vpop.f32.mrf.mxu0
    %v389 = vadd.f32 0.0, %v388
    %390 = vmatmul.f32.gmra.mxu0 %v132
    %v391 = vpop.f32.mrf.mxu0
    %v392 = vadd.f32 0.0, %v391
    %393 = vmatmul.f32.gmra.mxu0 %v135
    %v394 = vpop.f32.mrf.mxu0
    %v395 = vadd.f32 0.0, %v394
    %396 = vmatmul.f32.gmra.mxu0 %v138
    %v397 = vpop.f32.mrf.mxu0
    %v398 = vadd.f32 0.0, %v397
    %399 = vmatmul.f32.gmra.mxu0 %v141
    %v400 = vpop.f32.mrf.mxu0
    %v401 = vadd.f32 0.0, %v400
    %402 = vmatmul.f32.gmra.mxu0 %v144
    %v403 = vpop.f32.mrf.mxu0
    %v404 = vadd.f32 0.0, %v403
    %405 = vmatmul.f32.gmra.mxu0 %v147
    %v406 = vpop.f32.mrf.mxu0
    %v407 = vadd.f32 0.0, %v406
    %408 = vmatmul.f32.gmra.mxu0 %v150
    %v409 = vpop.f32.mrf.mxu0
    %v410 = vadd.f32 0.0, %v409
    %411 = vmatmul.f32.gmra.mxu0 %v153
    %v412 = vpop.f32.mrf.mxu0
    %v413 = vadd.f32 0.0, %v412
    %414 = vmatmul.f32.gmra.mxu0 %v156
    %v415 = vpop.f32.mrf.mxu0
    %v416 = vadd.f32 0.0, %v415
    %417 = vmatmul.f32.gmra.mxu0 %v159
    %v418 = vpop.f32.mrf.mxu0
    %v419 = vadd.f32 0.0, %v418
    %420 = vmatmul.f32.gmra.mxu0 %v162
    %v421 = vpop.f32.mrf.mxu0
    %v422 = vadd.f32 0.0, %v421
    %423 = vmatmul.f32.gmra.mxu0 %v165
    %v424 = vpop.f32.mrf.mxu0
    %v425 = vadd.f32 0.0, %v424
    %426 = vmatmul.f32.gmra.mxu0 %v168
    %v427 = vpop.f32.mrf.mxu0
    %v428 = vadd.f32 0.0, %v427
    %429 = vmatmul.f32.gmra.mxu0 %v171
    %v430 = vpop.f32.mrf.mxu0
    %v431 = vadd.f32 0.0, %v430
    %432 = vmatmul.f32.gmra.mxu0 %v174
    %v433 = vpop.f32.mrf.mxu0
    %v434 = vadd.f32 0.0, %v433
    %435 = vmatmul.f32.gmra.mxu0 %v177
    %v436 = vpop.f32.mrf.mxu0
    %v437 = vadd.f32 0.0, %v436
    %438 = vmatmul.f32.gmra.mxu0 %v180
    %v439 = vpop.f32.mrf.mxu0
    %v440 = vadd.f32 0.0, %v439
    %441 = vmatmul.f32.gmra.mxu0 %v183
    %v442 = vpop.f32.mrf.mxu0
    %v443 = vadd.f32 0.0, %v442
    %444 = vmatmul.f32.gmra.mxu0 %v186
    %v445 = vpop.f32.mrf.mxu0
    %v446 = vadd.f32 0.0, %v445
    %447 = vmatmul.f32.gmra.mxu0 %v189
    %v448 = vpop.f32.mrf.mxu0
    %v449 = vadd.f32 0.0, %v448
    %450 = vmatmul.f32.gmra.mxu0 %v192
    %v451 = vpop.f32.mrf.mxu0
    %v452 = vadd.f32 0.0, %v451
    %453 = vmatmul.f32.gmra.mxu0 %v195
    %v454 = vpop.f32.mrf.mxu0
    %v455 = vadd.f32 0.0, %v454
    %456 = vmatmul.f32.gmra.mxu0 %v198
    %v457 = vpop.f32.mrf.mxu0
    %v458 = vadd.f32 0.0, %v457
    %459 = vmatmul.f32.gmra.mxu0 %v201
    %v460 = vpop.f32.mrf.mxu0
    %v461 = vadd.f32 0.0, %v460
    %462 = vmatmul.f32.gmra.mxu0 %v204
    %v463 = vpop.f32.mrf.mxu0
    %v464 = vadd.f32 0.0, %v463
    %465 = vmatmul.f32.gmra.mxu0 %v207
    %v466 = vpop.f32.mrf.mxu0
    %v467 = vadd.f32 0.0, %v466
    %468 = vmatmul.f32.gmra.mxu0 %v210
    %v469 = vpop.f32.mrf.mxu0
    %v470 = vadd.f32 0.0, %v469
    %471 = vmatmul.f32.gmra.mxu0 %v213
    %v472 = vpop.f32.mrf.mxu0
    %v473 = vadd.f32 0.0, %v472
    %474 = vmatmul.f32.gmra.mxu0 %v216
    %v475 = vpop.f32.mrf.mxu0
    %v476 = vadd.f32 0.0, %v475
    %477 = vmatmul.f32.gmra.mxu0 %v219
    %v478 = vpop.f32.mrf.mxu0
    %v479 = vadd.f32 0.0, %v478
    %480 = vmatmul.f32.gmra.mxu0 %v222
    %v481 = vpop.f32.mrf.mxu0
    %v482 = vadd.f32 0.0, %v481
    %483 = vmatmul.f32.gmra.mxu0 %v225
    %v484 = vpop.f32.mrf.mxu0
    %v485 = vadd.f32 0.0, %v484
    %486 = vmatmul.f32.gmra.mxu0 %v228
    %v487 = vpop.f32.mrf.mxu0
    %v488 = vadd.f32 0.0, %v487
    %489 = vmatmul.f32.gmra.mxu0 %v231
    %v490 = vpop.f32.mrf.mxu0
    %v491 = vadd.f32 0.0, %v490
    %492 = vmatmul.f32.gmra.mxu0 %v234
    %v493 = vpop.f32.mrf.mxu0
    %v494 = vadd.f32 0.0, %v493
    %495 = vmatmul.f32.gmra.mxu0 %v237
    %v496 = vpop.f32.mrf.mxu0
    %v497 = vadd.f32 0.0, %v496
    %498 = vmatmul.f32.gmra.mxu0 %v240
    %v499 = vpop.f32.mrf.mxu0
    %v500 = vadd.f32 0.0, %v499
    %501 = vmatmul.f32.gmra.mxu0 %v243
    %v502 = vpop.f32.mrf.mxu0
    %v503 = vadd.f32 0.0, %v502
    %504 = vmatmul.f32.gmra.mxu0 %v246
    %v505 = vpop.f32.mrf.mxu0
    %v506 = vadd.f32 0.0, %v505
    %507 = vmatmul.f32.gmra.mxu0 %v249
    %v508 = vpop.f32.mrf.mxu0
    %v509 = vadd.f32 0.0, %v508
    %510 = vmatmul.f32.gmra.mxu0 %v252
    %v511 = vpop.f32.mrf.mxu0
    %v512 = vadd.f32 0.0, %v511
    %513 = vmatmul.f32.gmra.mxu0 %v255
    %v514 = vpop.f32.mrf.mxu0
    %v515 = vadd.f32 0.0, %v514
    %516 = vmatmul.f32.gmra.mxu0 %v258
    %v517 = vpop.f32.mrf.mxu0
    %v518 = vadd.f32 0.0, %v517
    %519 = vmatmul.f32.gmra.mxu0 %v261
    %v520 = vpop.f32.mrf.mxu0
    %v521 = vadd.f32 0.0, %v520
    %522 = vmatmul.f32.gmra.mxu0 %v264
    %v523 = vpop.f32.mrf.mxu0
    %v524 = vadd.f32 0.0, %v523
    %525 = vmatmul.f32.gmra.mxu0 %v267
    %v526 = vpop.f32.mrf.mxu0
    %v527 = vadd.f32 0.0, %v526
    %528 = vmatmul.f32.gmra.mxu0 %v270
    %v529 = vpop.f32.mrf.mxu0
    %v530 = vadd.f32 0.0, %v529
    %531 = vmatmul.f32.gmra.mxu0 %v273
    %v532 = vpop.f32.mrf.mxu0
    %v533 = vadd.f32 0.0, %v532
    %534 = vmatmul.f32.gmra.mxu0 %v276
    %v535 = vpop.f32.mrf.mxu0
    %v536 = vadd.f32 0.0, %v535
    %537 = vmatmul.f32.gmra.mxu0 %v279
    %v538 = vpop.f32.mrf.mxu0
    %v539 = vadd.f32 0.0, %v538
    %540 = vmatmul.f32.gmra.mxu0 %v282
    %v541 = vpop.f32.mrf.mxu0
    %v542 = vadd.f32 0.0, %v541
    %543 = vmatmul.f32.gmra.mxu0 %v285
    %v544 = vpop.f32.mrf.mxu0
    %v545 = vadd.f32 0.0, %v544
    %546 = vmatmul.f32.gmra.mxu0 %v288
    %v547 = vpop.f32.mrf.mxu0
    %v548 = vadd.f32 0.0, %v547
    %549 = vmatmul.f32.gmra.mxu0 %v291
    %v550 = vpop.f32.mrf.mxu0
    %v551 = vadd.f32 0.0, %v550
    %552 = vmatmul.f32.gmra.mxu0 %v294
    %v553 = vpop.f32.mrf.mxu0
    %v554 = vadd.f32 0.0, %v553
    %555 = vmatmul.f32.gmra.mxu0 %v297
    %v556 = vpop.f32.mrf.mxu0
    %v557 = vadd.f32 0.0, %v556
    %558 = vmatmul.f32.gmra.mxu0 %v300
    %v559 = vpop.f32.mrf.mxu0
    %v560 = vadd.f32 0.0, %v559
    %561 = vmatmul.f32.gmra.mxu0 %v303
    %v562 = vpop.f32.mrf.mxu0
    %v563 = vadd.f32 0.0, %v562
    %564 = vmatmul.f32.gmra.mxu0 %v306
    %v565 = vpop.f32.mrf.mxu0
    %v566 = vadd.f32 0.0, %v565
    %567 = vmatmul.f32.gmra.mxu0 %v309
    %v568 = vpop.f32.mrf.mxu0
    %v569 = vadd.f32 0.0, %v568
    %570 = vmatmul.f32.gmra.mxu0 %v312
    %v571 = vpop.f32.mrf.mxu0
    %v572 = vadd.f32 0.0, %v571
    %573 = vmatmul.f32.gmra.mxu0 %v315
    %v574 = vpop.f32.mrf.mxu0
    %v575 = vadd.f32 0.0, %v574
    %576 = vmatmul.f32.gmra.mxu0 %v318
    %v577 = vpop.f32.mrf.mxu0
    %v578 = vadd.f32 0.0, %v577
    %579 = vmatmul.f32.gmra.mxu0 %v321
    %v580 = vpop.f32.mrf.mxu0
    %v581 = vadd.f32 0.0, %v580
    %582 = vmatmul.f32.gmra.mxu0 %v324
    %v583 = vpop.f32.mrf.mxu0
    %v584 = vadd.f32 0.0, %v583
    %585 = vmatmul.f32.gmra.mxu0 %v327
    %v586 = vpop.f32.mrf.mxu0
    %v587 = vadd.f32 0.0, %v586
    %588 = vmatmul.f32.gmra.mxu0 %v330
    %v589 = vpop.f32.mrf.mxu0
    %v590 = vadd.f32 0.0, %v589
    %591 = vmatmul.f32.gmra.mxu0 %v333
    %v592 = vpop.f32.mrf.mxu0
    %v593 = vadd.f32 0.0, %v592
    %594 = vmatmul.f32.gmra.mxu0 %v336
    %v595 = vpop.f32.mrf.mxu0
    %v596 = vadd.f32 0.0, %v595
    %597 = vmatmul.f32.gmra.mxu0 %v339
    %v598 = vpop.f32.mrf.mxu0
    %v599 = vadd.f32 0.0, %v598
    %600 = vmatmul.f32.gmra.mxu0 %v342
    %v601 = vpop.f32.mrf.mxu0
    %v602 = vadd.f32 0.0, %v601
    %603 = vmatmul.f32.gmra.mxu0 %v345
    %v604 = vpop.f32.mrf.mxu0
    %v605 = vadd.f32 0.0, %v604
    %606 = vmatmul.f32.gmra.mxu0 %v348
    %v607 = vpop.f32.mrf.mxu0
    %v608 = vadd.f32 0.0, %v607
    %609 = vmatmul.f32.gmra.mxu0 %v351
    %v610 = vpop.f32.mrf.mxu0
    %v611 = vadd.f32 0.0, %v610
    %612 = vmatmul.f32.gmra.mxu0 %v354
    %v613 = vpop.f32.mrf.mxu0
    %v614 = vadd.f32 0.0, %v613
    %615 = vmatmul.f32.gmra.mxu0 %v357
    %v616 = vpop.f32.mrf.mxu0
    %v617 = vadd.f32 0.0, %v616
    %618 = vmatmul.f32.gmra.mxu0 %v360
    %v619 = vpop.f32.mrf.mxu0
    %v620 = vadd.f32 0.0, %v619
    %621 = vmatmul.f32.gmra.mxu0 %v363
    %v622 = vpop.f32.mrf.mxu0
    %v623 = vadd.f32 0.0, %v622
    %624 = vdwg.mxu0
    %v625 = vld [vmem:[%s2] sm:$0x1]
    %v626 = vld [vmem:[%s3] sm:$0x1]
    %vm706 = vcmask 1046528
    %v707 = vrot.slane %v383, 1
    %v708 = vrot.slane %v386, 1
    %v709 = vsel %vm706, %v707, %v708
    %v710 = vrot.slane %v389, 1
    %v711 = vsel %vm706, %v708, %v710
    %v712 = vrot.slane %v392, 1
    %v713 = vsel %vm706, %v710, %v712
    %v714 = vrot.slane %v395, 1
    %v715 = vsel %vm706, %v712, %v714
    %v716 = vrot.slane %v398, 1
    %v717 = vsel %vm706, %v714, %v716
    %v718 = vrot.slane %v401, 1
    %v719 = vsel %vm706, %v716, %v718
    %v720 = vrot.slane %v404, 1
    %v721 = vsel %vm706, %v718, %v720
    %v722 = vrot.slane %v407, 1
    %v723 = vsel %vm706, %v720, %v722
    %v724 = vrot.slane %v410, 1
    %v725 = vsel %vm706, %v722, %v724
    %v726 = vrot.slane %v413, 1
    %v727 = vsel %vm706, %v724, %v726
    %v728 = vrot.slane %v416, 1
    %v729 = vsel %vm706, %v726, %v728
    %v730 = vrot.slane %v419, 1
    %v731 = vsel %vm706, %v728, %v730
    %v732 = vrot.slane %v422, 1
    %v733 = vsel %vm706, %v730, %v732
    %v734 = vrot.slane %v425, 1
    %v735 = vsel %vm706, %v732, %v734
    %v736 = vrot.slane %v428, 1
    %v737 = vsel %vm706, %v734, %v736
    %v738 = vrot.slane %v431, 1
    %v739 = vsel %vm706, %v736, %v738
    %v740 = vrot.slane %v434, 1
    %v741 = vsel %vm706, %v738, %v740
    %v742 = vrot.slane %v437, 1
    %v743 = vsel %vm706, %v740, %v742
    %v744 = vrot.slane %v440, 1
    %v745 = vsel %vm706, %v742, %v744
    %v746 = vrot.slane %v443, 1
    %v747 = vsel %vm706, %v744, %v746
    %v748 = vrot.slane %v446, 1
    %v749 = vsel %vm706, %v746, %v748
    %v750 = vrot.slane %v449, 1
    %v751 = vsel %vm706, %v748, %v750
    %v752 = vrot.slane %v452, 1
    %v753 = vsel %vm706, %v750, %v752
    %v754 = vrot.slane %v455, 1
    %v755 = vsel %vm706, %v752, %v754
    %v756 = vrot.slane %v458, 1
    %v757 = vsel %vm706, %v754, %v756
    %v758 = vrot.slane %v461, 1
    %v759 = vsel %vm706, %v756, %v758
    %v760 = vrot.slane %v464, 1
    %v761 = vsel %vm706, %v758, %v760
    %v762 = vrot.slane %v467, 1
    %v763 = vsel %vm706, %v760, %v762
    %v764 = vrot.slane %v470, 1
    %v765 = vsel %vm706, %v762, %v764
    %v766 = vrot.slane %v473, 1
    %v767 = vsel %vm706, %v764, %v766
    %v768 = vrot.slane %v476, 1
    %v769 = vsel %vm706, %v766, %v768
    %v770 = vrot.slane %v479, 1
    %v771 = vsel %vm706, %v768, %v770
    %v772 = vrot.slane %v482, 1
    %v773 = vsel %vm706, %v770, %v772
    %v774 = vrot.slane %v485, 1
    %v775 = vsel %vm706, %v772, %v774
    %v776 = vrot.slane %v488, 1
    %v777 = vsel %vm706, %v774, %v776
    %v778 = vrot.slane %v491, 1
    %v779 = vsel %vm706, %v776, %v778
    %v780 = vrot.slane %v494, 1
    %v781 = vsel %vm706, %v778, %v780
    %v782 = vrot.slane %v497, 1
    %v783 = vsel %vm706, %v780, %v782
    %v784 = vrot.slane %v500, 1
    %v785 = vsel %vm706, %v782, %v784
    %v786 = vrot.slane %v503, 1
    %v787 = vsel %vm706, %v784, %v786
    %v788 = vrot.slane %v506, 1
    %v789 = vsel %vm706, %v786, %v788
    %v790 = vrot.slane %v509, 1
    %v791 = vsel %vm706, %v788, %v790
    %v792 = vrot.slane %v512, 1
    %v793 = vsel %vm706, %v790, %v792
    %v794 = vrot.slane %v515, 1
    %v795 = vsel %vm706, %v792, %v794
    %v796 = vrot.slane %v518, 1
    %v797 = vsel %vm706, %v794, %v796
    %v798 = vrot.slane %v521, 1
    %v799 = vsel %vm706, %v796, %v798
    %v800 = vrot.slane %v524, 1
    %v801 = vsel %vm706, %v798, %v800
    %v802 = vrot.slane %v527, 1
    %v803 = vsel %vm706, %v800, %v802
    %v804 = vrot.slane %v530, 1
    %v805 = vsel %vm706, %v802, %v804
    %v806 = vrot.slane %v533, 1
    %v807 = vsel %vm706, %v804, %v806
    %v808 = vrot.slane %v536, 1
    %v809 = vsel %vm706, %v806, %v808
    %v810 = vrot.slane %v539, 1
    %v811 = vsel %vm706, %v808, %v810
    %v812 = vrot.slane %v542, 1
    %v813 = vsel %vm706, %v810, %v812
    %v814 = vrot.slane %v545, 1
    %v815 = vsel %vm706, %v812, %v814
    %v816 = vrot.slane %v548, 1
    %v817 = vsel %vm706, %v814, %v816
    %v818 = vrot.slane %v551, 1
    %v819 = vsel %vm706, %v816, %v818
    %v820 = vrot.slane %v554, 1
    %v821 = vsel %vm706, %v818, %v820
    %v822 = vrot.slane %v557, 1
    %v823 = vsel %vm706, %v820, %v822
    %v824 = vrot.slane %v560, 1
    %v825 = vsel %vm706, %v822, %v824
    %v826 = vrot.slane %v563, 1
    %v827 = vsel %vm706, %v824, %v826
    %v828 = vrot.slane %v566, 1
    %v829 = vsel %vm706, %v826, %v828
    %v830 = vrot.slane %v569, 1
    %v831 = vsel %vm706, %v828, %v830
    %v832 = vrot.slane %v572, 1
    %v833 = vsel %vm706, %v830, %v832
    %v834 = vrot.slane %v575, 1
    %v835 = vsel %vm706, %v832, %v834
    %v836 = vrot.slane %v578, 1
    %v837 = vsel %vm706, %v834, %v836
    %v838 = vrot.slane %v581, 1
    %v839 = vsel %vm706, %v836, %v838
    %v840 = vrot.slane %v584, 1
    %v841 = vsel %vm706, %v838, %v840
    %v842 = vrot.slane %v587, 1
    %v843 = vsel %vm706, %v840, %v842
    %v844 = vrot.slane %v590, 1
    %v845 = vsel %vm706, %v842, %v844
    %v846 = vrot.slane %v593, 1
    %v847 = vsel %vm706, %v844, %v846
    %v848 = vrot.slane %v596, 1
    %v849 = vsel %vm706, %v846, %v848
    %v850 = vrot.slane %v599, 1
    %v851 = vsel %vm706, %v848, %v850
    %v852 = vrot.slane %v602, 1
    %v853 = vsel %vm706, %v850, %v852
    %v854 = vrot.slane %v605, 1
    %v855 = vsel %vm706, %v852, %v854
    %v856 = vrot.slane %v608, 1
    %v857 = vsel %vm706, %v854, %v856
    %v858 = vrot.slane %v611, 1
    %v859 = vsel %vm706, %v856, %v858
    %v860 = vrot.slane %v614, 1
    %v861 = vsel %vm706, %v858, %v860
    %v862 = vrot.slane %v617, 1
    %v863 = vsel %vm706, %v860, %v862
    %864 = vrot.lane.b32.xlu0 %v709, 96
    %v865 = vpop.permute.xlu0 %864
    %866 = vrot.lane.b32.xlu0 %v711, 96
    %v867 = vpop.permute.xlu0 %866
    %868 = vrot.lane.b32.xlu0 %v713, 96
    %v869 = vpop.permute.xlu0 %868
    %870 = vrot.lane.b32.xlu0 %v715, 96
    %v871 = vpop.permute.xlu0 %870
    %872 = vrot.lane.b32.xlu0 %v717, 96
    %v873 = vpop.permute.xlu0 %872
    %874 = vrot.lane.b32.xlu0 %v719, 96
    %v875 = vpop.permute.xlu0 %874
    %876 = vrot.lane.b32.xlu0 %v721, 96
    %v877 = vpop.permute.xlu0 %876
    %878 = vrot.lane.b32.xlu0 %v723, 96
    %v879 = vpop.permute.xlu0 %878
    %880 = vrot.lane.b32.xlu0 %v725, 96
    %v881 = vpop.permute.xlu0 %880
    %882 = vrot.lane.b32.xlu0 %v727, 96
    %v883 = vpop.permute.xlu0 %882
    %884 = vrot.lane.b32.xlu0 %v729, 96
    %v885 = vpop.permute.xlu0 %884
    %886 = vrot.lane.b32.xlu0 %v731, 96
    %v887 = vpop.permute.xlu0 %886
    %888 = vrot.lane.b32.xlu0 %v733, 96
    %v889 = vpop.permute.xlu0 %888
    %890 = vrot.lane.b32.xlu0 %v735, 96
    %v891 = vpop.permute.xlu0 %890
    %892 = vrot.lane.b32.xlu0 %v737, 96
    %v893 = vpop.permute.xlu0 %892
    %894 = vrot.lane.b32.xlu0 %v739, 96
    %v895 = vpop.permute.xlu0 %894
    %896 = vrot.lane.b32.xlu0 %v741, 96
    %v897 = vpop.permute.xlu0 %896
    %898 = vrot.lane.b32.xlu0 %v743, 96
    %v899 = vpop.permute.xlu0 %898
    %900 = vrot.lane.b32.xlu0 %v745, 96
    %v901 = vpop.permute.xlu0 %900
    %902 = vrot.lane.b32.xlu0 %v747, 96
    %v903 = vpop.permute.xlu0 %902
    %904 = vrot.lane.b32.xlu0 %v749, 96
    %v905 = vpop.permute.xlu0 %904
    %906 = vrot.lane.b32.xlu0 %v751, 96
    %v907 = vpop.permute.xlu0 %906
    %908 = vrot.lane.b32.xlu0 %v753, 96
    %v909 = vpop.permute.xlu0 %908
    %910 = vrot.lane.b32.xlu0 %v755, 96
    %v911 = vpop.permute.xlu0 %910
    %912 = vrot.lane.b32.xlu0 %v757, 96
    %v913 = vpop.permute.xlu0 %912
    %914 = vrot.lane.b32.xlu0 %v759, 96
    %v915 = vpop.permute.xlu0 %914
    %916 = vrot.lane.b32.xlu0 %v761, 96
    %v917 = vpop.permute.xlu0 %916
    %918 = vrot.lane.b32.xlu0 %v763, 96
    %v919 = vpop.permute.xlu0 %918
    %920 = vrot.lane.b32.xlu0 %v765, 96
    %v921 = vpop.permute.xlu0 %920
    %922 = vrot.lane.b32.xlu0 %v767, 96
    %v923 = vpop.permute.xlu0 %922
    %924 = vrot.lane.b32.xlu0 %v769, 96
    %v925 = vpop.permute.xlu0 %924
    %926 = vrot.lane.b32.xlu0 %v771, 96
    %v927 = vpop.permute.xlu0 %926
    %928 = vrot.lane.b32.xlu0 %v773, 96
    %v929 = vpop.permute.xlu0 %928
    %930 = vrot.lane.b32.xlu0 %v775, 96
    %v931 = vpop.permute.xlu0 %930
    %932 = vrot.lane.b32.xlu0 %v777, 96
    %v933 = vpop.permute.xlu0 %932
    %934 = vrot.lane.b32.xlu0 %v779, 96
    %v935 = vpop.permute.xlu0 %934
    %936 = vrot.lane.b32.xlu0 %v781, 96
    %v937 = vpop.permute.xlu0 %936
    %938 = vrot.lane.b32.xlu0 %v783, 96
    %v939 = vpop.permute.xlu0 %938
    %940 = vrot.lane.b32.xlu0 %v785, 96
    %v941 = vpop.permute.xlu0 %940
    %942 = vrot.lane.b32.xlu0 %v787, 96
    %v943 = vpop.permute.xlu0 %942
    %944 = vrot.lane.b32.xlu0 %v789, 96
    %v945 = vpop.permute.xlu0 %944
    %946 = vrot.lane.b32.xlu0 %v791, 96
    %v947 = vpop.permute.xlu0 %946
    %948 = vrot.lane.b32.xlu0 %v793, 96
    %v949 = vpop.permute.xlu0 %948
    %950 = vrot.lane.b32.xlu0 %v795, 96
    %v951 = vpop.permute.xlu0 %950
    %952 = vrot.lane.b32.xlu0 %v797, 96
    %v953 = vpop.permute.xlu0 %952
    %954 = vrot.lane.b32.xlu0 %v799, 96
    %v955 = vpop.permute.xlu0 %954
    %956 = vrot.lane.b32.xlu0 %v801, 96
    %v957 = vpop.permute.xlu0 %956
    %958 = vrot.lane.b32.xlu0 %v803, 96
    %v959 = vpop.permute.xlu0 %958
    %960 = vrot.lane.b32.xlu0 %v805, 96
    %v961 = vpop.permute.xlu0 %960
    %962 = vrot.lane.b32.xlu0 %v807, 96
    %v963 = vpop.permute.xlu0 %962
    %964 = vrot.lane.b32.xlu0 %v809, 96
    %v965 = vpop.permute.xlu0 %964
    %966 = vrot.lane.b32.xlu0 %v811, 96
    %v967 = vpop.permute.xlu0 %966
    %968 = vrot.lane.b32.xlu0 %v813, 96
    %v969 = vpop.permute.xlu0 %968
    %970 = vrot.lane.b32.xlu0 %v815, 96
    %v971 = vpop.permute.xlu0 %970
    %972 = vrot.lane.b32.xlu0 %v817, 96
    %v973 = vpop.permute.xlu0 %972
    %974 = vrot.lane.b32.xlu0 %v819, 96
    %v975 = vpop.permute.xlu0 %974
    %976 = vrot.lane.b32.xlu0 %v821, 96
    %v977 = vpop.permute.xlu0 %976
    %978 = vrot.lane.b32.xlu0 %v823, 96
    %v979 = vpop.permute.xlu0 %978
    %980 = vrot.lane.b32.xlu0 %v825, 96
    %v981 = vpop.permute.xlu0 %980
    %982 = vrot.lane.b32.xlu0 %v827, 96
    %v983 = vpop.permute.xlu0 %982
    %984 = vrot.lane.b32.xlu0 %v829, 96
    %v985 = vpop.permute.xlu0 %984
    %986 = vrot.lane.b32.xlu0 %v831, 96
    %v987 = vpop.permute.xlu0 %986
    %988 = vrot.lane.b32.xlu0 %v833, 96
    %v989 = vpop.permute.xlu0 %988
    %990 = vrot.lane.b32.xlu0 %v835, 96
    %v991 = vpop.permute.xlu0 %990
    %992 = vrot.lane.b32.xlu0 %v837, 96
    %v993 = vpop.permute.xlu0 %992
    %994 = vrot.lane.b32.xlu0 %v839, 96
    %v995 = vpop.permute.xlu0 %994
    %996 = vrot.lane.b32.xlu0 %v841, 96
    %v997 = vpop.permute.xlu0 %996
    %998 = vrot.lane.b32.xlu0 %v843, 96
    %v999 = vpop.permute.xlu0 %998
    %1000 = vrot.lane.b32.xlu0 %v845, 96
    %v1001 = vpop.permute.xlu0 %1000
    %1002 = vrot.lane.b32.xlu0 %v847, 96
    %v1003 = vpop.permute.xlu0 %1002
    %1004 = vrot.lane.b32.xlu0 %v849, 96
    %v1005 = vpop.permute.xlu0 %1004
    %1006 = vrot.lane.b32.xlu0 %v851, 96
    %v1007 = vpop.permute.xlu0 %1006
    %1008 = vrot.lane.b32.xlu0 %v853, 96
    %v1009 = vpop.permute.xlu0 %1008
    %1010 = vrot.lane.b32.xlu0 %v855, 96
    %v1011 = vpop.permute.xlu0 %1010
    %1012 = vrot.lane.b32.xlu0 %v857, 96
    %v1013 = vpop.permute.xlu0 %1012
    %1014 = vrot.lane.b32.xlu0 %v859, 96
    %v1015 = vpop.permute.xlu0 %1014
    %1016 = vrot.lane.b32.xlu0 %v861, 96
    %v1017 = vpop.permute.xlu0 %1016
    %1018 = vrot.lane.b32.xlu0 %v863, 96
    %v1019 = vpop.permute.xlu0 %1018
    %1020 = vrot.lane.b32.xlu0 %v862, 96
    %v1021 = vpop.permute.xlu0 %1020
    %v1101 = vadd.f32 %v383, %v865
    %v1102 = vadd.f32 %v386, %v867
    %v1103 = vadd.f32 %v389, %v869
    %v1104 = vadd.f32 %v392, %v871
    %v1105 = vadd.f32 %v395, %v873
    %v1106 = vadd.f32 %v398, %v875
    %v1107 = vadd.f32 %v401, %v877
    %v1108 = vadd.f32 %v404, %v879
    %v1109 = vadd.f32 %v407, %v881
    %v1110 = vadd.f32 %v410, %v883
    %v1111 = vadd.f32 %v413, %v885
    %v1112 = vadd.f32 %v416, %v887
    %v1113 = vadd.f32 %v419, %v889
    %v1114 = vadd.f32 %v422, %v891
    %v1115 = vadd.f32 %v425, %v893
    %v1116 = vadd.f32 %v428, %v895
    %v1117 = vadd.f32 %v431, %v897
    %v1118 = vadd.f32 %v434, %v899
    %v1119 = vadd.f32 %v437, %v901
    %v1120 = vadd.f32 %v440, %v903
    %v1121 = vadd.f32 %v443, %v905
    %v1122 = vadd.f32 %v446, %v907
    %v1123 = vadd.f32 %v449, %v909
    %v1124 = vadd.f32 %v452, %v911
    %v1125 = vadd.f32 %v455, %v913
    %v1126 = vadd.f32 %v458, %v915
    %v1127 = vadd.f32 %v461, %v917
    %v1128 = vadd.f32 %v464, %v919
    %v1129 = vadd.f32 %v467, %v921
    %v1130 = vadd.f32 %v470, %v923
    %v1131 = vadd.f32 %v473, %v925
    %v1132 = vadd.f32 %v476, %v927
    %v1133 = vadd.f32 %v479, %v929
    %v1134 = vadd.f32 %v482, %v931
    %v1135 = vadd.f32 %v485, %v933
    %v1136 = vadd.f32 %v488, %v935
    %v1137 = vadd.f32 %v491, %v937
    %v1138 = vadd.f32 %v494, %v939
    %v1139 = vadd.f32 %v497, %v941
    %v1140 = vadd.f32 %v500, %v943
    %v1141 = vadd.f32 %v503, %v945
    %v1142 = vadd.f32 %v506, %v947
    %v1143 = vadd.f32 %v509, %v949
    %v1144 = vadd.f32 %v512, %v951
    %v1145 = vadd.f32 %v515, %v953
    %v1146 = vadd.f32 %v518, %v955
    %v1147 = vadd.f32 %v521, %v957
    %v1148 = vadd.f32 %v524, %v959
    %v1149 = vadd.f32 %v527, %v961
    %v1150 = vadd.f32 %v530, %v963
    %v1151 = vadd.f32 %v533, %v965
    %v1152 = vadd.f32 %v536, %v967
    %v1153 = vadd.f32 %v539, %v969
    %v1154 = vadd.f32 %v542, %v971
    %v1155 = vadd.f32 %v545, %v973
    %v1156 = vadd.f32 %v548, %v975
    %v1157 = vadd.f32 %v551, %v977
    %v1158 = vadd.f32 %v554, %v979
    %v1159 = vadd.f32 %v557, %v981
    %v1160 = vadd.f32 %v560, %v983
    %v1161 = vadd.f32 %v563, %v985
    %v1162 = vadd.f32 %v566, %v987
    %v1163 = vadd.f32 %v569, %v989
    %v1164 = vadd.f32 %v572, %v991
    %v1165 = vadd.f32 %v575, %v993
    %v1166 = vadd.f32 %v578, %v995
    %v1167 = vadd.f32 %v581, %v997
    %v1168 = vadd.f32 %v584, %v999
    %v1169 = vadd.f32 %v587, %v1001
    %v1170 = vadd.f32 %v590, %v1003
    %v1171 = vadd.f32 %v593, %v1005
    %v1172 = vadd.f32 %v596, %v1007
    %v1173 = vadd.f32 %v599, %v1009
    %v1174 = vadd.f32 %v602, %v1011
    %v1175 = vadd.f32 %v605, %v1013
    %v1176 = vadd.f32 %v608, %v1015
    %v1177 = vadd.f32 %v611, %v1017
    %v1178 = vadd.f32 %v614, %v1019
    %v1179 = vadd.f32 %v617, %v1021
    %vm1182 = vcmask 1045504
    %v1183 = vrot.slane %v389, 2
    %v1184 = vrot.slane %v392, 2
    %v1185 = vsel %vm1182, %v1183, %v1184
    %v1186 = vrot.slane %v395, 2
    %v1187 = vsel %vm1182, %v1184, %v1186
    %v1188 = vrot.slane %v398, 2
    %v1189 = vsel %vm1182, %v1186, %v1188
    %v1190 = vrot.slane %v401, 2
    %v1191 = vsel %vm1182, %v1188, %v1190
    %v1192 = vrot.slane %v404, 2
    %v1193 = vsel %vm1182, %v1190, %v1192
    %v1194 = vrot.slane %v407, 2
    %v1195 = vsel %vm1182, %v1192, %v1194
    %v1196 = vrot.slane %v410, 2
    %v1197 = vsel %vm1182, %v1194, %v1196
    %v1198 = vrot.slane %v413, 2
    %v1199 = vsel %vm1182, %v1196, %v1198
    %v1200 = vrot.slane %v416, 2
    %v1201 = vsel %vm1182, %v1198, %v1200
    %v1202 = vrot.slane %v419, 2
    %v1203 = vsel %vm1182, %v1200, %v1202
    %v1204 = vrot.slane %v422, 2
    %v1205 = vsel %vm1182, %v1202, %v1204
    %v1206 = vrot.slane %v425, 2
    %v1207 = vsel %vm1182, %v1204, %v1206
    %v1208 = vrot.slane %v428, 2
    %v1209 = vsel %vm1182, %v1206, %v1208
    %v1210 = vrot.slane %v431, 2
    %v1211 = vsel %vm1182, %v1208, %v1210
    %v1212 = vrot.slane %v434, 2
    %v1213 = vsel %vm1182, %v1210, %v1212
    %v1214 = vrot.slane %v437, 2
    %v1215 = vsel %vm1182, %v1212, %v1214
    %v1216 = vrot.slane %v440, 2
    %v1217 = vsel %vm1182, %v1214, %v1216
    %v1218 = vrot.slane %v443, 2
    %v1219 = vsel %vm1182, %v1216, %v1218
    %v1220 = vrot.slane %v446, 2
    %v1221 = vsel %vm1182, %v1218, %v1220
    %v1222 = vrot.slane %v449, 2
    %v1223 = vsel %vm1182, %v1220, %v1222
    %v1224 = vrot.slane %v452, 2
    %v1225 = vsel %vm1182, %v1222, %v1224
    %v1226 = vrot.slane %v455, 2
    %v1227 = vsel %vm1182, %v1224, %v1226
    %v1228 = vrot.slane %v458, 2
    %v1229 = vsel %vm1182, %v1226, %v1228
    %v1230 = vrot.slane %v461, 2
    %v1231 = vsel %vm1182, %v1228, %v1230
    %v1232 = vrot.slane %v464, 2
    %v1233 = vsel %vm1182, %v1230, %v1232
    %v1234 = vrot.slane %v467, 2
    %v1235 = vsel %vm1182, %v1232, %v1234
    %v1236 = vrot.slane %v470, 2
    %v1237 = vsel %vm1182, %v1234, %v1236
    %v1238 = vrot.slane %v473, 2
    %v1239 = vsel %vm1182, %v1236, %v1238
    %v1240 = vrot.slane %v476, 2
    %v1241 = vsel %vm1182, %v1238, %v1240
    %v1242 = vrot.slane %v479, 2
    %v1243 = vsel %vm1182, %v1240, %v1242
    %v1244 = vrot.slane %v482, 2
    %v1245 = vsel %vm1182, %v1242, %v1244
    %v1246 = vrot.slane %v485, 2
    %v1247 = vsel %vm1182, %v1244, %v1246
    %v1248 = vrot.slane %v488, 2
    %v1249 = vsel %vm1182, %v1246, %v1248
    %v1250 = vrot.slane %v491, 2
    %v1251 = vsel %vm1182, %v1248, %v1250
    %v1252 = vrot.slane %v494, 2
    %v1253 = vsel %vm1182, %v1250, %v1252
    %v1254 = vrot.slane %v497, 2
    %v1255 = vsel %vm1182, %v1252, %v1254
    %v1256 = vrot.slane %v500, 2
    %v1257 = vsel %vm1182, %v1254, %v1256
    %v1258 = vrot.slane %v503, 2
    %v1259 = vsel %vm1182, %v1256, %v1258
    %v1260 = vrot.slane %v506, 2
    %v1261 = vsel %vm1182, %v1258, %v1260
    %v1262 = vrot.slane %v509, 2
    %v1263 = vsel %vm1182, %v1260, %v1262
    %v1264 = vrot.slane %v512, 2
    %v1265 = vsel %vm1182, %v1262, %v1264
    %v1266 = vrot.slane %v515, 2
    %v1267 = vsel %vm1182, %v1264, %v1266
    %v1268 = vrot.slane %v518, 2
    %v1269 = vsel %vm1182, %v1266, %v1268
    %v1270 = vrot.slane %v521, 2
    %v1271 = vsel %vm1182, %v1268, %v1270
    %v1272 = vrot.slane %v524, 2
    %v1273 = vsel %vm1182, %v1270, %v1272
    %v1274 = vrot.slane %v527, 2
    %v1275 = vsel %vm1182, %v1272, %v1274
    %v1276 = vrot.slane %v530, 2
    %v1277 = vsel %vm1182, %v1274, %v1276
    %v1278 = vrot.slane %v533, 2
    %v1279 = vsel %vm1182, %v1276, %v1278
    %v1280 = vrot.slane %v536, 2
    %v1281 = vsel %vm1182, %v1278, %v1280
    %v1282 = vrot.slane %v539, 2
    %v1283 = vsel %vm1182, %v1280, %v1282
    %v1284 = vrot.slane %v542, 2
    %v1285 = vsel %vm1182, %v1282, %v1284
    %v1286 = vrot.slane %v545, 2
    %v1287 = vsel %vm1182, %v1284, %v1286
    %v1288 = vrot.slane %v548, 2
    %v1289 = vsel %vm1182, %v1286, %v1288
    %v1290 = vrot.slane %v551, 2
    %v1291 = vsel %vm1182, %v1288, %v1290
    %v1292 = vrot.slane %v554, 2
    %v1293 = vsel %vm1182, %v1290, %v1292
    %v1294 = vrot.slane %v557, 2
    %v1295 = vsel %vm1182, %v1292, %v1294
    %v1296 = vrot.slane %v560, 2
    %v1297 = vsel %vm1182, %v1294, %v1296
    %v1298 = vrot.slane %v563, 2
    %v1299 = vsel %vm1182, %v1296, %v1298
    %v1300 = vrot.slane %v566, 2
    %v1301 = vsel %vm1182, %v1298, %v1300
    %v1302 = vrot.slane %v569, 2
    %v1303 = vsel %vm1182, %v1300, %v1302
    %v1304 = vrot.slane %v572, 2
    %v1305 = vsel %vm1182, %v1302, %v1304
    %v1306 = vrot.slane %v575, 2
    %v1307 = vsel %vm1182, %v1304, %v1306
    %v1308 = vrot.slane %v578, 2
    %v1309 = vsel %vm1182, %v1306, %v1308
    %v1310 = vrot.slane %v581, 2
    %v1311 = vsel %vm1182, %v1308, %v1310
    %v1312 = vrot.slane %v584, 2
    %v1313 = vsel %vm1182, %v1310, %v1312
    %v1314 = vrot.slane %v587, 2
    %v1315 = vsel %vm1182, %v1312, %v1314
    %v1316 = vrot.slane %v590, 2
    %v1317 = vsel %vm1182, %v1314, %v1316
    %v1318 = vrot.slane %v593, 2
    %v1319 = vsel %vm1182, %v1316, %v1318
    %v1320 = vrot.slane %v596, 2
    %v1321 = vsel %vm1182, %v1318, %v1320
    %v1322 = vrot.slane %v599, 2
    %v1323 = vsel %vm1182, %v1320, %v1322
    %v1324 = vrot.slane %v602, 2
    %v1325 = vsel %vm1182, %v1322, %v1324
    %v1326 = vrot.slane %v605, 2
    %v1327 = vsel %vm1182, %v1324, %v1326
    %v1328 = vrot.slane %v608, 2
    %v1329 = vsel %vm1182, %v1326, %v1328
    %v1330 = vrot.slane %v611, 2
    %v1331 = vsel %vm1182, %v1328, %v1330
    %v1332 = vrot.slane %v614, 2
    %v1333 = vsel %vm1182, %v1330, %v1332
    %v1334 = vrot.slane %v617, 2
    %v1335 = vsel %vm1182, %v1332, %v1334
    %v1336 = vrot.slane %v620, 2
    %v1337 = vsel %vm1182, %v1334, %v1336
    %v1338 = vrot.slane %v623, 2
    %v1339 = vsel %vm1182, %v1336, %v1338
    %1340 = vrot.lane.b32.xlu0 %v1185, 64
    %v1341 = vpop.permute.xlu0 %1340
    %1342 = vrot.lane.b32.xlu0 %v1187, 64
    %v1343 = vpop.permute.xlu0 %1342
    %1344 = vrot.lane.b32.xlu0 %v1189, 64
    %v1345 = vpop.permute.xlu0 %1344
    %1346 = vrot.lane.b32.xlu0 %v1191, 64
    %v1347 = vpop.permute.xlu0 %1346
    %1348 = vrot.lane.b32.xlu0 %v1193, 64
    %v1349 = vpop.permute.xlu0 %1348
    %1350 = vrot.lane.b32.xlu0 %v1195, 64
    %v1351 = vpop.permute.xlu0 %1350
    %1352 = vrot.lane.b32.xlu0 %v1197, 64
    %v1353 = vpop.permute.xlu0 %1352
    %1354 = vrot.lane.b32.xlu0 %v1199, 64
    %v1355 = vpop.permute.xlu0 %1354
    %1356 = vrot.lane.b32.xlu0 %v1201, 64
    %v1357 = vpop.permute.xlu0 %1356
    %1358 = vrot.lane.b32.xlu0 %v1203, 64
    %v1359 = vpop.permute.xlu0 %1358
    %1360 = vrot.lane.b32.xlu0 %v1205, 64
    %v1361 = vpop.permute.xlu0 %1360
    %1362 = vrot.lane.b32.xlu0 %v1207, 64
    %v1363 = vpop.permute.xlu0 %1362
    %1364 = vrot.lane.b32.xlu0 %v1209, 64
    %v1365 = vpop.permute.xlu0 %1364
    %1366 = vrot.lane.b32.xlu0 %v1211, 64
    %v1367 = vpop.permute.xlu0 %1366
    %1368 = vrot.lane.b32.xlu0 %v1213, 64
    %v1369 = vpop.permute.xlu0 %1368
    %1370 = vrot.lane.b32.xlu0 %v1215, 64
    %v1371 = vpop.permute.xlu0 %1370
    %1372 = vrot.lane.b32.xlu0 %v1217, 64
    %v1373 = vpop.permute.xlu0 %1372
    %1374 = vrot.lane.b32.xlu0 %v1219, 64
    %v1375 = vpop.permute.xlu0 %1374
    %1376 = vrot.lane.b32.xlu0 %v1221, 64
    %v1377 = vpop.permute.xlu0 %1376
    %1378 = vrot.lane.b32.xlu0 %v1223, 64
    %v1379 = vpop.permute.xlu0 %1378
    %1380 = vrot.lane.b32.xlu0 %v1225, 64
    %v1381 = vpop.permute.xlu0 %1380
    %1382 = vrot.lane.b32.xlu0 %v1227, 64
    %v1383 = vpop.permute.xlu0 %1382
    %1384 = vrot.lane.b32.xlu0 %v1229, 64
    %v1385 = vpop.permute.xlu0 %1384
    %1386 = vrot.lane.b32.xlu0 %v1231, 64
    %v1387 = vpop.permute.xlu0 %1386
    %1388 = vrot.lane.b32.xlu0 %v1233, 64
    %v1389 = vpop.permute.xlu0 %1388
    %1390 = vrot.lane.b32.xlu0 %v1235, 64
    %v1391 = vpop.permute.xlu0 %1390
    %1392 = vrot.lane.b32.xlu0 %v1237, 64
    %v1393 = vpop.permute.xlu0 %1392
    %1394 = vrot.lane.b32.xlu0 %v1239, 64
    %v1395 = vpop.permute.xlu0 %1394
    %1396 = vrot.lane.b32.xlu0 %v1241, 64
    %v1397 = vpop.permute.xlu0 %1396
    %1398 = vrot.lane.b32.xlu0 %v1243, 64
    %v1399 = vpop.permute.xlu0 %1398
    %1400 = vrot.lane.b32.xlu0 %v1245, 64
    %v1401 = vpop.permute.xlu0 %1400
    %1402 = vrot.lane.b32.xlu0 %v1247, 64
    %v1403 = vpop.permute.xlu0 %1402
    %1404 = vrot.lane.b32.xlu0 %v1249, 64
    %v1405 = vpop.permute.xlu0 %1404
    %1406 = vrot.lane.b32.xlu0 %v1251, 64
    %v1407 = vpop.permute.xlu0 %1406
    %1408 = vrot.lane.b32.xlu0 %v1253, 64
    %v1409 = vpop.permute.xlu0 %1408
    %1410 = vrot.lane.b32.xlu0 %v1255, 64
    %v1411 = vpop.permute.xlu0 %1410
    %1412 = vrot.lane.b32.xlu0 %v1257, 64
    %v1413 = vpop.permute.xlu0 %1412
    %1414 = vrot.lane.b32.xlu0 %v1259, 64
    %v1415 = vpop.permute.xlu0 %1414
    %1416 = vrot.lane.b32.xlu0 %v1261, 64
    %v1417 = vpop.permute.xlu0 %1416
    %1418 = vrot.lane.b32.xlu0 %v1263, 64
    %v1419 = vpop.permute.xlu0 %1418
    %1420 = vrot.lane.b32.xlu0 %v1265, 64
    %v1421 = vpop.permute.xlu0 %1420
    %1422 = vrot.lane.b32.xlu0 %v1267, 64
    %v1423 = vpop.permute.xlu0 %1422
    %1424 = vrot.lane.b32.xlu0 %v1269, 64
    %v1425 = vpop.permute.xlu0 %1424
    %1426 = vrot.lane.b32.xlu0 %v1271, 64
    %v1427 = vpop.permute.xlu0 %1426
    %1428 = vrot.lane.b32.xlu0 %v1273, 64
    %v1429 = vpop.permute.xlu0 %1428
    %1430 = vrot.lane.b32.xlu0 %v1275, 64
    %v1431 = vpop.permute.xlu0 %1430
    %1432 = vrot.lane.b32.xlu0 %v1277, 64
    %v1433 = vpop.permute.xlu0 %1432
    %1434 = vrot.lane.b32.xlu0 %v1279, 64
    %v1435 = vpop.permute.xlu0 %1434
    %1436 = vrot.lane.b32.xlu0 %v1281, 64
    %v1437 = vpop.permute.xlu0 %1436
    %1438 = vrot.lane.b32.xlu0 %v1283, 64
    %v1439 = vpop.permute.xlu0 %1438
    %1440 = vrot.lane.b32.xlu0 %v1285, 64
    %v1441 = vpop.permute.xlu0 %1440
    %1442 = vrot.lane.b32.xlu0 %v1287, 64
    %v1443 = vpop.permute.xlu0 %1442
    %1444 = vrot.lane.b32.xlu0 %v1289, 64
    %v1445 = vpop.permute.xlu0 %1444
    %1446 = vrot.lane.b32.xlu0 %v1291, 64
    %v1447 = vpop.permute.xlu0 %1446
    %1448 = vrot.lane.b32.xlu0 %v1293, 64
    %v1449 = vpop.permute.xlu0 %1448
    %1450 = vrot.lane.b32.xlu0 %v1295, 64
    %v1451 = vpop.permute.xlu0 %1450
    %1452 = vrot.lane.b32.xlu0 %v1297, 64
    %v1453 = vpop.permute.xlu0 %1452
    %1454 = vrot.lane.b32.xlu0 %v1299, 64
    %v1455 = vpop.permute.xlu0 %1454
    %1456 = vrot.lane.b32.xlu0 %v1301, 64
    %v1457 = vpop.permute.xlu0 %1456
    %1458 = vrot.lane.b32.xlu0 %v1303, 64
    %v1459 = vpop.permute.xlu0 %1458
    %1460 = vrot.lane.b32.xlu0 %v1305, 64
    %v1461 = vpop.permute.xlu0 %1460
    %1462 = vrot.lane.b32.xlu0 %v1307, 64
    %v1463 = vpop.permute.xlu0 %1462
    %1464 = vrot.lane.b32.xlu0 %v1309, 64
    %v1465 = vpop.permute.xlu0 %1464
    %1466 = vrot.lane.b32.xlu0 %v1311, 64
    %v1467 = vpop.permute.xlu0 %1466
    %1468 = vrot.lane.b32.xlu0 %v1313, 64
    %v1469 = vpop.permute.xlu0 %1468
    %1470 = vrot.lane.b32.xlu0 %v1315, 64
    %v1471 = vpop.permute.xlu0 %1470
    %1472 = vrot.lane.b32.xlu0 %v1317, 64
    %v1473 = vpop.permute.xlu0 %1472
    %1474 = vrot.lane.b32.xlu0 %v1319, 64
    %v1475 = vpop.permute.xlu0 %1474
    %1476 = vrot.lane.b32.xlu0 %v1321, 64
    %v1477 = vpop.permute.xlu0 %1476
    %1478 = vrot.lane.b32.xlu0 %v1323, 64
    %v1479 = vpop.permute.xlu0 %1478
    %1480 = vrot.lane.b32.xlu0 %v1325, 64
    %v1481 = vpop.permute.xlu0 %1480
    %1482 = vrot.lane.b32.xlu0 %v1327, 64
    %v1483 = vpop.permute.xlu0 %1482
    %1484 = vrot.lane.b32.xlu0 %v1329, 64
    %v1485 = vpop.permute.xlu0 %1484
    %1486 = vrot.lane.b32.xlu0 %v1331, 64
    %v1487 = vpop.permute.xlu0 %1486
    %1488 = vrot.lane.b32.xlu0 %v1333, 64
    %v1489 = vpop.permute.xlu0 %1488
    %1490 = vrot.lane.b32.xlu0 %v1335, 64
    %v1491 = vpop.permute.xlu0 %1490
    %1492 = vrot.lane.b32.xlu0 %v1337, 64
    %v1493 = vpop.permute.xlu0 %1492
    %1494 = vrot.lane.b32.xlu0 %v1339, 64
    %v1495 = vpop.permute.xlu0 %1494
    %1496 = vrot.lane.b32.xlu0 %v1338, 64
    %v1497 = vpop.permute.xlu0 %1496
    %v1577 = vadd.f32 %v1101, %v1341
    %v1578 = vadd.f32 %v1102, %v1343
    %v1579 = vadd.f32 %v1103, %v1345
    %v1580 = vadd.f32 %v1104, %v1347
    %v1581 = vadd.f32 %v1105, %v1349
    %v1582 = vadd.f32 %v1106, %v1351
    %v1583 = vadd.f32 %v1107, %v1353
    %v1584 = vadd.f32 %v1108, %v1355
    %v1585 = vadd.f32 %v1109, %v1357
    %v1586 = vadd.f32 %v1110, %v1359
    %v1587 = vadd.f32 %v1111, %v1361
    %v1588 = vadd.f32 %v1112, %v1363
    %v1589 = vadd.f32 %v1113, %v1365
    %v1590 = vadd.f32 %v1114, %v1367
    %v1591 = vadd.f32 %v1115, %v1369
    %v1592 = vadd.f32 %v1116, %v1371
    %v1593 = vadd.f32 %v1117, %v1373
    %v1594 = vadd.f32 %v1118, %v1375
    %v1595 = vadd.f32 %v1119, %v1377
    %v1596 = vadd.f32 %v1120, %v1379
    %v1597 = vadd.f32 %v1121, %v1381
    %v1598 = vadd.f32 %v1122, %v1383
    %v1599 = vadd.f32 %v1123, %v1385
    %v1600 = vadd.f32 %v1124, %v1387
    %v1601 = vadd.f32 %v1125, %v1389
    %v1602 = vadd.f32 %v1126, %v1391
    %v1603 = vadd.f32 %v1127, %v1393
    %v1604 = vadd.f32 %v1128, %v1395
    %v1605 = vadd.f32 %v1129, %v1397
    %v1606 = vadd.f32 %v1130, %v1399
    %v1607 = vadd.f32 %v1131, %v1401
    %v1608 = vadd.f32 %v1132, %v1403
    %v1609 = vadd.f32 %v1133, %v1405
    %v1610 = vadd.f32 %v1134, %v1407
    %v1611 = vadd.f32 %v1135, %v1409
    %v1612 = vadd.f32 %v1136, %v1411
    %v1613 = vadd.f32 %v1137, %v1413
    %v1614 = vadd.f32 %v1138, %v1415
    %v1615 = vadd.f32 %v1139, %v1417
    %v1616 = vadd.f32 %v1140, %v1419
    %v1617 = vadd.f32 %v1141, %v1421
    %v1618 = vadd.f32 %v1142, %v1423
    %v1619 = vadd.f32 %v1143, %v1425
    %v1620 = vadd.f32 %v1144, %v1427
    %v1621 = vadd.f32 %v1145, %v1429
    %v1622 = vadd.f32 %v1146, %v1431
    %v1623 = vadd.f32 %v1147, %v1433
    %v1624 = vadd.f32 %v1148, %v1435
    %v1625 = vadd.f32 %v1149, %v1437
    %v1626 = vadd.f32 %v1150, %v1439
    %v1627 = vadd.f32 %v1151, %v1441
    %v1628 = vadd.f32 %v1152, %v1443
    %v1629 = vadd.f32 %v1153, %v1445
    %v1630 = vadd.f32 %v1154, %v1447
    %v1631 = vadd.f32 %v1155, %v1449
    %v1632 = vadd.f32 %v1156, %v1451
    %v1633 = vadd.f32 %v1157, %v1453
    %v1634 = vadd.f32 %v1158, %v1455
    %v1635 = vadd.f32 %v1159, %v1457
    %v1636 = vadd.f32 %v1160, %v1459
    %v1637 = vadd.f32 %v1161, %v1461
    %v1638 = vadd.f32 %v1162, %v1463
    %v1639 = vadd.f32 %v1163, %v1465
    %v1640 = vadd.f32 %v1164, %v1467
    %v1641 = vadd.f32 %v1165, %v1469
    %v1642 = vadd.f32 %v1166, %v1471
    %v1643 = vadd.f32 %v1167, %v1473
    %v1644 = vadd.f32 %v1168, %v1475
    %v1645 = vadd.f32 %v1169, %v1477
    %v1646 = vadd.f32 %v1170, %v1479
    %v1647 = vadd.f32 %v1171, %v1481
    %v1648 = vadd.f32 %v1172, %v1483
    %v1649 = vadd.f32 %v1173, %v1485
    %v1650 = vadd.f32 %v1174, %v1487
    %v1651 = vadd.f32 %v1175, %v1489
    %v1652 = vadd.f32 %v1176, %v1491
    %v1653 = vadd.f32 %v1177, %v1493
    %v1654 = vadd.f32 %v1178, %v1495
    %v1655 = vadd.f32 %v1179, %v1497
    %vm1656 = vcmask 1044480
    %v1657 = vrot.slane %v389, 3
    %v1658 = vrot.slane %v392, 3
    %v1659 = vsel %vm1656, %v1657, %v1658
    %v1660 = vrot.slane %v395, 3
    %v1661 = vsel %vm1656, %v1658, %v1660
    %v1662 = vrot.slane %v398, 3
    %v1663 = vsel %vm1656, %v1660, %v1662
    %v1664 = vrot.slane %v401, 3
    %v1665 = vsel %vm1656, %v1662, %v1664
    %v1666 = vrot.slane %v404, 3
    %v1667 = vsel %vm1656, %v1664, %v1666
    %v1668 = vrot.slane %v407, 3
    %v1669 = vsel %vm1656, %v1666, %v1668
    %v1670 = vrot.slane %v410, 3
    %v1671 = vsel %vm1656, %v1668, %v1670
    %v1672 = vrot.slane %v413, 3
    %v1673 = vsel %vm1656, %v1670, %v1672
    %v1674 = vrot.slane %v416, 3
    %v1675 = vsel %vm1656, %v1672, %v1674
    %v1676 = vrot.slane %v419, 3
    %v1677 = vsel %vm1656, %v1674, %v1676
    %v1678 = vrot.slane %v422, 3
    %v1679 = vsel %vm1656, %v1676, %v1678
    %v1680 = vrot.slane %v425, 3
    %v1681 = vsel %vm1656, %v1678, %v1680
    %v1682 = vrot.slane %v428, 3
    %v1683 = vsel %vm1656, %v1680, %v1682
    %v1684 = vrot.slane %v431, 3
    %v1685 = vsel %vm1656, %v1682, %v1684
    %v1686 = vrot.slane %v434, 3
    %v1687 = vsel %vm1656, %v1684, %v1686
    %v1688 = vrot.slane %v437, 3
    %v1689 = vsel %vm1656, %v1686, %v1688
    %v1690 = vrot.slane %v440, 3
    %v1691 = vsel %vm1656, %v1688, %v1690
    %v1692 = vrot.slane %v443, 3
    %v1693 = vsel %vm1656, %v1690, %v1692
    %v1694 = vrot.slane %v446, 3
    %v1695 = vsel %vm1656, %v1692, %v1694
    %v1696 = vrot.slane %v449, 3
    %v1697 = vsel %vm1656, %v1694, %v1696
    %v1698 = vrot.slane %v452, 3
    %v1699 = vsel %vm1656, %v1696, %v1698
    %v1700 = vrot.slane %v455, 3
    %v1701 = vsel %vm1656, %v1698, %v1700
    %v1702 = vrot.slane %v458, 3
    %v1703 = vsel %vm1656, %v1700, %v1702
    %v1704 = vrot.slane %v461, 3
    %v1705 = vsel %vm1656, %v1702, %v1704
    %v1706 = vrot.slane %v464, 3
    %v1707 = vsel %vm1656, %v1704, %v1706
    %v1708 = vrot.slane %v467, 3
    %v1709 = vsel %vm1656, %v1706, %v1708
    %v1710 = vrot.slane %v470, 3
    %v1711 = vsel %vm1656, %v1708, %v1710
    %v1712 = vrot.slane %v473, 3
    %v1713 = vsel %vm1656, %v1710, %v1712
    %v1714 = vrot.slane %v476, 3
    %v1715 = vsel %vm1656, %v1712, %v1714
    %v1716 = vrot.slane %v479, 3
    %v1717 = vsel %vm1656, %v1714, %v1716
    %v1718 = vrot.slane %v482, 3
    %v1719 = vsel %vm1656, %v1716, %v1718
    %v1720 = vrot.slane %v485, 3
    %v1721 = vsel %vm1656, %v1718, %v1720
    %v1722 = vrot.slane %v488, 3
    %v1723 = vsel %vm1656, %v1720, %v1722
    %v1724 = vrot.slane %v491, 3
    %v1725 = vsel %vm1656, %v1722, %v1724
    %v1726 = vrot.slane %v494, 3
    %v1727 = vsel %vm1656, %v1724, %v1726
    %v1728 = vrot.slane %v497, 3
    %v1729 = vsel %vm1656, %v1726, %v1728
    %v1730 = vrot.slane %v500, 3
    %v1731 = vsel %vm1656, %v1728, %v1730
    %v1732 = vrot.slane %v503, 3
    %v1733 = vsel %vm1656, %v1730, %v1732
    %v1734 = vrot.slane %v506, 3
    %v1735 = vsel %vm1656, %v1732, %v1734
    %v1736 = vrot.slane %v509, 3
    %v1737 = vsel %vm1656, %v1734, %v1736
    %v1738 = vrot.slane %v512, 3
    %v1739 = vsel %vm1656, %v1736, %v1738
    %v1740 = vrot.slane %v515, 3
    %v1741 = vsel %vm1656, %v1738, %v1740
    %v1742 = vrot.slane %v518, 3
    %v1743 = vsel %vm1656, %v1740, %v1742
    %v1744 = vrot.slane %v521, 3
    %v1745 = vsel %vm1656, %v1742, %v1744
    %v1746 = vrot.slane %v524, 3
    %v1747 = vsel %vm1656, %v1744, %v1746
    %v1748 = vrot.slane %v527, 3
    %v1749 = vsel %vm1656, %v1746, %v1748
    %v1750 = vrot.slane %v530, 3
    %v1751 = vsel %vm1656, %v1748, %v1750
    %v1752 = vrot.slane %v533, 3
    %v1753 = vsel %vm1656, %v1750, %v1752
    %v1754 = vrot.slane %v536, 3
    %v1755 = vsel %vm1656, %v1752, %v1754
    %v1756 = vrot.slane %v539, 3
    %v1757 = vsel %vm1656, %v1754, %v1756
    %v1758 = vrot.slane %v542, 3
    %v1759 = vsel %vm1656, %v1756, %v1758
    %v1760 = vrot.slane %v545, 3
    %v1761 = vsel %vm1656, %v1758, %v1760
    %v1762 = vrot.slane %v548, 3
    %v1763 = vsel %vm1656, %v1760, %v1762
    %v1764 = vrot.slane %v551, 3
    %v1765 = vsel %vm1656, %v1762, %v1764
    %v1766 = vrot.slane %v554, 3
    %v1767 = vsel %vm1656, %v1764, %v1766
    %v1768 = vrot.slane %v557, 3
    %v1769 = vsel %vm1656, %v1766, %v1768
    %v1770 = vrot.slane %v560, 3
    %v1771 = vsel %vm1656, %v1768, %v1770
    %v1772 = vrot.slane %v563, 3
    %v1773 = vsel %vm1656, %v1770, %v1772
    %v1774 = vrot.slane %v566, 3
    %v1775 = vsel %vm1656, %v1772, %v1774
    %v1776 = vrot.slane %v569, 3
    %v1777 = vsel %vm1656, %v1774, %v1776
    %v1778 = vrot.slane %v572, 3
    %v1779 = vsel %vm1656, %v1776, %v1778
    %v1780 = vrot.slane %v575, 3
    %v1781 = vsel %vm1656, %v1778, %v1780
    %v1782 = vrot.slane %v578, 3
    %v1783 = vsel %vm1656, %v1780, %v1782
    %v1784 = vrot.slane %v581, 3
    %v1785 = vsel %vm1656, %v1782, %v1784
    %v1786 = vrot.slane %v584, 3
    %v1787 = vsel %vm1656, %v1784, %v1786
    %v1788 = vrot.slane %v587, 3
    %v1789 = vsel %vm1656, %v1786, %v1788
    %v1790 = vrot.slane %v590, 3
    %v1791 = vsel %vm1656, %v1788, %v1790
    %v1792 = vrot.slane %v593, 3
    %v1793 = vsel %vm1656, %v1790, %v1792
    %v1794 = vrot.slane %v596, 3
    %v1795 = vsel %vm1656, %v1792, %v1794
    %v1796 = vrot.slane %v599, 3
    %v1797 = vsel %vm1656, %v1794, %v1796
    %v1798 = vrot.slane %v602, 3
    %v1799 = vsel %vm1656, %v1796, %v1798
    %v1800 = vrot.slane %v605, 3
    %v1801 = vsel %vm1656, %v1798, %v1800
    %v1802 = vrot.slane %v608, 3
    %v1803 = vsel %vm1656, %v1800, %v1802
    %v1804 = vrot.slane %v611, 3
    %v1805 = vsel %vm1656, %v1802, %v1804
    %v1806 = vrot.slane %v614, 3
    %v1807 = vsel %vm1656, %v1804, %v1806
    %v1808 = vrot.slane %v617, 3
    %v1809 = vsel %vm1656, %v1806, %v1808
    %v1810 = vrot.slane %v620, 3
    %v1811 = vsel %vm1656, %v1808, %v1810
    %v1812 = vrot.slane %v623, 3
    %v1813 = vsel %vm1656, %v1810, %v1812
    %1814 = vrot.lane.b32.xlu0 %v1659, 32
    %v1815 = vpop.permute.xlu0 %1814
    %1816 = vrot.lane.b32.xlu0 %v1661, 32
    %v1817 = vpop.permute.xlu0 %1816
    %1818 = vrot.lane.b32.xlu0 %v1663, 32
    %v1819 = vpop.permute.xlu0 %1818
    %1820 = vrot.lane.b32.xlu0 %v1665, 32
    %v1821 = vpop.permute.xlu0 %1820
    %1822 = vrot.lane.b32.xlu0 %v1667, 32
    %v1823 = vpop.permute.xlu0 %1822
    %1824 = vrot.lane.b32.xlu0 %v1669, 32
    %v1825 = vpop.permute.xlu0 %1824
    %1826 = vrot.lane.b32.xlu0 %v1671, 32
    %v1827 = vpop.permute.xlu0 %1826
    %1828 = vrot.lane.b32.xlu0 %v1673, 32
    %v1829 = vpop.permute.xlu0 %1828
    %1830 = vrot.lane.b32.xlu0 %v1675, 32
    %v1831 = vpop.permute.xlu0 %1830
    %1832 = vrot.lane.b32.xlu0 %v1677, 32
    %v1833 = vpop.permute.xlu0 %1832
    %1834 = vrot.lane.b32.xlu0 %v1679, 32
    %v1835 = vpop.permute.xlu0 %1834
    %1836 = vrot.lane.b32.xlu0 %v1681, 32
    %v1837 = vpop.permute.xlu0 %1836
    %1838 = vrot.lane.b32.xlu0 %v1683, 32
    %v1839 = vpop.permute.xlu0 %1838
    %1840 = vrot.lane.b32.xlu0 %v1685, 32
    %v1841 = vpop.permute.xlu0 %1840
    %1842 = vrot.lane.b32.xlu0 %v1687, 32
    %v1843 = vpop.permute.xlu0 %1842
    %1844 = vrot.lane.b32.xlu0 %v1689, 32
    %v1845 = vpop.permute.xlu0 %1844
    %1846 = vrot.lane.b32.xlu0 %v1691, 32
    %v1847 = vpop.permute.xlu0 %1846
    %1848 = vrot.lane.b32.xlu0 %v1693, 32
    %v1849 = vpop.permute.xlu0 %1848
    %1850 = vrot.lane.b32.xlu0 %v1695, 32
    %v1851 = vpop.permute.xlu0 %1850
    %1852 = vrot.lane.b32.xlu0 %v1697, 32
    %v1853 = vpop.permute.xlu0 %1852
    %1854 = vrot.lane.b32.xlu0 %v1699, 32
    %v1855 = vpop.permute.xlu0 %1854
    %1856 = vrot.lane.b32.xlu0 %v1701, 32
    %v1857 = vpop.permute.xlu0 %1856
    %1858 = vrot.lane.b32.xlu0 %v1703, 32
    %v1859 = vpop.permute.xlu0 %1858
    %1860 = vrot.lane.b32.xlu0 %v1705, 32
    %v1861 = vpop.permute.xlu0 %1860
    %1862 = vrot.lane.b32.xlu0 %v1707, 32
    %v1863 = vpop.permute.xlu0 %1862
    %1864 = vrot.lane.b32.xlu0 %v1709, 32
    %v1865 = vpop.permute.xlu0 %1864
    %1866 = vrot.lane.b32.xlu0 %v1711, 32
    %v1867 = vpop.permute.xlu0 %1866
    %1868 = vrot.lane.b32.xlu0 %v1713, 32
    %v1869 = vpop.permute.xlu0 %1868
    %1870 = vrot.lane.b32.xlu0 %v1715, 32
    %v1871 = vpop.permute.xlu0 %1870
    %1872 = vrot.lane.b32.xlu0 %v1717, 32
    %v1873 = vpop.permute.xlu0 %1872
    %1874 = vrot.lane.b32.xlu0 %v1719, 32
    %v1875 = vpop.permute.xlu0 %1874
    %1876 = vrot.lane.b32.xlu0 %v1721, 32
    %v1877 = vpop.permute.xlu0 %1876
    %1878 = vrot.lane.b32.xlu0 %v1723, 32
    %v1879 = vpop.permute.xlu0 %1878
    %1880 = vrot.lane.b32.xlu0 %v1725, 32
    %v1881 = vpop.permute.xlu0 %1880
    %1882 = vrot.lane.b32.xlu0 %v1727, 32
    %v1883 = vpop.permute.xlu0 %1882
    %1884 = vrot.lane.b32.xlu0 %v1729, 32
    %v1885 = vpop.permute.xlu0 %1884
    %1886 = vrot.lane.b32.xlu0 %v1731, 32
    %v1887 = vpop.permute.xlu0 %1886
    %1888 = vrot.lane.b32.xlu0 %v1733, 32
    %v1889 = vpop.permute.xlu0 %1888
    %1890 = vrot.lane.b32.xlu0 %v1735, 32
    %v1891 = vpop.permute.xlu0 %1890
    %1892 = vrot.lane.b32.xlu0 %v1737, 32
    %v1893 = vpop.permute.xlu0 %1892
    %1894 = vrot.lane.b32.xlu0 %v1739, 32
    %v1895 = vpop.permute.xlu0 %1894
    %1896 = vrot.lane.b32.xlu0 %v1741, 32
    %v1897 = vpop.permute.xlu0 %1896
    %1898 = vrot.lane.b32.xlu0 %v1743, 32
    %v1899 = vpop.permute.xlu0 %1898
    %1900 = vrot.lane.b32.xlu0 %v1745, 32
    %v1901 = vpop.permute.xlu0 %1900
    %1902 = vrot.lane.b32.xlu0 %v1747, 32
    %v1903 = vpop.permute.xlu0 %1902
    %1904 = vrot.lane.b32.xlu0 %v1749, 32
    %v1905 = vpop.permute.xlu0 %1904
    %1906 = vrot.lane.b32.xlu0 %v1751, 32
    %v1907 = vpop.permute.xlu0 %1906
    %1908 = vrot.lane.b32.xlu0 %v1753, 32
    %v1909 = vpop.permute.xlu0 %1908
    %1910 = vrot.lane.b32.xlu0 %v1755, 32
    %v1911 = vpop.permute.xlu0 %1910
    %1912 = vrot.lane.b32.xlu0 %v1757, 32
    %v1913 = vpop.permute.xlu0 %1912
    %1914 = vrot.lane.b32.xlu0 %v1759, 32
    %v1915 = vpop.permute.xlu0 %1914
    %1916 = vrot.lane.b32.xlu0 %v1761, 32
    %v1917 = vpop.permute.xlu0 %1916
    %1918 = vrot.lane.b32.xlu0 %v1763, 32
    %v1919 = vpop.permute.xlu0 %1918
    %1920 = vrot.lane.b32.xlu0 %v1765, 32
    %v1921 = vpop.permute.xlu0 %1920
    %1922 = vrot.lane.b32.xlu0 %v1767, 32
    %v1923 = vpop.permute.xlu0 %1922
    %1924 = vrot.lane.b32.xlu0 %v1769, 32
    %v1925 = vpop.permute.xlu0 %1924
    %1926 = vrot.lane.b32.xlu0 %v1771, 32
    %v1927 = vpop.permute.xlu0 %1926
    %1928 = vrot.lane.b32.xlu0 %v1773, 32
    %v1929 = vpop.permute.xlu0 %1928
    %1930 = vrot.lane.b32.xlu0 %v1775, 32
    %v1931 = vpop.permute.xlu0 %1930
    %1932 = vrot.lane.b32.xlu0 %v1777, 32
    %v1933 = vpop.permute.xlu0 %1932
    %1934 = vrot.lane.b32.xlu0 %v1779, 32
    %v1935 = vpop.permute.xlu0 %1934
    %1936 = vrot.lane.b32.xlu0 %v1781, 32
    %v1937 = vpop.permute.xlu0 %1936
    %1938 = vrot.lane.b32.xlu0 %v1783, 32
    %v1939 = vpop.permute.xlu0 %1938
    %1940 = vrot.lane.b32.xlu0 %v1785, 32
    %v1941 = vpop.permute.xlu0 %1940
    %1942 = vrot.lane.b32.xlu0 %v1787, 32
    %v1943 = vpop.permute.xlu0 %1942
    %1944 = vrot.lane.b32.xlu0 %v1789, 32
    %v1945 = vpop.permute.xlu0 %1944
    %1946 = vrot.lane.b32.xlu0 %v1791, 32
    %v1947 = vpop.permute.xlu0 %1946
    %1948 = vrot.lane.b32.xlu0 %v1793, 32
    %v1949 = vpop.permute.xlu0 %1948
    %1950 = vrot.lane.b32.xlu0 %v1795, 32
    %v1951 = vpop.permute.xlu0 %1950
    %1952 = vrot.lane.b32.xlu0 %v1797, 32
    %v1953 = vpop.permute.xlu0 %1952
    %1954 = vrot.lane.b32.xlu0 %v1799, 32
    %v1955 = vpop.permute.xlu0 %1954
    %1956 = vrot.lane.b32.xlu0 %v1801, 32
    %v1957 = vpop.permute.xlu0 %1956
    %1958 = vrot.lane.b32.xlu0 %v1803, 32
    %v1959 = vpop.permute.xlu0 %1958
    %1960 = vrot.lane.b32.xlu0 %v1805, 32
    %v1961 = vpop.permute.xlu0 %1960
    %1962 = vrot.lane.b32.xlu0 %v1807, 32
    %v1963 = vpop.permute.xlu0 %1962
    %1964 = vrot.lane.b32.xlu0 %v1809, 32
    %v1965 = vpop.permute.xlu0 %1964
    %1966 = vrot.lane.b32.xlu0 %v1811, 32
    %v1967 = vpop.permute.xlu0 %1966
    %1968 = vrot.lane.b32.xlu0 %v1813, 32
    %v1969 = vpop.permute.xlu0 %1968
    %1970 = vrot.lane.b32.xlu0 %v1812, 32
    %v1971 = vpop.permute.xlu0 %1970
    %v2051 = vadd.f32 %v1577, %v1815
    %v2052 = vadd.f32 %v1578, %v1817
    %v2053 = vadd.f32 %v1579, %v1819
    %v2054 = vadd.f32 %v1580, %v1821
    %v2055 = vadd.f32 %v1581, %v1823
    %v2056 = vadd.f32 %v1582, %v1825
    %v2057 = vadd.f32 %v1583, %v1827
    %v2058 = vadd.f32 %v1584, %v1829
    %v2059 = vadd.f32 %v1585, %v1831
    %v2060 = vadd.f32 %v1586, %v1833
    %v2061 = vadd.f32 %v1587, %v1835
    %v2062 = vadd.f32 %v1588, %v1837
    %v2063 = vadd.f32 %v1589, %v1839
    %v2064 = vadd.f32 %v1590, %v1841
    %v2065 = vadd.f32 %v1591, %v1843
    %v2066 = vadd.f32 %v1592, %v1845
    %v2067 = vadd.f32 %v1593, %v1847
    %v2068 = vadd.f32 %v1594, %v1849
    %v2069 = vadd.f32 %v1595, %v1851
    %v2070 = vadd.f32 %v1596, %v1853
    %v2071 = vadd.f32 %v1597, %v1855
    %v2072 = vadd.f32 %v1598, %v1857
    %v2073 = vadd.f32 %v1599, %v1859
    %v2074 = vadd.f32 %v1600, %v1861
    %v2075 = vadd.f32 %v1601, %v1863
    %v2076 = vadd.f32 %v1602, %v1865
    %v2077 = vadd.f32 %v1603, %v1867
    %v2078 = vadd.f32 %v1604, %v1869
    %v2079 = vadd.f32 %v1605, %v1871
    %v2080 = vadd.f32 %v1606, %v1873
    %v2081 = vadd.f32 %v1607, %v1875
    %v2082 = vadd.f32 %v1608, %v1877
    %v2083 = vadd.f32 %v1609, %v1879
    %v2084 = vadd.f32 %v1610, %v1881
    %v2085 = vadd.f32 %v1611, %v1883
    %v2086 = vadd.f32 %v1612, %v1885
    %v2087 = vadd.f32 %v1613, %v1887
    %v2088 = vadd.f32 %v1614, %v1889
    %v2089 = vadd.f32 %v1615, %v1891
    %v2090 = vadd.f32 %v1616, %v1893
    %v2091 = vadd.f32 %v1617, %v1895
    %v2092 = vadd.f32 %v1618, %v1897
    %v2093 = vadd.f32 %v1619, %v1899
    %v2094 = vadd.f32 %v1620, %v1901
    %v2095 = vadd.f32 %v1621, %v1903
    %v2096 = vadd.f32 %v1622, %v1905
    %v2097 = vadd.f32 %v1623, %v1907
    %v2098 = vadd.f32 %v1624, %v1909
    %v2099 = vadd.f32 %v1625, %v1911
    %v2100 = vadd.f32 %v1626, %v1913
    %v2101 = vadd.f32 %v1627, %v1915
    %v2102 = vadd.f32 %v1628, %v1917
    %v2103 = vadd.f32 %v1629, %v1919
    %v2104 = vadd.f32 %v1630, %v1921
    %v2105 = vadd.f32 %v1631, %v1923
    %v2106 = vadd.f32 %v1632, %v1925
    %v2107 = vadd.f32 %v1633, %v1927
    %v2108 = vadd.f32 %v1634, %v1929
    %v2109 = vadd.f32 %v1635, %v1931
    %v2110 = vadd.f32 %v1636, %v1933
    %v2111 = vadd.f32 %v1637, %v1935
    %v2112 = vadd.f32 %v1638, %v1937
    %v2113 = vadd.f32 %v1639, %v1939
    %v2114 = vadd.f32 %v1640, %v1941
    %v2115 = vadd.f32 %v1641, %v1943
    %v2116 = vadd.f32 %v1642, %v1945
    %v2117 = vadd.f32 %v1643, %v1947
    %v2118 = vadd.f32 %v1644, %v1949
    %v2119 = vadd.f32 %v1645, %v1951
    %v2120 = vadd.f32 %v1646, %v1953
    %v2121 = vadd.f32 %v1647, %v1955
    %v2122 = vadd.f32 %v1648, %v1957
    %v2123 = vadd.f32 %v1649, %v1959
    %v2124 = vadd.f32 %v1650, %v1961
    %v2125 = vadd.f32 %v1651, %v1963
    %v2126 = vadd.f32 %v1652, %v1965
    %v2127 = vadd.f32 %v1653, %v1967
    %v2128 = vadd.f32 %v1654, %v1969
    %v2129 = vadd.f32 %v1655, %v1971
    %vm2130 = vcmask 261120
    %v2131 = vsel %vm2130, %v2051, 0.0
    %v2132 = vsel %vm2130, %v2052, 0.0
    %v2133 = vadd.f32 %v2131, %v2132
    %v2134 = vsel %vm2130, %v2053, 0.0
    %v2135 = vadd.f32 %v2133, %v2134
    %v2136 = vsel %vm2130, %v2054, 0.0
    %v2137 = vadd.f32 %v2135, %v2136
    %v2138 = vsel %vm2130, %v2055, 0.0
    %v2139 = vadd.f32 %v2137, %v2138
    %v2140 = vsel %vm2130, %v2056, 0.0
    %v2141 = vadd.f32 %v2139, %v2140
    %v2142 = vsel %vm2130, %v2057, 0.0
    %v2143 = vadd.f32 %v2141, %v2142
    %v2144 = vsel %vm2130, %v2058, 0.0
    %v2145 = vadd.f32 %v2143, %v2144
    %v2146 = vsel %vm2130, %v2059, 0.0
    %v2147 = vadd.f32 %v2145, %v2146
    %v2148 = vsel %vm2130, %v2060, 0.0
    %v2149 = vadd.f32 %v2147, %v2148
    %v2150 = vsel %vm2130, %v2061, 0.0
    %v2151 = vadd.f32 %v2149, %v2150
    %v2152 = vsel %vm2130, %v2062, 0.0
    %v2153 = vadd.f32 %v2151, %v2152
    %v2154 = vsel %vm2130, %v2063, 0.0
    %v2155 = vadd.f32 %v2153, %v2154
    %v2156 = vsel %vm2130, %v2064, 0.0
    %v2157 = vadd.f32 %v2155, %v2156
    %v2158 = vsel %vm2130, %v2065, 0.0
    %v2159 = vadd.f32 %v2157, %v2158
    %v2160 = vsel %vm2130, %v2066, 0.0
    %v2161 = vadd.f32 %v2159, %v2160
    %v2162 = vsel %vm2130, %v2067, 0.0
    %v2163 = vadd.f32 %v2161, %v2162
    %v2164 = vsel %vm2130, %v2068, 0.0
    %v2165 = vadd.f32 %v2163, %v2164
    %v2166 = vsel %vm2130, %v2069, 0.0
    %v2167 = vadd.f32 %v2165, %v2166
    %v2168 = vsel %vm2130, %v2070, 0.0
    %v2169 = vadd.f32 %v2167, %v2168
    %v2170 = vsel %vm2130, %v2071, 0.0
    %v2171 = vadd.f32 %v2169, %v2170
    %v2172 = vsel %vm2130, %v2072, 0.0
    %v2173 = vadd.f32 %v2171, %v2172
    %v2174 = vsel %vm2130, %v2073, 0.0
    %v2175 = vadd.f32 %v2173, %v2174
    %v2176 = vsel %vm2130, %v2074, 0.0
    %v2177 = vadd.f32 %v2175, %v2176
    %v2178 = vsel %vm2130, %v2075, 0.0
    %v2179 = vadd.f32 %v2177, %v2178
    %v2180 = vsel %vm2130, %v2076, 0.0
    %v2181 = vadd.f32 %v2179, %v2180
    %v2182 = vsel %vm2130, %v2077, 0.0
    %v2183 = vadd.f32 %v2181, %v2182
    %v2184 = vsel %vm2130, %v2078, 0.0
    %v2185 = vadd.f32 %v2183, %v2184
    %v2186 = vsel %vm2130, %v2079, 0.0
    %v2187 = vadd.f32 %v2185, %v2186
    %v2188 = vsel %vm2130, %v2080, 0.0
    %v2189 = vadd.f32 %v2187, %v2188
    %v2190 = vsel %vm2130, %v2081, 0.0
    %v2191 = vadd.f32 %v2189, %v2190
    %v2192 = vsel %vm2130, %v2082, 0.0
    %v2193 = vadd.f32 %v2191, %v2192
    %v2194 = vsel %vm2130, %v2083, 0.0
    %v2195 = vadd.f32 %v2193, %v2194
    %v2196 = vsel %vm2130, %v2084, 0.0
    %v2197 = vadd.f32 %v2195, %v2196
    %v2198 = vsel %vm2130, %v2085, 0.0
    %v2199 = vadd.f32 %v2197, %v2198
    %v2200 = vsel %vm2130, %v2086, 0.0
    %v2201 = vadd.f32 %v2199, %v2200
    %v2202 = vsel %vm2130, %v2087, 0.0
    %v2203 = vadd.f32 %v2201, %v2202
    %v2204 = vsel %vm2130, %v2088, 0.0
    %v2205 = vadd.f32 %v2203, %v2204
    %v2206 = vsel %vm2130, %v2089, 0.0
    %v2207 = vadd.f32 %v2205, %v2206
    %v2208 = vsel %vm2130, %v2090, 0.0
    %v2209 = vadd.f32 %v2207, %v2208
    %v2210 = vsel %vm2130, %v2091, 0.0
    %v2211 = vadd.f32 %v2209, %v2210
    %v2212 = vsel %vm2130, %v2092, 0.0
    %v2213 = vadd.f32 %v2211, %v2212
    %v2214 = vsel %vm2130, %v2093, 0.0
    %v2215 = vadd.f32 %v2213, %v2214
    %v2216 = vsel %vm2130, %v2094, 0.0
    %v2217 = vadd.f32 %v2215, %v2216
    %v2218 = vsel %vm2130, %v2095, 0.0
    %v2219 = vadd.f32 %v2217, %v2218
    %v2220 = vsel %vm2130, %v2096, 0.0
    %v2221 = vadd.f32 %v2219, %v2220
    %v2222 = vsel %vm2130, %v2097, 0.0
    %v2223 = vadd.f32 %v2221, %v2222
    %v2224 = vsel %vm2130, %v2098, 0.0
    %v2225 = vadd.f32 %v2223, %v2224
    %v2226 = vsel %vm2130, %v2099, 0.0
    %v2227 = vadd.f32 %v2225, %v2226
    %v2228 = vsel %vm2130, %v2100, 0.0
    %v2229 = vadd.f32 %v2227, %v2228
    %v2230 = vsel %vm2130, %v2101, 0.0
    %v2231 = vadd.f32 %v2229, %v2230
    %v2232 = vsel %vm2130, %v2102, 0.0
    %v2233 = vadd.f32 %v2231, %v2232
    %v2234 = vsel %vm2130, %v2103, 0.0
    %v2235 = vadd.f32 %v2233, %v2234
    %v2236 = vsel %vm2130, %v2104, 0.0
    %v2237 = vadd.f32 %v2235, %v2236
    %v2238 = vsel %vm2130, %v2105, 0.0
    %v2239 = vadd.f32 %v2237, %v2238
    %v2240 = vsel %vm2130, %v2106, 0.0
    %v2241 = vadd.f32 %v2239, %v2240
    %v2242 = vsel %vm2130, %v2107, 0.0
    %v2243 = vadd.f32 %v2241, %v2242
    %v2244 = vsel %vm2130, %v2108, 0.0
    %v2245 = vadd.f32 %v2243, %v2244
    %v2246 = vsel %vm2130, %v2109, 0.0
    %v2247 = vadd.f32 %v2245, %v2246
    %v2248 = vsel %vm2130, %v2110, 0.0
    %v2249 = vadd.f32 %v2247, %v2248
    %v2250 = vsel %vm2130, %v2111, 0.0
    %v2251 = vadd.f32 %v2249, %v2250
    %v2252 = vsel %vm2130, %v2112, 0.0
    %v2253 = vadd.f32 %v2251, %v2252
    %v2254 = vsel %vm2130, %v2113, 0.0
    %v2255 = vadd.f32 %v2253, %v2254
    %v2256 = vsel %vm2130, %v2114, 0.0
    %v2257 = vadd.f32 %v2255, %v2256
    %v2258 = vsel %vm2130, %v2115, 0.0
    %v2259 = vadd.f32 %v2257, %v2258
    %v2260 = vsel %vm2130, %v2116, 0.0
    %v2261 = vadd.f32 %v2259, %v2260
    %v2262 = vsel %vm2130, %v2117, 0.0
    %v2263 = vadd.f32 %v2261, %v2262
    %v2264 = vsel %vm2130, %v2118, 0.0
    %v2265 = vadd.f32 %v2263, %v2264
    %v2266 = vsel %vm2130, %v2119, 0.0
    %v2267 = vadd.f32 %v2265, %v2266
    %v2268 = vsel %vm2130, %v2120, 0.0
    %v2269 = vadd.f32 %v2267, %v2268
    %v2270 = vsel %vm2130, %v2121, 0.0
    %v2271 = vadd.f32 %v2269, %v2270
    %v2272 = vsel %vm2130, %v2122, 0.0
    %v2273 = vadd.f32 %v2271, %v2272
    %v2274 = vsel %vm2130, %v2123, 0.0
    %v2275 = vadd.f32 %v2273, %v2274
    %v2276 = vsel %vm2130, %v2124, 0.0
    %v2277 = vadd.f32 %v2275, %v2276
    %v2278 = vsel %vm2130, %v2125, 0.0
    %v2279 = vadd.f32 %v2277, %v2278
    %v2280 = vsel %vm2130, %v2126, 0.0
    %v2281 = vadd.f32 %v2279, %v2280
    %v2282 = vsel %vm2130, %v2127, 0.0
    %v2283 = vadd.f32 %v2281, %v2282
    %v2284 = vsel %vm2130, %v2128, 0.0
    %v2285 = vadd.f32 %v2283, %v2284
    %vm2286 = vcmask 258048
    %v2287 = vsel %vm2286, %v2129, 0.0
    %v2288 = vadd.f32 %v2285, %v2287
    %v2289 = vrot.slane %v2288, 4
    %v2290 = vadd.f32 %v2288, %v2289
    %v2291 = vrot.slane %v2290, 2
    %v2292 = vadd.f32 %v2290, %v2291
    %v2293 = vrot.slane %v2292, 1
    %v2294 = vadd.f32 %v2292, %v2293
    %v2295 = vmul.f32 %v2294, 0.0017301039
    %v2296 = vmul.f32 %v2051, %v2051
    %v2297 = vmul.f32 %v2052, %v2052
    %v2298 = vmul.f32 %v2053, %v2053
    %v2299 = vmul.f32 %v2054, %v2054
    %v2300 = vmul.f32 %v2055, %v2055
    %v2301 = vmul.f32 %v2056, %v2056
    %v2302 = vmul.f32 %v2057, %v2057
    %v2303 = vmul.f32 %v2058, %v2058
    %v2304 = vmul.f32 %v2059, %v2059
    %v2305 = vmul.f32 %v2060, %v2060
    %v2306 = vmul.f32 %v2061, %v2061
    %v2307 = vmul.f32 %v2062, %v2062
    %v2308 = vmul.f32 %v2063, %v2063
    %v2309 = vmul.f32 %v2064, %v2064
    %v2310 = vmul.f32 %v2065, %v2065
    %v2311 = vmul.f32 %v2066, %v2066
    %v2312 = vmul.f32 %v2067, %v2067
    %v2313 = vmul.f32 %v2068, %v2068
    %v2314 = vmul.f32 %v2069, %v2069
    %v2315 = vmul.f32 %v2070, %v2070
    %v2316 = vmul.f32 %v2071, %v2071
    %v2317 = vmul.f32 %v2072, %v2072
    %v2318 = vmul.f32 %v2073, %v2073
    %v2319 = vmul.f32 %v2074, %v2074
    %v2320 = vmul.f32 %v2075, %v2075
    %v2321 = vmul.f32 %v2076, %v2076
    %v2322 = vmul.f32 %v2077, %v2077
    %v2323 = vmul.f32 %v2078, %v2078
    %v2324 = vmul.f32 %v2079, %v2079
    %v2325 = vmul.f32 %v2080, %v2080
    %v2326 = vmul.f32 %v2081, %v2081
    %v2327 = vmul.f32 %v2082, %v2082
    %v2328 = vmul.f32 %v2083, %v2083
    %v2329 = vmul.f32 %v2084, %v2084
    %v2330 = vmul.f32 %v2085, %v2085
    %v2331 = vmul.f32 %v2086, %v2086
    %v2332 = vmul.f32 %v2087, %v2087
    %v2333 = vmul.f32 %v2088, %v2088
    %v2334 = vmul.f32 %v2089, %v2089
    %v2335 = vmul.f32 %v2090, %v2090
    %v2336 = vmul.f32 %v2091, %v2091
    %v2337 = vmul.f32 %v2092, %v2092
    %v2338 = vmul.f32 %v2093, %v2093
    %v2339 = vmul.f32 %v2094, %v2094
    %v2340 = vmul.f32 %v2095, %v2095
    %v2341 = vmul.f32 %v2096, %v2096
    %v2342 = vmul.f32 %v2097, %v2097
    %v2343 = vmul.f32 %v2098, %v2098
    %v2344 = vmul.f32 %v2099, %v2099
    %v2345 = vmul.f32 %v2100, %v2100
    %v2346 = vmul.f32 %v2101, %v2101
    %v2347 = vmul.f32 %v2102, %v2102
    %v2348 = vmul.f32 %v2103, %v2103
    %v2349 = vmul.f32 %v2104, %v2104
    %v2350 = vmul.f32 %v2105, %v2105
    %v2351 = vmul.f32 %v2106, %v2106
    %v2352 = vmul.f32 %v2107, %v2107
    %v2353 = vmul.f32 %v2108, %v2108
    %v2354 = vmul.f32 %v2109, %v2109
    %v2355 = vmul.f32 %v2110, %v2110
    %v2356 = vmul.f32 %v2111, %v2111
    %v2357 = vmul.f32 %v2112, %v2112
    %v2358 = vmul.f32 %v2113, %v2113
    %v2359 = vmul.f32 %v2114, %v2114
    %v2360 = vmul.f32 %v2115, %v2115
    %v2361 = vmul.f32 %v2116, %v2116
    %v2362 = vmul.f32 %v2117, %v2117
    %v2363 = vmul.f32 %v2118, %v2118
    %v2364 = vmul.f32 %v2119, %v2119
    %v2365 = vmul.f32 %v2120, %v2120
    %v2366 = vmul.f32 %v2121, %v2121
    %v2367 = vmul.f32 %v2122, %v2122
    %v2368 = vmul.f32 %v2123, %v2123
    %v2369 = vmul.f32 %v2124, %v2124
    %v2370 = vmul.f32 %v2125, %v2125
    %v2371 = vmul.f32 %v2126, %v2126
    %v2372 = vmul.f32 %v2127, %v2127
    %v2373 = vmul.f32 %v2128, %v2128
    %v2374 = vmul.f32 %v2129, %v2129
    %v2375 = vsel %vm2130, %v2296, 0.0
    %v2376 = vsel %vm2130, %v2297, 0.0
    %v2377 = vadd.f32 %v2375, %v2376
    %v2378 = vsel %vm2130, %v2298, 0.0
    %v2379 = vadd.f32 %v2377, %v2378
    %v2380 = vsel %vm2130, %v2299, 0.0
    %v2381 = vadd.f32 %v2379, %v2380
    %v2382 = vsel %vm2130, %v2300, 0.0
    %v2383 = vadd.f32 %v2381, %v2382
    %v2384 = vsel %vm2130, %v2301, 0.0
    %v2385 = vadd.f32 %v2383, %v2384
    %v2386 = vsel %vm2130, %v2302, 0.0
    %v2387 = vadd.f32 %v2385, %v2386
    %v2388 = vsel %vm2130, %v2303, 0.0
    %v2389 = vadd.f32 %v2387, %v2388
    %v2390 = vsel %vm2130, %v2304, 0.0
    %v2391 = vadd.f32 %v2389, %v2390
    %v2392 = vsel %vm2130, %v2305, 0.0
    %v2393 = vadd.f32 %v2391, %v2392
    %v2394 = vsel %vm2130, %v2306, 0.0
    %v2395 = vadd.f32 %v2393, %v2394
    %v2396 = vsel %vm2130, %v2307, 0.0
    %v2397 = vadd.f32 %v2395, %v2396
    %v2398 = vsel %vm2130, %v2308, 0.0
    %v2399 = vadd.f32 %v2397, %v2398
    %v2400 = vsel %vm2130, %v2309, 0.0
    %v2401 = vadd.f32 %v2399, %v2400
    %v2402 = vsel %vm2130, %v2310, 0.0
    %v2403 = vadd.f32 %v2401, %v2402
    %v2404 = vsel %vm2130, %v2311, 0.0
    %v2405 = vadd.f32 %v2403, %v2404
    %v2406 = vsel %vm2130, %v2312, 0.0
    %v2407 = vadd.f32 %v2405, %v2406
    %v2408 = vsel %vm2130, %v2313, 0.0
    %v2409 = vadd.f32 %v2407, %v2408
    %v2410 = vsel %vm2130, %v2314, 0.0
    %v2411 = vadd.f32 %v2409, %v2410
    %v2412 = vsel %vm2130, %v2315, 0.0
    %v2413 = vadd.f32 %v2411, %v2412
    %v2414 = vsel %vm2130, %v2316, 0.0
    %v2415 = vadd.f32 %v2413, %v2414
    %v2416 = vsel %vm2130, %v2317, 0.0
    %v2417 = vadd.f32 %v2415, %v2416
    %v2418 = vsel %vm2130, %v2318, 0.0
    %v2419 = vadd.f32 %v2417, %v2418
    %v2420 = vsel %vm2130, %v2319, 0.0
    %v2421 = vadd.f32 %v2419, %v2420
    %v2422 = vsel %vm2130, %v2320, 0.0
    %v2423 = vadd.f32 %v2421, %v2422
    %v2424 = vsel %vm2130, %v2321, 0.0
    %v2425 = vadd.f32 %v2423, %v2424
    %v2426 = vsel %vm2130, %v2322, 0.0
    %v2427 = vadd.f32 %v2425, %v2426
    %v2428 = vsel %vm2130, %v2323, 0.0
    %v2429 = vadd.f32 %v2427, %v2428
    %v2430 = vsel %vm2130, %v2324, 0.0
    %v2431 = vadd.f32 %v2429, %v2430
    %v2432 = vsel %vm2130, %v2325, 0.0
    %v2433 = vadd.f32 %v2431, %v2432
    %v2434 = vsel %vm2130, %v2326, 0.0
    %v2435 = vadd.f32 %v2433, %v2434
    %v2436 = vsel %vm2130, %v2327, 0.0
    %v2437 = vadd.f32 %v2435, %v2436
    %v2438 = vsel %vm2130, %v2328, 0.0
    %v2439 = vadd.f32 %v2437, %v2438
    %v2440 = vsel %vm2130, %v2329, 0.0
    %v2441 = vadd.f32 %v2439, %v2440
    %v2442 = vsel %vm2130, %v2330, 0.0
    %v2443 = vadd.f32 %v2441, %v2442
    %v2444 = vsel %vm2130, %v2331, 0.0
    %v2445 = vadd.f32 %v2443, %v2444
    %v2446 = vsel %vm2130, %v2332, 0.0
    %v2447 = vadd.f32 %v2445, %v2446
    %v2448 = vsel %vm2130, %v2333, 0.0
    %v2449 = vadd.f32 %v2447, %v2448
    %v2450 = vsel %vm2130, %v2334, 0.0
    %v2451 = vadd.f32 %v2449, %v2450
    %v2452 = vsel %vm2130, %v2335, 0.0
    %v2453 = vadd.f32 %v2451, %v2452
    %v2454 = vsel %vm2130, %v2336, 0.0
    %v2455 = vadd.f32 %v2453, %v2454
    %v2456 = vsel %vm2130, %v2337, 0.0
    %v2457 = vadd.f32 %v2455, %v2456
    %v2458 = vsel %vm2130, %v2338, 0.0
    %v2459 = vadd.f32 %v2457, %v2458
    %v2460 = vsel %vm2130, %v2339, 0.0
    %v2461 = vadd.f32 %v2459, %v2460
    %v2462 = vsel %vm2130, %v2340, 0.0
    %v2463 = vadd.f32 %v2461, %v2462
    %v2464 = vsel %vm2130, %v2341, 0.0
    %v2465 = vadd.f32 %v2463, %v2464
    %v2466 = vsel %vm2130, %v2342, 0.0
    %v2467 = vadd.f32 %v2465, %v2466
    %v2468 = vsel %vm2130, %v2343, 0.0
    %v2469 = vadd.f32 %v2467, %v2468
    %v2470 = vsel %vm2130, %v2344, 0.0
    %v2471 = vadd.f32 %v2469, %v2470
    %v2472 = vsel %vm2130, %v2345, 0.0
    %v2473 = vadd.f32 %v2471, %v2472
    %v2474 = vsel %vm2130, %v2346, 0.0
    %v2475 = vadd.f32 %v2473, %v2474
    %v2476 = vsel %vm2130, %v2347, 0.0
    %v2477 = vadd.f32 %v2475, %v2476
    %v2478 = vsel %vm2130, %v2348, 0.0
    %v2479 = vadd.f32 %v2477, %v2478
    %v2480 = vsel %vm2130, %v2349, 0.0
    %v2481 = vadd.f32 %v2479, %v2480
    %v2482 = vsel %vm2130, %v2350, 0.0
    %v2483 = vadd.f32 %v2481, %v2482
    %v2484 = vsel %vm2130, %v2351, 0.0
    %v2485 = vadd.f32 %v2483, %v2484
    %v2486 = vsel %vm2130, %v2352, 0.0
    %v2487 = vadd.f32 %v2485, %v2486
    %v2488 = vsel %vm2130, %v2353, 0.0
    %v2489 = vadd.f32 %v2487, %v2488
    %v2490 = vsel %vm2130, %v2354, 0.0
    %v2491 = vadd.f32 %v2489, %v2490
    %v2492 = vsel %vm2130, %v2355, 0.0
    %v2493 = vadd.f32 %v2491, %v2492
    %v2494 = vsel %vm2130, %v2356, 0.0
    %v2495 = vadd.f32 %v2493, %v2494
    %v2496 = vsel %vm2130, %v2357, 0.0
    %v2497 = vadd.f32 %v2495, %v2496
    %v2498 = vsel %vm2130, %v2358, 0.0
    %v2499 = vadd.f32 %v2497, %v2498
    %v2500 = vsel %vm2130, %v2359, 0.0
    %v2501 = vadd.f32 %v2499, %v2500
    %v2502 = vsel %vm2130, %v2360, 0.0
    %v2503 = vadd.f32 %v2501, %v2502
    %v2504 = vsel %vm2130, %v2361, 0.0
    %v2505 = vadd.f32 %v2503, %v2504
    %v2506 = vsel %vm2130, %v2362, 0.0
    %v2507 = vadd.f32 %v2505, %v2506
    %v2508 = vsel %vm2130, %v2363, 0.0
    %v2509 = vadd.f32 %v2507, %v2508
    %v2510 = vsel %vm2130, %v2364, 0.0
    %v2511 = vadd.f32 %v2509, %v2510
    %v2512 = vsel %vm2130, %v2365, 0.0
    %v2513 = vadd.f32 %v2511, %v2512
    %v2514 = vsel %vm2130, %v2366, 0.0
    %v2515 = vadd.f32 %v2513, %v2514
    %v2516 = vsel %vm2130, %v2367, 0.0
    %v2517 = vadd.f32 %v2515, %v2516
    %v2518 = vsel %vm2130, %v2368, 0.0
    %v2519 = vadd.f32 %v2517, %v2518
    %v2520 = vsel %vm2130, %v2369, 0.0
    %v2521 = vadd.f32 %v2519, %v2520
    %v2522 = vsel %vm2130, %v2370, 0.0
    %v2523 = vadd.f32 %v2521, %v2522
    %v2524 = vsel %vm2130, %v2371, 0.0
    %v2525 = vadd.f32 %v2523, %v2524
    %v2526 = vsel %vm2130, %v2372, 0.0
    %v2527 = vadd.f32 %v2525, %v2526
    %v2528 = vsel %vm2130, %v2373, 0.0
    %v2529 = vadd.f32 %v2527, %v2528
    %v2530 = vsel %vm2286, %v2374, 0.0
    %v2531 = vadd.f32 %v2529, %v2530
    %v2532 = vrot.slane %v2531, 4
    %v2533 = vadd.f32 %v2531, %v2532
    %v2534 = vrot.slane %v2533, 2
    %v2535 = vadd.f32 %v2533, %v2534
    %v2536 = vrot.slane %v2535, 1
    %v2537 = vadd.f32 %v2535, %v2536
    %v2538 = vmul.f32 %v2537, 0.0017301039
    %v2539 = vmul.f32 %v2295, %v2295
    %v2540 = vsub.f32 %v2538, %v2539
    %v2541 = vsub.f32 %v2051, %v2295
    %v2542 = vsub.f32 %v2052, %v2295
    %v2543 = vsub.f32 %v2053, %v2295
    %v2544 = vsub.f32 %v2054, %v2295
    %v2545 = vsub.f32 %v2055, %v2295
    %v2546 = vsub.f32 %v2056, %v2295
    %v2547 = vsub.f32 %v2057, %v2295
    %v2548 = vsub.f32 %v2058, %v2295
    %v2549 = vsub.f32 %v2059, %v2295
    %v2550 = vsub.f32 %v2060, %v2295
    %v2551 = vsub.f32 %v2061, %v2295
    %v2552 = vsub.f32 %v2062, %v2295
    %v2553 = vsub.f32 %v2063, %v2295
    %v2554 = vsub.f32 %v2064, %v2295
    %v2555 = vsub.f32 %v2065, %v2295
    %v2556 = vsub.f32 %v2066, %v2295
    %v2557 = vsub.f32 %v2067, %v2295
    %v2558 = vsub.f32 %v2068, %v2295
    %v2559 = vsub.f32 %v2069, %v2295
    %v2560 = vsub.f32 %v2070, %v2295
    %v2561 = vsub.f32 %v2071, %v2295
    %v2562 = vsub.f32 %v2072, %v2295
    %v2563 = vsub.f32 %v2073, %v2295
    %v2564 = vsub.f32 %v2074, %v2295
    %v2565 = vsub.f32 %v2075, %v2295
    %v2566 = vsub.f32 %v2076, %v2295
    %v2567 = vsub.f32 %v2077, %v2295
    %v2568 = vsub.f32 %v2078, %v2295
    %v2569 = vsub.f32 %v2079, %v2295
    %v2570 = vsub.f32 %v2080, %v2295
    %v2571 = vsub.f32 %v2081, %v2295
    %v2572 = vsub.f32 %v2082, %v2295
    %v2573 = vsub.f32 %v2083, %v2295
    %v2574 = vsub.f32 %v2084, %v2295
    %v2575 = vsub.f32 %v2085, %v2295
    %v2576 = vsub.f32 %v2086, %v2295
    %v2577 = vsub.f32 %v2087, %v2295
    %v2578 = vsub.f32 %v2088, %v2295
    %v2579 = vsub.f32 %v2091, %v2295
    %v2580 = vsub.f32 %v2092, %v2295
    %v2581 = vsub.f32 %v2093, %v2295
    %v2582 = vsub.f32 %v2094, %v2295
    %v2583 = vsub.f32 %v2095, %v2295
    %v2584 = vsub.f32 %v2096, %v2295
    %v2585 = vsub.f32 %v2097, %v2295
    %v2586 = vsub.f32 %v2098, %v2295
    %v2587 = vsub.f32 %v2099, %v2295
    %v2588 = vsub.f32 %v2100, %v2295
    %v2589 = vsub.f32 %v2101, %v2295
    %v2590 = vsub.f32 %v2102, %v2295
    %v2591 = vsub.f32 %v2103, %v2295
    %v2592 = vsub.f32 %v2104, %v2295
    %v2593 = vsub.f32 %v2105, %v2295
    %v2594 = vsub.f32 %v2106, %v2295
    %v2595 = vsub.f32 %v2107, %v2295
    %v2596 = vsub.f32 %v2108, %v2295
    %v2597 = vsub.f32 %v2109, %v2295
    %v2598 = vsub.f32 %v2110, %v2295
    %v2599 = vsub.f32 %v2111, %v2295
    %v2600 = vsub.f32 %v2112, %v2295
    %v2601 = vsub.f32 %v2113, %v2295
    %v2602 = vsub.f32 %v2114, %v2295
    %v2603 = vsub.f32 %v2115, %v2295
    %v2604 = vsub.f32 %v2116, %v2295
    %v2605 = vsub.f32 %v2117, %v2295
    %v2606 = vsub.f32 %v2118, %v2295
    %v2607 = vsub.f32 %v2119, %v2295
    %v2608 = vsub.f32 %v2120, %v2295
    %v2609 = vsub.f32 %v2121, %v2295
    %v2610 = vsub.f32 %v2122, %v2295
    %v2611 = vsub.f32 %v2123, %v2295
    %v2612 = vsub.f32 %v2124, %v2295
    %v2613 = vsub.f32 %v2125, %v2295
    %v2614 = vsub.f32 %v2126, %v2295
    %v2615 = vsub.f32 %v2127, %v2295
    %v2616 = vsub.f32 %v2128, %v2295
    %v2617 = vadd.f32 %v2540, 1e-05
    %v2618 = vrsqrt.pop %v2617
    %v2619 = vmul.f32 %v2618, %v2617
    %v2620 = vmul.f32 %v2619, %v2618
    %v2621 = vmul.f32 0.5, %v2620
    %v2622 = vsub.f32 1.5, %v2621
    %v2623 = vmul.f32 %v2618, %v2622
    %vm2624 = vweird.f32 %v2617
    %vm2625 = vweird.f32 %v2618
    %vm2626 = vmor %vm2624, %vm2625
    %v2627 = vsel %vm2626, %v2618, %v2623
    %v2628 = vmul.f32 %v2541, %v2627
    %v2629 = vmul.f32 %v2542, %v2627
    %v2630 = vmul.f32 %v2543, %v2627
    %v2631 = vmul.f32 %v2544, %v2627
    %v2632 = vmul.f32 %v2545, %v2627
    %v2633 = vmul.f32 %v2546, %v2627
    %v2634 = vmul.f32 %v2547, %v2627
    %v2635 = vmul.f32 %v2548, %v2627
    %v2636 = vmul.f32 %v2549, %v2627
    %v2637 = vmul.f32 %v2550, %v2627
    %v2638 = vmul.f32 %v2551, %v2627
    %v2639 = vmul.f32 %v2552, %v2627
    %v2640 = vmul.f32 %v2553, %v2627
    %v2641 = vmul.f32 %v2554, %v2627
    %v2642 = vmul.f32 %v2555, %v2627
    %v2643 = vmul.f32 %v2556, %v2627
    %v2644 = vmul.f32 %v2557, %v2627
    %v2645 = vmul.f32 %v2558, %v2627
    %v2646 = vmul.f32 %v2559, %v2627
    %v2647 = vmul.f32 %v2560, %v2627
    %v2648 = vmul.f32 %v2561, %v2627
    %v2649 = vmul.f32 %v2562, %v2627
    %v2650 = vmul.f32 %v2563, %v2627
    %v2651 = vmul.f32 %v2564, %v2627
    %v2652 = vmul.f32 %v2565, %v2627
    %v2653 = vmul.f32 %v2566, %v2627
    %v2654 = vmul.f32 %v2567, %v2627
    %v2655 = vmul.f32 %v2568, %v2627
    %v2656 = vmul.f32 %v2569, %v2627
    %v2657 = vmul.f32 %v2570, %v2627
    %v2658 = vmul.f32 %v2571, %v2627
    %v2659 = vmul.f32 %v2572, %v2627
    %v2660 = vmul.f32 %v2573, %v2627
    %v2661 = vmul.f32 %v2574, %v2627
    %v2662 = vmul.f32 %v2575, %v2627
    %v2663 = vmul.f32 %v2576, %v2627
    %v2664 = vmul.f32 %v2577, %v2627
    %v2665 = vmul.f32 %v2578, %v2627
    %v2666 = vmul.f32 %v2579, %v2627
    %v2667 = vmul.f32 %v2580, %v2627
    %v2668 = vmul.f32 %v2581, %v2627
    %v2669 = vmul.f32 %v2582, %v2627
    %v2670 = vmul.f32 %v2583, %v2627
    %v2671 = vmul.f32 %v2584, %v2627
    %v2672 = vmul.f32 %v2585, %v2627
    %v2673 = vmul.f32 %v2586, %v2627
    %v2674 = vmul.f32 %v2587, %v2627
    %v2675 = vmul.f32 %v2588, %v2627
    %v2676 = vmul.f32 %v2589, %v2627
    %v2677 = vmul.f32 %v2590, %v2627
    %v2678 = vmul.f32 %v2591, %v2627
    %v2679 = vmul.f32 %v2592, %v2627
    %v2680 = vmul.f32 %v2593, %v2627
    %v2681 = vmul.f32 %v2594, %v2627
    %v2682 = vmul.f32 %v2595, %v2627
    %v2683 = vmul.f32 %v2596, %v2627
    %v2684 = vmul.f32 %v2597, %v2627
    %v2685 = vmul.f32 %v2598, %v2627
    %v2686 = vmul.f32 %v2599, %v2627
    %v2687 = vmul.f32 %v2600, %v2627
    %v2688 = vmul.f32 %v2601, %v2627
    %v2689 = vmul.f32 %v2602, %v2627
    %v2690 = vmul.f32 %v2603, %v2627
    %v2691 = vmul.f32 %v2604, %v2627
    %v2692 = vmul.f32 %v2605, %v2627
    %v2693 = vmul.f32 %v2606, %v2627
    %v2694 = vmul.f32 %v2607, %v2627
    %v2695 = vmul.f32 %v2608, %v2627
    %v2696 = vmul.f32 %v2609, %v2627
    %v2697 = vmul.f32 %v2610, %v2627
    %v2698 = vmul.f32 %v2611, %v2627
    %v2699 = vmul.f32 %v2612, %v2627
    %v2700 = vmul.f32 %v2613, %v2627
    %v2701 = vmul.f32 %v2614, %v2627
    %v2702 = vmul.f32 %v2615, %v2627
    %v2703 = vmul.f32 %v2616, %v2627
    %v2705 = vperm.slane %v625, 0
    %v2707 = vmul.f32 %v2628, %v2705
    %v2708 = vmul.f32 %v2629, %v2705
    %v2709 = vmul.f32 %v2630, %v2705
    %v2710 = vmul.f32 %v2631, %v2705
    %v2711 = vmul.f32 %v2632, %v2705
    %v2712 = vmul.f32 %v2633, %v2705
    %v2713 = vmul.f32 %v2634, %v2705
    %v2714 = vmul.f32 %v2635, %v2705
    %v2715 = vmul.f32 %v2636, %v2705
    %v2716 = vmul.f32 %v2637, %v2705
    %v2717 = vmul.f32 %v2638, %v2705
    %v2718 = vmul.f32 %v2639, %v2705
    %v2719 = vmul.f32 %v2640, %v2705
    %v2720 = vmul.f32 %v2641, %v2705
    %v2721 = vmul.f32 %v2642, %v2705
    %v2722 = vmul.f32 %v2643, %v2705
    %v2723 = vmul.f32 %v2644, %v2705
    %v2724 = vmul.f32 %v2645, %v2705
    %v2725 = vmul.f32 %v2646, %v2705
    %v2726 = vmul.f32 %v2647, %v2705
    %v2727 = vmul.f32 %v2648, %v2705
    %v2728 = vmul.f32 %v2649, %v2705
    %v2729 = vmul.f32 %v2650, %v2705
    %v2730 = vmul.f32 %v2651, %v2705
    %v2731 = vmul.f32 %v2652, %v2705
    %v2732 = vmul.f32 %v2653, %v2705
    %v2733 = vmul.f32 %v2654, %v2705
    %v2734 = vmul.f32 %v2655, %v2705
    %v2735 = vmul.f32 %v2656, %v2705
    %v2736 = vmul.f32 %v2657, %v2705
    %v2737 = vmul.f32 %v2658, %v2705
    %v2738 = vmul.f32 %v2659, %v2705
    %v2739 = vmul.f32 %v2660, %v2705
    %v2740 = vmul.f32 %v2661, %v2705
    %v2741 = vmul.f32 %v2662, %v2705
    %v2742 = vmul.f32 %v2663, %v2705
    %v2743 = vmul.f32 %v2664, %v2705
    %v2744 = vmul.f32 %v2665, %v2705
    %v2745 = vmul.f32 %v2666, %v2705
    %v2746 = vmul.f32 %v2667, %v2705
    %v2747 = vmul.f32 %v2668, %v2705
    %v2748 = vmul.f32 %v2669, %v2705
    %v2749 = vmul.f32 %v2670, %v2705
    %v2750 = vmul.f32 %v2671, %v2705
    %v2751 = vmul.f32 %v2672, %v2705
    %v2752 = vmul.f32 %v2673, %v2705
    %v2753 = vmul.f32 %v2674, %v2705
    %v2754 = vmul.f32 %v2675, %v2705
    %v2755 = vmul.f32 %v2676, %v2705
    %v2756 = vmul.f32 %v2677, %v2705
    %v2757 = vmul.f32 %v2678, %v2705
    %v2758 = vmul.f32 %v2679, %v2705
    %v2759 = vmul.f32 %v2680, %v2705
    %v2760 = vmul.f32 %v2681, %v2705
    %v2761 = vmul.f32 %v2682, %v2705
    %v2762 = vmul.f32 %v2683, %v2705
    %v2763 = vmul.f32 %v2684, %v2705
    %v2764 = vmul.f32 %v2685, %v2705
    %v2765 = vmul.f32 %v2686, %v2705
    %v2766 = vmul.f32 %v2687, %v2705
    %v2767 = vmul.f32 %v2688, %v2705
    %v2768 = vmul.f32 %v2689, %v2705
    %v2769 = vmul.f32 %v2690, %v2705
    %v2770 = vmul.f32 %v2691, %v2705
    %v2771 = vmul.f32 %v2692, %v2705
    %v2772 = vmul.f32 %v2693, %v2705
    %v2773 = vmul.f32 %v2694, %v2705
    %v2774 = vmul.f32 %v2695, %v2705
    %v2775 = vmul.f32 %v2696, %v2705
    %v2776 = vmul.f32 %v2697, %v2705
    %v2777 = vmul.f32 %v2698, %v2705
    %v2778 = vmul.f32 %v2699, %v2705
    %v2779 = vmul.f32 %v2700, %v2705
    %v2780 = vmul.f32 %v2701, %v2705
    %v2781 = vmul.f32 %v2702, %v2705
    %v2782 = vmul.f32 %v2703, %v2705
    %v2784 = vperm.slane %v626, 0
    %v2786 = vadd.f32 %v2707, %v2784
    %v2787 = vadd.f32 %v2708, %v2784
    %v2788 = vadd.f32 %v2709, %v2784
    %v2789 = vadd.f32 %v2710, %v2784
    %v2790 = vadd.f32 %v2711, %v2784
    %v2791 = vadd.f32 %v2712, %v2784
    %v2792 = vadd.f32 %v2713, %v2784
    %v2793 = vadd.f32 %v2714, %v2784
    %v2794 = vadd.f32 %v2715, %v2784
    %v2795 = vadd.f32 %v2716, %v2784
    %v2796 = vadd.f32 %v2717, %v2784
    %v2797 = vadd.f32 %v2718, %v2784
    %v2798 = vadd.f32 %v2719, %v2784
    %v2799 = vadd.f32 %v2720, %v2784
    %v2800 = vadd.f32 %v2721, %v2784
    %v2801 = vadd.f32 %v2722, %v2784
    %v2802 = vadd.f32 %v2723, %v2784
    %v2803 = vadd.f32 %v2724, %v2784
    %v2804 = vadd.f32 %v2725, %v2784
    %v2805 = vadd.f32 %v2726, %v2784
    %v2806 = vadd.f32 %v2727, %v2784
    %v2807 = vadd.f32 %v2728, %v2784
    %v2808 = vadd.f32 %v2729, %v2784
    %v2809 = vadd.f32 %v2730, %v2784
    %v2810 = vadd.f32 %v2731, %v2784
    %v2811 = vadd.f32 %v2732, %v2784
    %v2812 = vadd.f32 %v2733, %v2784
    %v2813 = vadd.f32 %v2734, %v2784
    %v2814 = vadd.f32 %v2735, %v2784
    %v2815 = vadd.f32 %v2736, %v2784
    %v2816 = vadd.f32 %v2737, %v2784
    %v2817 = vadd.f32 %v2738, %v2784
    %v2818 = vadd.f32 %v2739, %v2784
    %v2819 = vadd.f32 %v2740, %v2784
    %v2820 = vadd.f32 %v2741, %v2784
    %v2821 = vadd.f32 %v2742, %v2784
    %v2822 = vadd.f32 %v2743, %v2784
    %v2823 = vadd.f32 %v2744, %v2784
    %v2824 = vadd.f32 %v2745, %v2784
    %v2825 = vadd.f32 %v2746, %v2784
    %v2826 = vadd.f32 %v2747, %v2784
    %v2827 = vadd.f32 %v2748, %v2784
    %v2828 = vadd.f32 %v2749, %v2784
    %v2829 = vadd.f32 %v2750, %v2784
    %v2830 = vadd.f32 %v2751, %v2784
    %v2831 = vadd.f32 %v2752, %v2784
    %v2832 = vadd.f32 %v2753, %v2784
    %v2833 = vadd.f32 %v2754, %v2784
    %v2834 = vadd.f32 %v2755, %v2784
    %v2835 = vadd.f32 %v2756, %v2784
    %v2836 = vadd.f32 %v2757, %v2784
    %v2837 = vadd.f32 %v2758, %v2784
    %v2838 = vadd.f32 %v2759, %v2784
    %v2839 = vadd.f32 %v2760, %v2784
    %v2840 = vadd.f32 %v2761, %v2784
    %v2841 = vadd.f32 %v2762, %v2784
    %v2842 = vadd.f32 %v2763, %v2784
    %v2843 = vadd.f32 %v2764, %v2784
    %v2844 = vadd.f32 %v2765, %v2784
    %v2845 = vadd.f32 %v2766, %v2784
    %v2846 = vadd.f32 %v2767, %v2784
    %v2847 = vadd.f32 %v2768, %v2784
    %v2848 = vadd.f32 %v2769, %v2784
    %v2849 = vadd.f32 %v2770, %v2784
    %v2850 = vadd.f32 %v2771, %v2784
    %v2851 = vadd.f32 %v2772, %v2784
    %v2852 = vadd.f32 %v2773, %v2784
    %v2853 = vadd.f32 %v2774, %v2784
    %v2854 = vadd.f32 %v2775, %v2784
    %v2855 = vadd.f32 %v2776, %v2784
    %v2856 = vadd.f32 %v2777, %v2784
    %v2857 = vadd.f32 %v2778, %v2784
    %v2858 = vadd.f32 %v2779, %v2784
    %v2859 = vadd.f32 %v2780, %v2784
    %v2860 = vadd.f32 %v2781, %v2784
    %v2861 = vadd.f32 %v2782, %v2784
    %v2862 = vmax.f32 %v2786, 0.0
    %v2863 = vmax.f32 %v2787, 0.0
    %v2864 = vmax.f32 %v2788, 0.0
    %v2865 = vmax.f32 %v2789, 0.0
    %v2866 = vmax.f32 %v2790, 0.0
    %v2867 = vmax.f32 %v2791, 0.0
    %v2868 = vmax.f32 %v2792, 0.0
    %v2869 = vmax.f32 %v2793, 0.0
    %v2870 = vmax.f32 %v2794, 0.0
    %v2871 = vmax.f32 %v2795, 0.0
    %v2872 = vmax.f32 %v2796, 0.0
    %v2873 = vmax.f32 %v2797, 0.0
    %v2874 = vmax.f32 %v2798, 0.0
    %v2875 = vmax.f32 %v2799, 0.0
    %v2876 = vmax.f32 %v2800, 0.0
    %v2877 = vmax.f32 %v2801, 0.0
    %v2878 = vmax.f32 %v2802, 0.0
    %v2879 = vmax.f32 %v2803, 0.0
    %v2880 = vmax.f32 %v2804, 0.0
    %v2881 = vmax.f32 %v2805, 0.0
    %v2882 = vmax.f32 %v2806, 0.0
    %v2883 = vmax.f32 %v2807, 0.0
    %v2884 = vmax.f32 %v2808, 0.0
    %v2885 = vmax.f32 %v2809, 0.0
    %v2886 = vmax.f32 %v2810, 0.0
    %v2887 = vmax.f32 %v2811, 0.0
    %v2888 = vmax.f32 %v2812, 0.0
    %v2889 = vmax.f32 %v2813, 0.0
    %v2890 = vmax.f32 %v2814, 0.0
    %v2891 = vmax.f32 %v2815, 0.0
    %v2892 = vmax.f32 %v2816, 0.0
    %v2893 = vmax.f32 %v2817, 0.0
    %v2894 = vmax.f32 %v2818, 0.0
    %v2895 = vmax.f32 %v2819, 0.0
    %v2896 = vmax.f32 %v2820, 0.0
    %v2897 = vmax.f32 %v2821, 0.0
    %v2898 = vmax.f32 %v2822, 0.0
    %v2899 = vmax.f32 %v2823, 0.0
    %v2900 = vmax.f32 %v2824, 0.0
    %v2901 = vmax.f32 %v2825, 0.0
    %v2902 = vmax.f32 %v2826, 0.0
    %v2903 = vmax.f32 %v2827, 0.0
    %v2904 = vmax.f32 %v2828, 0.0
    %v2905 = vmax.f32 %v2829, 0.0
    %v2906 = vmax.f32 %v2830, 0.0
    %v2907 = vmax.f32 %v2831, 0.0
    %v2908 = vmax.f32 %v2832, 0.0
    %v2909 = vmax.f32 %v2833, 0.0
    %v2910 = vmax.f32 %v2834, 0.0
    %v2911 = vmax.f32 %v2835, 0.0
    %v2912 = vmax.f32 %v2836, 0.0
    %v2913 = vmax.f32 %v2837, 0.0
    %v2914 = vmax.f32 %v2838, 0.0
    %v2915 = vmax.f32 %v2839, 0.0
    %v2916 = vmax.f32 %v2840, 0.0
    %v2917 = vmax.f32 %v2841, 0.0
    %v2918 = vmax.f32 %v2842, 0.0
    %v2919 = vmax.f32 %v2843, 0.0
    %v2920 = vmax.f32 %v2844, 0.0
    %v2921 = vmax.f32 %v2845, 0.0
    %v2922 = vmax.f32 %v2846, 0.0
    %v2923 = vmax.f32 %v2847, 0.0
    %v2924 = vmax.f32 %v2848, 0.0
    %v2925 = vmax.f32 %v2849, 0.0
    %v2926 = vmax.f32 %v2850, 0.0
    %v2927 = vmax.f32 %v2851, 0.0
    %v2928 = vmax.f32 %v2852, 0.0
    %v2929 = vmax.f32 %v2853, 0.0
    %v2930 = vmax.f32 %v2854, 0.0
    %v2931 = vmax.f32 %v2855, 0.0
    %v2932 = vmax.f32 %v2856, 0.0
    %v2933 = vmax.f32 %v2857, 0.0
    %v2934 = vmax.f32 %v2858, 0.0
    %v2935 = vmax.f32 %v2859, 0.0
    %v2936 = vmax.f32 %v2860, 0.0
    %v2937 = vmax.f32 %v2861, 0.0
    %v2994 = vrot.slane %v2862, 1
    %v2995 = vrot.slane %v2863, 1
    %v2996 = vsel %vm706, %v2994, %v2995
    %v2997 = vrot.slane %v2864, 1
    %v2998 = vsel %vm706, %v2995, %v2997
    %v2999 = vrot.slane %v2866, 1
    %v3000 = vrot.slane %v2867, 1
    %v3001 = vsel %vm706, %v2999, %v3000
    %v3002 = vrot.slane %v2868, 1
    %v3003 = vsel %vm706, %v3000, %v3002
    %v3004 = vrot.slane %v2869, 1
    %v3005 = vsel %vm706, %v3002, %v3004
    %v3006 = vrot.slane %v2871, 1
    %v3007 = vrot.slane %v2872, 1
    %v3008 = vsel %vm706, %v3006, %v3007
    %v3009 = vrot.slane %v2873, 1
    %v3010 = vsel %vm706, %v3007, %v3009
    %v3011 = vrot.slane %v2875, 1
    %v3012 = vrot.slane %v2876, 1
    %v3013 = vsel %vm706, %v3011, %v3012
    %v3014 = vrot.slane %v2877, 1
    %v3015 = vsel %vm706, %v3012, %v3014
    %v3016 = vrot.slane %v2878, 1
    %v3017 = vsel %vm706, %v3014, %v3016
    %v3018 = vrot.slane %v2880, 1
    %v3019 = vrot.slane %v2881, 1
    %v3020 = vsel %vm706, %v3018, %v3019
    %v3021 = vrot.slane %v2882, 1
    %v3022 = vsel %vm706, %v3019, %v3021
    %v3023 = vrot.slane %v2884, 1
    %v3024 = vrot.slane %v2885, 1
    %v3025 = vsel %vm706, %v3023, %v3024
    %v3026 = vrot.slane %v2886, 1
    %v3027 = vsel %vm706, %v3024, %v3026
    %v3028 = vrot.slane %v2887, 1
    %v3029 = vsel %vm706, %v3026, %v3028
    %v3030 = vrot.slane %v2889, 1
    %v3031 = vrot.slane %v2890, 1
    %v3032 = vsel %vm706, %v3030, %v3031
    %v3033 = vrot.slane %v2891, 1
    %v3034 = vsel %vm706, %v3031, %v3033
    %v3035 = vrot.slane %v2893, 1
    %v3036 = vrot.slane %v2894, 1
    %v3037 = vsel %vm706, %v3035, %v3036
    %v3038 = vrot.slane %v2895, 1
    %v3039 = vsel %vm706, %v3036, %v3038
    %v3040 = vrot.slane %v2896, 1
    %v3041 = vsel %vm706, %v3038, %v3040
    %v3042 = vrot.slane %v2900, 1
    %v3043 = vrot.slane %v2901, 1
    %v3044 = vsel %vm706, %v3042, %v3043
    %v3045 = vrot.slane %v2902, 1
    %v3046 = vsel %vm706, %v3043, %v3045
    %v3047 = vrot.slane %v2903, 1
    %v3048 = vsel %vm706, %v3045, %v3047
    %v3049 = vrot.slane %v2905, 1
    %v3050 = vrot.slane %v2906, 1
    %v3051 = vsel %vm706, %v3049, %v3050
    %v3052 = vrot.slane %v2907, 1
    %v3053 = vsel %vm706, %v3050, %v3052
    %v3054 = vrot.slane %v2909, 1
    %v3055 = vrot.slane %v2910, 1
    %v3056 = vsel %vm706, %v3054, %v3055
    %v3057 = vrot.slane %v2911, 1
    %v3058 = vsel %vm706, %v3055, %v3057
    %v3059 = vrot.slane %v2912, 1
    %v3060 = vsel %vm706, %v3057, %v3059
    %v3061 = vrot.slane %v2914, 1
    %v3062 = vrot.slane %v2915, 1
    %v3063 = vsel %vm706, %v3061, %v3062
    %v3064 = vrot.slane %v2916, 1
    %v3065 = vsel %vm706, %v3062, %v3064
    %v3066 = vrot.slane %v2918, 1
    %v3067 = vrot.slane %v2919, 1
    %v3068 = vsel %vm706, %v3066, %v3067
    %v3069 = vrot.slane %v2920, 1
    %v3070 = vsel %vm706, %v3067, %v3069
    %v3071 = vrot.slane %v2921, 1
    %v3072 = vsel %vm706, %v3069, %v3071
    %v3073 = vrot.slane %v2923, 1
    %v3074 = vrot.slane %v2924, 1
    %v3075 = vsel %vm706, %v3073, %v3074
    %v3076 = vrot.slane %v2925, 1
    %v3077 = vsel %vm706, %v3074, %v3076
    %v3078 = vrot.slane %v2927, 1
    %v3079 = vrot.slane %v2928, 1
    %v3080 = vsel %vm706, %v3078, %v3079
    %v3081 = vrot.slane %v2929, 1
    %v3082 = vsel %vm706, %v3079, %v3081
    %v3083 = vrot.slane %v2930, 1
    %v3084 = vsel %vm706, %v3081, %v3083
    %v3085 = vrot.slane %v2932, 1
    %v3086 = vrot.slane %v2933, 1
    %v3087 = vsel %vm706, %v3085, %v3086
    %v3088 = vrot.slane %v2934, 1
    %v3089 = vsel %vm706, %v3086, %v3088
    %v3130 = vmax.f32 %v2862, %v2996
    %v3131 = vmax.f32 %v2863, %v2998
    %v3132 = vmax.f32 %v2866, %v3001
    %v3133 = vmax.f32 %v2867, %v3003
    %v3134 = vmax.f32 %v2868, %v3005
    %v3135 = vmax.f32 %v2871, %v3008
    %v3136 = vmax.f32 %v2872, %v3010
    %v3137 = vmax.f32 %v2875, %v3013
    %v3138 = vmax.f32 %v2876, %v3015
    %v3139 = vmax.f32 %v2877, %v3017
    %v3140 = vmax.f32 %v2880, %v3020
    %v3141 = vmax.f32 %v2881, %v3022
    %v3142 = vmax.f32 %v2884, %v3025
    %v3143 = vmax.f32 %v2885, %v3027
    %v3144 = vmax.f32 %v2886, %v3029
    %v3145 = vmax.f32 %v2889, %v3032
    %v3146 = vmax.f32 %v2890, %v3034
    %v3147 = vmax.f32 %v2893, %v3037
    %v3148 = vmax.f32 %v2894, %v3039
    %v3149 = vmax.f32 %v2895, %v3041
    %v3150 = vmax.f32 %v2900, %v3044
    %v3151 = vmax.f32 %v2901, %v3046
    %v3152 = vmax.f32 %v2902, %v3048
    %v3153 = vmax.f32 %v2905, %v3051
    %v3154 = vmax.f32 %v2906, %v3053
    %v3155 = vmax.f32 %v2909, %v3056
    %v3156 = vmax.f32 %v2910, %v3058
    %v3157 = vmax.f32 %v2911, %v3060
    %v3158 = vmax.f32 %v2914, %v3063
    %v3159 = vmax.f32 %v2915, %v3065
    %v3160 = vmax.f32 %v2918, %v3068
    %v3161 = vmax.f32 %v2919, %v3070
    %v3162 = vmax.f32 %v2920, %v3072
    %v3163 = vmax.f32 %v2923, %v3075
    %v3164 = vmax.f32 %v2924, %v3077
    %v3165 = vmax.f32 %v2927, %v3080
    %v3166 = vmax.f32 %v2928, %v3082
    %v3167 = vmax.f32 %v2929, %v3084
    %v3168 = vmax.f32 %v2932, %v3087
    %v3169 = vmax.f32 %v2933, %v3089
    %v3190 = vrot.slane %v2865, 1
    %v3191 = vsel %vm706, %v2997, %v3190
    %v3192 = vsel %vm706, %v3190, %v2999
    %v3193 = vrot.slane %v2870, 1
    %v3194 = vsel %vm706, %v3004, %v3193
    %v3195 = vsel %vm706, %v3193, %v3006
    %v3196 = vrot.slane %v2874, 1
    %v3197 = vsel %vm706, %v3009, %v3196
    %v3198 = vsel %vm706, %v3196, %v3011
    %v3199 = vrot.slane %v2879, 1
    %v3200 = vsel %vm706, %v3016, %v3199
    %v3201 = vsel %vm706, %v3199, %v3018
    %v3202 = vrot.slane %v2883, 1
    %v3203 = vsel %vm706, %v3021, %v3202
    %v3204 = vsel %vm706, %v3202, %v3023
    %v3205 = vrot.slane %v2888, 1
    %v3206 = vsel %vm706, %v3028, %v3205
    %v3207 = vsel %vm706, %v3205, %v3030
    %v3208 = vrot.slane %v2892, 1
    %v3209 = vsel %vm706, %v3033, %v3208
    %v3210 = vsel %vm706, %v3208, %v3035
    %v3211 = vrot.slane %v2897, 1
    %v3212 = vsel %vm706, %v3040, %v3211
    %v3213 = vrot.slane %v2898, 1
    %v3214 = vsel %vm706, %v3211, %v3213
    %v3215 = vrot.slane %v2899, 1
    %v3216 = vsel %vm706, %v3213, %v3215
    %v3217 = vrot.slane %v2904, 1
    %v3218 = vsel %vm706, %v3047, %v3217
    %v3219 = vsel %vm706, %v3217, %v3049
    %v3220 = vrot.slane %v2908, 1
    %v3221 = vsel %vm706, %v3052, %v3220
    %v3222 = vsel %vm706, %v3220, %v3054
    %v3223 = vrot.slane %v2913, 1
    %v3224 = vsel %vm706, %v3059, %v3223
    %v3225 = vsel %vm706, %v3223, %v3061
    %v3226 = vrot.slane %v2917, 1
    %v3227 = vsel %vm706, %v3064, %v3226
    %v3228 = vsel %vm706, %v3226, %v3066
    %v3229 = vrot.slane %v2922, 1
    %v3230 = vsel %vm706, %v3071, %v3229
    %v3231 = vsel %vm706, %v3229, %v3073
    %v3232 = vrot.slane %v2926, 1
    %v3233 = vsel %vm706, %v3076, %v3232
    %v3234 = vsel %vm706, %v3232, %v3078
    %v3235 = vrot.slane %v2931, 1
    %v3236 = vsel %vm706, %v3083, %v3235
    %v3237 = vsel %vm706, %v3235, %v3085
    %v3238 = vrot.slane %v2935, 1
    %v3239 = vsel %vm706, %v3088, %v3238
    %v3240 = vrot.slane %v2936, 1
    %v3241 = vsel %vm706, %v3238, %v3240
    %v3242 = vrot.slane %v2937, 1
    %v3243 = vsel %vm706, %v3240, %v3242
    %v3278 = vmax.f32 %v2864, %v3191
    %v3279 = vmax.f32 %v2865, %v3192
    %v3280 = vmax.f32 %v2869, %v3194
    %v3281 = vmax.f32 %v2870, %v3195
    %v3282 = vmax.f32 %v2873, %v3197
    %v3283 = vmax.f32 %v2874, %v3198
    %v3284 = vmax.f32 %v2878, %v3200
    %v3285 = vmax.f32 %v2879, %v3201
    %v3286 = vmax.f32 %v2882, %v3203
    %v3287 = vmax.f32 %v2883, %v3204
    %v3288 = vmax.f32 %v2887, %v3206
    %v3289 = vmax.f32 %v2888, %v3207
    %v3290 = vmax.f32 %v2891, %v3209
    %v3291 = vmax.f32 %v2892, %v3210
    %v3292 = vmax.f32 %v2896, %v3212
    %v3293 = vmax.f32 %v2897, %v3214
    %v3294 = vmax.f32 %v2898, %v3216
    %v3295 = vmax.f32 %v2903, %v3218
    %v3296 = vmax.f32 %v2904, %v3219
    %v3297 = vmax.f32 %v2907, %v3221
    %v3298 = vmax.f32 %v2908, %v3222
    %v3299 = vmax.f32 %v2912, %v3224
    %v3300 = vmax.f32 %v2913, %v3225
    %v3301 = vmax.f32 %v2916, %v3227
    %v3302 = vmax.f32 %v2917, %v3228
    %v3303 = vmax.f32 %v2921, %v3230
    %v3304 = vmax.f32 %v2922, %v3231
    %v3305 = vmax.f32 %v2925, %v3233
    %v3306 = vmax.f32 %v2926, %v3234
    %v3307 = vmax.f32 %v2930, %v3236
    %v3308 = vmax.f32 %v2931, %v3237
    %v3309 = vmax.f32 %v2934, %v3239
    %v3310 = vmax.f32 %v2935, %v3241
    %v3311 = vmax.f32 %v2936, %v3243
    %v3368 = vrot.slane %v3278, 2
    %v3369 = vrot.slane %v3279, 2
    %v3370 = vsel %vm1182, %v3368, %v3369
    %v3371 = vrot.slane %v3132, 2
    %v3372 = vsel %vm1182, %v3369, %v3371
    %v3373 = vrot.slane %v3134, 2
    %v3374 = vrot.slane %v3280, 2
    %v3375 = vsel %vm1182, %v3373, %v3374
    %v3376 = vrot.slane %v3281, 2
    %v3377 = vsel %vm1182, %v3374, %v3376
    %v3378 = vrot.slane %v3135, 2
    %v3379 = vsel %vm1182, %v3376, %v3378
    %v3380 = vrot.slane %v3282, 2
    %v3381 = vrot.slane %v3283, 2
    %v3382 = vsel %vm1182, %v3380, %v3381
    %v3383 = vrot.slane %v3137, 2
    %v3384 = vsel %vm1182, %v3381, %v3383
    %v3385 = vrot.slane %v3139, 2
    %v3386 = vrot.slane %v3284, 2
    %v3387 = vsel %vm1182, %v3385, %v3386
    %v3388 = vrot.slane %v3285, 2
    %v3389 = vsel %vm1182, %v3386, %v3388
    %v3390 = vrot.slane %v3140, 2
    %v3391 = vsel %vm1182, %v3388, %v3390
    %v3392 = vrot.slane %v3286, 2
    %v3393 = vrot.slane %v3287, 2
    %v3394 = vsel %vm1182, %v3392, %v3393
    %v3395 = vrot.slane %v3142, 2
    %v3396 = vsel %vm1182, %v3393, %v3395
    %v3397 = vrot.slane %v3144, 2
    %v3398 = vrot.slane %v3288, 2
    %v3399 = vsel %vm1182, %v3397, %v3398
    %v3400 = vrot.slane %v3289, 2
    %v3401 = vsel %vm1182, %v3398, %v3400
    %v3402 = vrot.slane %v3145, 2
    %v3403 = vsel %vm1182, %v3400, %v3402
    %v3404 = vrot.slane %v3290, 2
    %v3405 = vrot.slane %v3291, 2
    %v3406 = vsel %vm1182, %v3404, %v3405
    %v3407 = vrot.slane %v3147, 2
    %v3408 = vsel %vm1182, %v3405, %v3407
    %v3409 = vrot.slane %v3149, 2
    %v3410 = vrot.slane %v3292, 2
    %v3411 = vsel %vm1182, %v3409, %v3410
    %v3412 = vrot.slane %v3293, 2
    %v3413 = vsel %vm1182, %v3410, %v3412
    %v3414 = vrot.slane %v3294, 2
    %v3415 = vsel %vm1182, %v3412, %v3414
    %v3416 = vrot.slane %v3152, 2
    %v3417 = vrot.slane %v3295, 2
    %v3418 = vsel %vm1182, %v3416, %v3417
    %v3419 = vrot.slane %v3296, 2
    %v3420 = vsel %vm1182, %v3417, %v3419
    %v3421 = vrot.slane %v3153, 2
    %v3422 = vsel %vm1182, %v3419, %v3421
    %v3423 = vrot.slane %v3297, 2
    %v3424 = vrot.slane %v3298, 2
    %v3425 = vsel %vm1182, %v3423, %v3424
    %v3426 = vrot.slane %v3155, 2
    %v3427 = vsel %vm1182, %v3424, %v3426
    %v3428 = vrot.slane %v3157, 2
    %v3429 = vrot.slane %v3299, 2
    %v3430 = vsel %vm1182, %v3428, %v3429
    %v3431 = vrot.slane %v3300, 2
    %v3432 = vsel %vm1182, %v3429, %v3431
    %v3433 = vrot.slane %v3158, 2
    %v3434 = vsel %vm1182, %v3431, %v3433
    %v3435 = vrot.slane %v3301, 2
    %v3436 = vrot.slane %v3302, 2
    %v3437 = vsel %vm1182, %v3435, %v3436
    %v3438 = vrot.slane %v3160, 2
    %v3439 = vsel %vm1182, %v3436, %v3438
    %v3440 = vrot.slane %v3162, 2
    %v3441 = vrot.slane %v3303, 2
    %v3442 = vsel %vm1182, %v3440, %v3441
    %v3443 = vrot.slane %v3304, 2
    %v3444 = vsel %vm1182, %v3441, %v3443
    %v3445 = vrot.slane %v3163, 2
    %v3446 = vsel %vm1182, %v3443, %v3445
    %v3447 = vrot.slane %v3305, 2
    %v3448 = vrot.slane %v3306, 2
    %v3449 = vsel %vm1182, %v3447, %v3448
    %v3450 = vrot.slane %v3165, 2
    %v3451 = vsel %vm1182, %v3448, %v3450
    %v3452 = vrot.slane %v3167, 2
    %v3453 = vrot.slane %v3307, 2
    %v3454 = vsel %vm1182, %v3452, %v3453
    %v3455 = vrot.slane %v3308, 2
    %v3456 = vsel %vm1182, %v3453, %v3455
    %v3457 = vrot.slane %v3168, 2
    %v3458 = vsel %vm1182, %v3455, %v3457
    %v3459 = vrot.slane %v3309, 2
    %v3460 = vrot.slane %v3310, 2
    %v3461 = vsel %vm1182, %v3459, %v3460
    %v3462 = vrot.slane %v3311, 2
    %v3463 = vsel %vm1182, %v3460, %v3462
    %v3504 = vmax.f32 %v3130, %v3370
    %v3505 = vmax.f32 %v3131, %v3372
    %v3506 = vmax.f32 %v3132, %v3375
    %v3507 = vmax.f32 %v3133, %v3377
    %v3508 = vmax.f32 %v3134, %v3379
    %v3509 = vmax.f32 %v3135, %v3382
    %v3510 = vmax.f32 %v3136, %v3384
    %v3511 = vmax.f32 %v3137, %v3387
    %v3512 = vmax.f32 %v3138, %v3389
    %v3513 = vmax.f32 %v3139, %v3391
    %v3514 = vmax.f32 %v3140, %v3394
    %v3515 = vmax.f32 %v3141, %v3396
    %v3516 = vmax.f32 %v3142, %v3399
    %v3517 = vmax.f32 %v3143, %v3401
    %v3518 = vmax.f32 %v3144, %v3403
    %v3519 = vmax.f32 %v3145, %v3406
    %v3520 = vmax.f32 %v3146, %v3408
    %v3521 = vmax.f32 %v3147, %v3411
    %v3522 = vmax.f32 %v3148, %v3413
    %v3523 = vmax.f32 %v3149, %v3415
    %v3524 = vmax.f32 %v3150, %v3418
    %v3525 = vmax.f32 %v3151, %v3420
    %v3526 = vmax.f32 %v3152, %v3422
    %v3527 = vmax.f32 %v3153, %v3425
    %v3528 = vmax.f32 %v3154, %v3427
    %v3529 = vmax.f32 %v3155, %v3430
    %v3530 = vmax.f32 %v3156, %v3432
    %v3531 = vmax.f32 %v3157, %v3434
    %v3532 = vmax.f32 %v3158, %v3437
    %v3533 = vmax.f32 %v3159, %v3439
    %v3534 = vmax.f32 %v3160, %v3442
    %v3535 = vmax.f32 %v3161, %v3444
    %v3536 = vmax.f32 %v3162, %v3446
    %v3537 = vmax.f32 %v3163, %v3449
    %v3538 = vmax.f32 %v3164, %v3451
    %v3539 = vmax.f32 %v3165, %v3454
    %v3540 = vmax.f32 %v3166, %v3456
    %v3541 = vmax.f32 %v3167, %v3458
    %v3542 = vmax.f32 %v3168, %v3461
    %v3543 = vmax.f32 %v3169, %v3463
    %3544 = vst.msk [vmem:[#allocation2] sm:$0xff] %vm2130, 0.0
    %3545 = vst.msk [vmem:[#allocation2 + $0x8] sm:$0xff] %vm2130, 0.0
    %3546 = vst.msk [vmem:[#allocation2 + $0x10] sm:$0xff] %vm2130, 0.0
    %3547 = vst.msk [vmem:[#allocation2 + $0x18] sm:$0xff] %vm2130, 0.0
    %3548 = vst.msk [vmem:[#allocation2 + $0x20] sm:$0xff] %vm2130, 0.0
    %3549 = vst.msk [vmem:[#allocation2 + $0x28] sm:$0xff] %vm2130, 0.0
    %3550 = vst.msk [vmem:[#allocation2 + $0x30] sm:$0xff] %vm2130, 0.0
    %3551 = vst.msk [vmem:[#allocation2 + $0x38] sm:$0xff] %vm2130, 0.0
    %3552 = vst.msk [vmem:[#allocation2 + $0x40] sm:$0xff] %vm2130, 0.0
    %3553 = vst.msk [vmem:[#allocation2 + $0x48] sm:$0xff] %vm2130, 0.0
    %3554 = vst.msk [vmem:[#allocation2 + $0x50] sm:$0xff] %vm2130, 0.0
    %3555 = vst.msk [vmem:[#allocation2 + $0x58] sm:$0xff] %vm2130, 0.0
    %3556 = vst.msk [vmem:[#allocation2 + $0x60] sm:$0xff] %vm2130, 0.0
    %3557 = vst.msk [vmem:[#allocation2 + $0x68] sm:$0xff] %vm2130, 0.0
    %3558 = vst.msk [vmem:[#allocation2 + $0x70] sm:$0xff] %vm2130, 0.0
    %3559 = vst.msk [vmem:[#allocation2 + $0x78] sm:$0xff] %vm2130, 0.0
    %3560 = vst.msk [vmem:[#allocation2 + $0x80] sm:$0xff] %vm2130, 0.0
    %3561 = vst.msk [vmem:[#allocation2 + $0x88] sm:$0xff] %vm2130, 0.0
    %3562 = vst.msk [vmem:[#allocation2 + $0x90] sm:$0xff] %vm2130, 0.0
    %3563 = vst.msk [vmem:[#allocation2 + $0x98] sm:$0xff] %vm2130, 0.0
    %3564 = vst.msk [vmem:[#allocation2 + $0xa0] sm:$0xff] %vm2130, 0.0
    %3565 = vst.msk [vmem:[#allocation2 + $0xa8] sm:$0xff] %vm2130, 0.0
    %3566 = vst.msk [vmem:[#allocation2 + $0xb0] sm:$0xff] %vm2130, 0.0
    %3567 = vst.msk [vmem:[#allocation2 + $0xb8] sm:$0xff] %vm2130, 0.0
    %3568 = vst.msk [vmem:[#allocation2 + $0xc0] sm:$0xff] %vm2130, 0.0
    %v3569 = vlaneseq
    %v3570 = vshrl.u32 %v3569, 7
    %v3571 = vlaneseq
    %v3572 = vand.u32 %v3571, 127
    %v3573 = vmul.u32 %v3570, 2
    %vm3574 = vcmp.eq.s32.totalorder %v3572, %v3573
    %v3575 = vsel %vm3574, 1, 0
    %v3576 = vcvt.s32.f32 %v3575
    %vm3577 = vcmask 130048
    %v3579 = vsel %vm3577, %v3576, 0
    %3581 = vmatpush.msra.mxu0 0.0
    %3582 = vmatpush.msra.mxu0 0.0
    %3583 = vmatpush.msra.mxu0 0.0
    %3584 = vmatpush.msra.mxu0 0.0
    %3585 = vmatpush.msra.mxu0 0.0
    %3586 = vmatpush.msra.mxu0 0.0
    %3587 = vmatpush.msra.mxu0 0.0
    %3588 = vmatpush.msra.mxu0 0.0
    %3589 = vmatpush.msra.mxu0 0.0
    %3590 = vmatpush.msra.mxu0 0.0
    %3591 = vmatpush.msra.mxu0 0.0
    %3592 = vmatpush.msra.mxu0 0.0
    %3593 = vmatpush.msra.mxu0 0.0
    %3594 = vmatpush.msra.mxu0 0.0
    %3595 = vmatpush.msra.mxu0 %v3505
    %3596 = vmatpush.msra.mxu0 %v3504
    %3597 = vmatmul.f32.gmra.mxu0 %v3579
    %v3598 = vpop.f32.mrf.mxu0
    %v3599 = vadd.f32 0.0, %v3598
    %3600 = vdwg.mxu0
    %3601 = vst.msk [vmem:[#allocation2 + $0xb] sm:$0xff] %vm2130, %v3599
    %vm3605 = vcmask 1043456
    %v3606 = vrot.slane %v3506, 4
    %v3607 = vrot.slane %v3507, 4
    %v3608 = vsel %vm3605, %v3606, %v3607
    %v3609 = vrot.slane %v3508, 4
    %v3610 = vsel %vm3605, %v3607, %v3609
    %3613 = vmatpush.msra.mxu0 0.0
    %3614 = vmatpush.msra.mxu0 0.0
    %3615 = vmatpush.msra.mxu0 0.0
    %3616 = vmatpush.msra.mxu0 0.0
    %3617 = vmatpush.msra.mxu0 0.0
    %3618 = vmatpush.msra.mxu0 0.0
    %3619 = vmatpush.msra.mxu0 0.0
    %3620 = vmatpush.msra.mxu0 0.0
    %3621 = vmatpush.msra.mxu0 0.0
    %3622 = vmatpush.msra.mxu0 0.0
    %3623 = vmatpush.msra.mxu0 0.0
    %3624 = vmatpush.msra.mxu0 0.0
    %3625 = vmatpush.msra.mxu0 0.0
    %3626 = vmatpush.msra.mxu0 0.0
    %3627 = vmatpush.msra.mxu0 %v3610
    %3628 = vmatpush.msra.mxu0 %v3608
    %3629 = vmatmul.f32.gmra.mxu0 %v3579
    %v3630 = vpop.f32.mrf.mxu0
    %v3631 = vadd.f32 0.0, %v3630
    %3632 = vdwg.mxu0
    %3633 = vst.msk [vmem:[#allocation2 + $0x15] sm:$0xff] %vm2130, %v3631
    %3634 = vmatpush.msra.mxu0 0.0
    %3635 = vmatpush.msra.mxu0 0.0
    %3636 = vmatpush.msra.mxu0 0.0
    %3637 = vmatpush.msra.mxu0 0.0
    %3638 = vmatpush.msra.mxu0 0.0
    %3639 = vmatpush.msra.mxu0 0.0
    %3640 = vmatpush.msra.mxu0 0.0
    %3641 = vmatpush.msra.mxu0 0.0
    %3642 = vmatpush.msra.mxu0 0.0
    %3643 = vmatpush.msra.mxu0 0.0
    %3644 = vmatpush.msra.mxu0 0.0
    %3645 = vmatpush.msra.mxu0 0.0
    %3646 = vmatpush.msra.mxu0 0.0
    %3647 = vmatpush.msra.mxu0 0.0
    %3648 = vmatpush.msra.mxu0 %v3510
    %3649 = vmatpush.msra.mxu0 %v3509
    %3650 = vmatmul.f32.gmra.mxu0 %v3579
    %v3651 = vpop.f32.mrf.mxu0
    %v3652 = vadd.f32 0.0, %v3651
    %3653 = vdwg.mxu0
    %3654 = vst.msk [vmem:[#allocation2 + $0x1f] sm:$0xff] %vm2130, %v3652
    %v3658 = vrot.slane %v3511, 4
    %v3659 = vrot.slane %v3512, 4
    %v3660 = vsel %vm3605, %v3658, %v3659
    %v3661 = vrot.slane %v3513, 4
    %v3662 = vsel %vm3605, %v3659, %v3661
    %3665 = vmatpush.msra.mxu0 0.0
    %3666 = vmatpush.msra.mxu0 0.0
    %3667 = vmatpush.msra.mxu0 0.0
    %3668 = vmatpush.msra.mxu0 0.0
    %3669 = vmatpush.msra.mxu0 0.0
    %3670 = vmatpush.msra.mxu0 0.0
    %3671 = vmatpush.msra.mxu0 0.0
    %3672 = vmatpush.msra.mxu0 0.0
    %3673 = vmatpush.msra.mxu0 0.0
    %3674 = vmatpush.msra.mxu0 0.0
    %3675 = vmatpush.msra.mxu0 0.0
    %3676 = vmatpush.msra.mxu0 0.0
    %3677 = vmatpush.msra.mxu0 0.0
    %3678 = vmatpush.msra.mxu0 0.0
    %3679 = vmatpush.msra.mxu0 %v3662
    %3680 = vmatpush.msra.mxu0 %v3660
    %3681 = vmatmul.f32.gmra.mxu0 %v3579
    %v3682 = vpop.f32.mrf.mxu0
    %v3683 = vadd.f32 0.0, %v3682
    %3684 = vdwg.mxu0
    %3685 = vst.msk [vmem:[#allocation2 + $0x29] sm:$0xff] %vm2130, %v3683
    %3686 = vmatpush.msra.mxu0 0.0
    %3687 = vmatpush.msra.mxu0 0.0
    %3688 = vmatpush.msra.mxu0 0.0
    %3689 = vmatpush.msra.mxu0 0.0
    %3690 = vmatpush.msra.mxu0 0.0
    %3691 = vmatpush.msra.mxu0 0.0
    %3692 = vmatpush.msra.mxu0 0.0
    %3693 = vmatpush.msra.mxu0 0.0
    %3694 = vmatpush.msra.mxu0 0.0
    %3695 = vmatpush.msra.mxu0 0.0
    %3696 = vmatpush.msra.mxu0 0.0
    %3697 = vmatpush.msra.mxu0 0.0
    %3698 = vmatpush.msra.mxu0 0.0
    %3699 = vmatpush.msra.mxu0 0.0
    %3700 = vmatpush.msra.mxu0 %v3515
    %3701 = vmatpush.msra.mxu0 %v3514
    %3702 = vmatmul.f32.gmra.mxu0 %v3579
    %v3703 = vpop.f32.mrf.mxu0
    %v3704 = vadd.f32 0.0, %v3703
    %3705 = vdwg.mxu0
    %3706 = vst.msk [vmem:[#allocation2 + $0x33] sm:$0xff] %vm2130, %v3704
    %v3710 = vrot.slane %v3516, 4
    %v3711 = vrot.slane %v3517, 4
    %v3712 = vsel %vm3605, %v3710, %v3711
    %v3713 = vrot.slane %v3518, 4
    %v3714 = vsel %vm3605, %v3711, %v3713
    %3717 = vmatpush.msra.mxu0 0.0
    %3718 = vmatpush.msra.mxu0 0.0
    %3719 = vmatpush.msra.mxu0 0.0
    %3720 = vmatpush.msra.mxu0 0.0
    %3721 = vmatpush.msra.mxu0 0.0
    %3722 = vmatpush.msra.mxu0 0.0
    %3723 = vmatpush.msra.mxu0 0.0
    %3724 = vmatpush.msra.mxu0 0.0
    %3725 = vmatpush.msra.mxu0 0.0
    %3726 = vmatpush.msra.mxu0 0.0
    %3727 = vmatpush.msra.mxu0 0.0
    %3728 = vmatpush.msra.mxu0 0.0
    %3729 = vmatpush.msra.mxu0 0.0
    %3730 = vmatpush.msra.mxu0 0.0
    %3731 = vmatpush.msra.mxu0 %v3714
    %3732 = vmatpush.msra.mxu0 %v3712
    %3733 = vmatmul.f32.gmra.mxu0 %v3579
    %v3734 = vpop.f32.mrf.mxu0
    %v3735 = vadd.f32 0.0, %v3734
    %3736 = vdwg.mxu0
    %3737 = vst.msk [vmem:[#allocation2 + $0x3d] sm:$0xff] %vm2130, %v3735
    %3738 = vmatpush.msra.mxu0 0.0
    %3739 = vmatpush.msra.mxu0 0.0
    %3740 = vmatpush.msra.mxu0 0.0
    %3741 = vmatpush.msra.mxu0 0.0
    %3742 = vmatpush.msra.mxu0 0.0
    %3743 = vmatpush.msra.mxu0 0.0
    %3744 = vmatpush.msra.mxu0 0.0
    %3745 = vmatpush.msra.mxu0 0.0
    %3746 = vmatpush.msra.mxu0 0.0
    %3747 = vmatpush.msra.mxu0 0.0
    %3748 = vmatpush.msra.mxu0 0.0
    %3749 = vmatpush.msra.mxu0 0.0
    %3750 = vmatpush.msra.mxu0 0.0
    %3751 = vmatpush.msra.mxu0 0.0
    %3752 = vmatpush.msra.mxu0 %v3520
    %3753 = vmatpush.msra.mxu0 %v3519
    %3754 = vmatmul.f32.gmra.mxu0 %v3579
    %v3755 = vpop.f32.mrf.mxu0
    %v3756 = vadd.f32 0.0, %v3755
    %3757 = vdwg.mxu0
    %3758 = vst.msk [vmem:[#allocation2 + $0x47] sm:$0xff] %vm2130, %v3756
    %v3762 = vrot.slane %v3521, 4
    %v3763 = vrot.slane %v3522, 4
    %v3764 = vsel %vm3605, %v3762, %v3763
    %v3765 = vrot.slane %v3523, 4
    %v3766 = vsel %vm3605, %v3763, %v3765
    %3769 = vmatpush.msra.mxu0 0.0
    %3770 = vmatpush.msra.mxu0 0.0
    %3771 = vmatpush.msra.mxu0 0.0
    %3772 = vmatpush.msra.mxu0 0.0
    %3773 = vmatpush.msra.mxu0 0.0
    %3774 = vmatpush.msra.mxu0 0.0
    %3775 = vmatpush.msra.mxu0 0.0
    %3776 = vmatpush.msra.mxu0 0.0
    %3777 = vmatpush.msra.mxu0 0.0
    %3778 = vmatpush.msra.mxu0 0.0
    %3779 = vmatpush.msra.mxu0 0.0
    %3780 = vmatpush.msra.mxu0 0.0
    %3781 = vmatpush.msra.mxu0 0.0
    %3782 = vmatpush.msra.mxu0 0.0
    %3783 = vmatpush.msra.mxu0 %v3766
    %3784 = vmatpush.msra.mxu0 %v3764
    %3785 = vmatmul.f32.gmra.mxu0 %v3579
    %v3786 = vpop.f32.mrf.mxu0
    %v3787 = vadd.f32 0.0, %v3786
    %3788 = vdwg.mxu0
    %3789 = vst.msk [vmem:[#allocation2 + $0x51] sm:$0xff] %vm2130, %v3787
    %v3793 = vrot.slane %v3524, 4
    %v3794 = vrot.slane %v3525, 4
    %v3795 = vsel %vm3605, %v3793, %v3794
    %v3796 = vrot.slane %v3526, 4
    %v3797 = vsel %vm3605, %v3794, %v3796
    %3800 = vmatpush.msra.mxu0 0.0
    %3801 = vmatpush.msra.mxu0 0.0
    %3802 = vmatpush.msra.mxu0 0.0
    %3803 = vmatpush.msra.mxu0 0.0
    %3804 = vmatpush.msra.mxu0 0.0
    %3805 = vmatpush.msra.mxu0 0.0
    %3806 = vmatpush.msra.mxu0 0.0
    %3807 = vmatpush.msra.mxu0 0.0
    %3808 = vmatpush.msra.mxu0 0.0
    %3809 = vmatpush.msra.mxu0 0.0
    %3810 = vmatpush.msra.mxu0 0.0
    %3811 = vmatpush.msra.mxu0 0.0
    %3812 = vmatpush.msra.mxu0 0.0
    %3813 = vmatpush.msra.mxu0 0.0
    %3814 = vmatpush.msra.mxu0 %v3797
    %3815 = vmatpush.msra.mxu0 %v3795
    %3816 = vmatmul.f32.gmra.mxu0 %v3579
    %v3817 = vpop.f32.mrf.mxu0
    %v3818 = vadd.f32 0.0, %v3817
    %3819 = vdwg.mxu0
    %3820 = vst.msk [vmem:[#allocation2 + $0x6f] sm:$0xff] %vm2130, %v3818
    %3821 = vmatpush.msra.mxu0 0.0
    %3822 = vmatpush.msra.mxu0 0.0
    %3823 = vmatpush.msra.mxu0 0.0
    %3824 = vmatpush.msra.mxu0 0.0
    %3825 = vmatpush.msra.mxu0 0.0
    %3826 = vmatpush.msra.mxu0 0.0
    %3827 = vmatpush.msra.mxu0 0.0
    %3828 = vmatpush.msra.mxu0 0.0
    %3829 = vmatpush.msra.mxu0 0.0
    %3830 = vmatpush.msra.mxu0 0.0
    %3831 = vmatpush.msra.mxu0 0.0
    %3832 = vmatpush.msra.mxu0 0.0
    %3833 = vmatpush.msra.mxu0 0.0
    %3834 = vmatpush.msra.mxu0 0.0
    %3835 = vmatpush.msra.mxu0 %v3528
    %3836 = vmatpush.msra.mxu0 %v3527
    %3837 = vmatmul.f32.gmra.mxu0 %v3579
    %v3838 = vpop.f32.mrf.mxu0
    %v3839 = vadd.f32 0.0, %v3838
    %3840 = vdwg.mxu0
    %3841 = vst.msk [vmem:[#allocation2 + $0x79] sm:$0xff] %vm2130, %v3839
    %v3845 = vrot.slane %v3529, 4
    %v3846 = vrot.slane %v3530, 4
    %v3847 = vsel %vm3605, %v3845, %v3846
    %v3848 = vrot.slane %v3531, 4
    %v3849 = vsel %vm3605, %v3846, %v3848
    %3852 = vmatpush.msra.mxu0 0.0
    %3853 = vmatpush.msra.mxu0 0.0
    %3854 = vmatpush.msra.mxu0 0.0
    %3855 = vmatpush.msra.mxu0 0.0
    %3856 = vmatpush.msra.mxu0 0.0
    %3857 = vmatpush.msra.mxu0 0.0
    %3858 = vmatpush.msra.mxu0 0.0
    %3859 = vmatpush.msra.mxu0 0.0
    %3860 = vmatpush.msra.mxu0 0.0
    %3861 = vmatpush.msra.mxu0 0.0
    %3862 = vmatpush.msra.mxu0 0.0
    %3863 = vmatpush.msra.mxu0 0.0
    %3864 = vmatpush.msra.mxu0 0.0
    %3865 = vmatpush.msra.mxu0 0.0
    %3866 = vmatpush.msra.mxu0 %v3849
    %3867 = vmatpush.msra.mxu0 %v3847
    %3868 = vmatmul.f32.gmra.mxu0 %v3579
    %v3869 = vpop.f32.mrf.mxu0
    %v3870 = vadd.f32 0.0, %v3869
    %3871 = vdwg.mxu0
    %3872 = vst.msk [vmem:[#allocation2 + $0x83] sm:$0xff] %vm2130, %v3870
    %3873 = vmatpush.msra.mxu0 0.0
    %3874 = vmatpush.msra.mxu0 0.0
    %3875 = vmatpush.msra.mxu0 0.0
    %3876 = vmatpush.msra.mxu0 0.0
    %3877 = vmatpush.msra.mxu0 0.0
    %3878 = vmatpush.msra.mxu0 0.0
    %3879 = vmatpush.msra.mxu0 0.0
    %3880 = vmatpush.msra.mxu0 0.0
    %3881 = vmatpush.msra.mxu0 0.0
    %3882 = vmatpush.msra.mxu0 0.0
    %3883 = vmatpush.msra.mxu0 0.0
    %3884 = vmatpush.msra.mxu0 0.0
    %3885 = vmatpush.msra.mxu0 0.0
    %3886 = vmatpush.msra.mxu0 0.0
    %3887 = vmatpush.msra.mxu0 %v3533
    %3888 = vmatpush.msra.mxu0 %v3532
    %3889 = vmatmul.f32.gmra.mxu0 %v3579
    %v3890 = vpop.f32.mrf.mxu0
    %v3891 = vadd.f32 0.0, %v3890
    %3892 = vdwg.mxu0
    %3893 = vst.msk [vmem:[#allocation2 + $0x8d] sm:$0xff] %vm2130, %v3891
    %v3897 = vrot.slane %v3534, 4
    %v3898 = vrot.slane %v3535, 4
    %v3899 = vsel %vm3605, %v3897, %v3898
    %v3900 = vrot.slane %v3536, 4
    %v3901 = vsel %vm3605, %v3898, %v3900
    %3904 = vmatpush.msra.mxu0 0.0
    %3905 = vmatpush.msra.mxu0 0.0
    %3906 = vmatpush.msra.mxu0 0.0
    %3907 = vmatpush.msra.mxu0 0.0
    %3908 = vmatpush.msra.mxu0 0.0
    %3909 = vmatpush.msra.mxu0 0.0
    %3910 = vmatpush.msra.mxu0 0.0
    %3911 = vmatpush.msra.mxu0 0.0
    %3912 = vmatpush.msra.mxu0 0.0
    %3913 = vmatpush.msra.mxu0 0.0
    %3914 = vmatpush.msra.mxu0 0.0
    %3915 = vmatpush.msra.mxu0 0.0
    %3916 = vmatpush.msra.mxu0 0.0
    %3917 = vmatpush.msra.mxu0 0.0
    %3918 = vmatpush.msra.mxu0 %v3901
    %3919 = vmatpush.msra.mxu0 %v3899
    %3920 = vmatmul.f32.gmra.mxu0 %v3579
    %v3921 = vpop.f32.mrf.mxu0
    %v3922 = vadd.f32 0.0, %v3921
    %3923 = vdwg.mxu0
    %3924 = vst.msk [vmem:[#allocation2 + $0x97] sm:$0xff] %vm2130, %v3922
    %3925 = vmatpush.msra.mxu0 0.0
    %3926 = vmatpush.msra.mxu0 0.0
    %3927 = vmatpush.msra.mxu0 0.0
    %3928 = vmatpush.msra.mxu0 0.0
    %3929 = vmatpush.msra.mxu0 0.0
    %3930 = vmatpush.msra.mxu0 0.0
    %3931 = vmatpush.msra.mxu0 0.0
    %3932 = vmatpush.msra.mxu0 0.0
    %3933 = vmatpush.msra.mxu0 0.0
    %3934 = vmatpush.msra.mxu0 0.0
    %3935 = vmatpush.msra.mxu0 0.0
    %3936 = vmatpush.msra.mxu0 0.0
    %3937 = vmatpush.msra.mxu0 0.0
    %3938 = vmatpush.msra.mxu0 0.0
    %3939 = vmatpush.msra.mxu0 %v3538
    %3940 = vmatpush.msra.mxu0 %v3537
    %3941 = vmatmul.f32.gmra.mxu0 %v3579
    %v3942 = vpop.f32.mrf.mxu0
    %v3943 = vadd.f32 0.0, %v3942
    %3944 = vdwg.mxu0
    %3945 = vst.msk [vmem:[#allocation2 + $0xa1] sm:$0xff] %vm2130, %v3943
    %v3949 = vrot.slane %v3539, 4
    %v3950 = vrot.slane %v3540, 4
    %v3951 = vsel %vm3605, %v3949, %v3950
    %v3952 = vrot.slane %v3541, 4
    %v3953 = vsel %vm3605, %v3950, %v3952
    %3956 = vmatpush.msra.mxu0 0.0
    %3957 = vmatpush.msra.mxu0 0.0
    %3958 = vmatpush.msra.mxu0 0.0
    %3959 = vmatpush.msra.mxu0 0.0
    %3960 = vmatpush.msra.mxu0 0.0
    %3961 = vmatpush.msra.mxu0 0.0
    %3962 = vmatpush.msra.mxu0 0.0
    %3963 = vmatpush.msra.mxu0 0.0
    %3964 = vmatpush.msra.mxu0 0.0
    %3965 = vmatpush.msra.mxu0 0.0
    %3966 = vmatpush.msra.mxu0 0.0
    %3967 = vmatpush.msra.mxu0 0.0
    %3968 = vmatpush.msra.mxu0 0.0
    %3969 = vmatpush.msra.mxu0 0.0
    %3970 = vmatpush.msra.mxu0 %v3953
    %3971 = vmatpush.msra.mxu0 %v3951
    %3972 = vmatmul.f32.gmra.mxu0 %v3579
    %v3973 = vpop.f32.mrf.mxu0
    %v3974 = vadd.f32 0.0, %v3973
    %3975 = vdwg.mxu0
    %3976 = vst.msk [vmem:[#allocation2 + $0xab] sm:$0xff] %vm2130, %v3974
    %3977 = vmatpush.msra.mxu0 0.0
    %3978 = vmatpush.msra.mxu0 0.0
    %3979 = vmatpush.msra.mxu0 0.0
    %3980 = vmatpush.msra.mxu0 0.0
    %3981 = vmatpush.msra.mxu0 0.0
    %3982 = vmatpush.msra.mxu0 0.0
    %3983 = vmatpush.msra.mxu0 0.0
    %3984 = vmatpush.msra.mxu0 0.0
    %3985 = vmatpush.msra.mxu0 0.0
    %3986 = vmatpush.msra.mxu0 0.0
    %3987 = vmatpush.msra.mxu0 0.0
    %3988 = vmatpush.msra.mxu0 0.0
    %3989 = vmatpush.msra.mxu0 0.0
    %3990 = vmatpush.msra.mxu0 0.0
    %3991 = vmatpush.msra.mxu0 %v3543
    %3992 = vmatpush.msra.mxu0 %v3542
    %3993 = vmatmul.f32.gmra.mxu0 %v3579
    %v3994 = vpop.f32.mrf.mxu0
    %v3995 = vadd.f32 0.0, %v3994
    %3996 = vdwg.mxu0
    %3997 = vst.msk [vmem:[#allocation2 + $0xb5] sm:$0xff] %vm2130, %v3995
    %v3998 = vld [vmem:[#allocation2] sm:$0xff]
    %v3999 = vld [vmem:[#allocation2 + $0x8] sm:$0xff]
    %v4000 = vld [vmem:[#allocation2 + $0x10] sm:$0xff]
    %v4001 = vld [vmem:[#allocation2 + $0x18] sm:$0xff]
    %v4002 = vld [vmem:[#allocation2 + $0x20] sm:$0xff]
    %v4003 = vld [vmem:[#allocation2 + $0x28] sm:$0xff]
    %v4004 = vld [vmem:[#allocation2 + $0x30] sm:$0xff]
    %v4005 = vld [vmem:[#allocation2 + $0x38] sm:$0xff]
    %v4006 = vld [vmem:[#allocation2 + $0x40] sm:$0xff]
    %v4007 = vld [vmem:[#allocation2 + $0x48] sm:$0xff]
    %v4008 = vld [vmem:[#allocation2 + $0x50] sm:$0xff]
    %v4009 = vld [vmem:[#allocation2 + $0x58] sm:$0xff]
    %v4010 = vld [vmem:[#allocation2 + $0x60] sm:$0xff]
    %v4011 = vld [vmem:[#allocation2 + $0x68] sm:$0xff]
    %v4012 = vld [vmem:[#allocation2 + $0x70] sm:$0xff]
    %v4013 = vld [vmem:[#allocation2 + $0x78] sm:$0xff]
    %v4014 = vld [vmem:[#allocation2 + $0x80] sm:$0xff]
    %v4015 = vld [vmem:[#allocation2 + $0x88] sm:$0xff]
    %v4016 = vld [vmem:[#allocation2 + $0x90] sm:$0xff]
    %v4017 = vld [vmem:[#allocation2 + $0x98] sm:$0xff]
    %v4018 = vld [vmem:[#allocation2 + $0xa0] sm:$0xff]
    %v4019 = vld [vmem:[#allocation2 + $0xa8] sm:$0xff]
    %v4020 = vld [vmem:[#allocation2 + $0xb0] sm:$0xff]
    %v4021 = vld [vmem:[#allocation2 + $0xb8] sm:$0xff]
    %v4022 = vld [vmem:[#allocation2 + $0xc0] sm:$0xff]
    %v4023 = vld [vmem:[%s4] sm:$0xff]
    %v4024 = vld [vmem:[%s4 + $0x8] sm:$0xff]
    %v4025 = vld [vmem:[%s4 + $0x10] sm:$0xff]
    %v4026 = vld [vmem:[%s4 + $0x18] sm:$0xff]
    %v4027 = vld [vmem:[%s4 + $0x20] sm:$0xff]
    %v4028 = vld [vmem:[%s4 + $0x28] sm:$0xff]
    %v4029 = vld [vmem:[%s4 + $0x30] sm:$0xff]
    %v4030 = vld [vmem:[%s4 + $0x38] sm:$0xff]
    %v4032 = vsel %vm2130, %v3998, 0
    %v4035 = vsel %vm2130, %v3999, 0
    %v4038 = vsel %vm2130, %v4000, 0
    %v4041 = vsel %vm2130, %v4001, 0
    %v4044 = vsel %vm2130, %v4002, 0
    %v4047 = vsel %vm2130, %v4003, 0
    %v4050 = vsel %vm2130, %v4004, 0
    %v4053 = vsel %vm2130, %v4005, 0
    %v4056 = vsel %vm2130, %v4006, 0
    %v4059 = vsel %vm2130, %v4007, 0
    %v4062 = vsel %vm2130, %v4008, 0
    %v4065 = vsel %vm2130, %v4009, 0
    %v4068 = vsel %vm2130, %v4010, 0
    %v4071 = vsel %vm2130, %v4011, 0
    %v4074 = vsel %vm2130, %v4012, 0
    %v4077 = vsel %vm2130, %v4013, 0
    %v4080 = vsel %vm2130, %v4014, 0
    %v4083 = vsel %vm2130, %v4015, 0
    %v4086 = vsel %vm2130, %v4016, 0
    %v4089 = vsel %vm2130, %v4017, 0
    %v4092 = vsel %vm2130, %v4018, 0
    %v4095 = vsel %vm2130, %v4019, 0
    %v4098 = vsel %vm2130, %v4020, 0
    %v4101 = vsel %vm2130, %v4021, 0
    %v4104 = vsel %vm2130, %v4022, 0
    %4106 = vmatpush.msra.mxu0 0.0
    %4107 = vmatpush.msra.mxu0 0.0
    %4108 = vmatpush.msra.mxu0 0.0
    %4109 = vmatpush.msra.mxu0 0.0
    %4110 = vmatpush.msra.mxu0 0.0
    %4111 = vmatpush.msra.mxu0 0.0
    %4112 = vmatpush.msra.mxu0 0.0
    %4113 = vmatpush.msra.mxu0 0.0
    %4114 = vmatpush.msra.mxu0 0.0
    %4115 = vmatpush.msra.mxu0 0.0
    %4116 = vmatpush.msra.mxu0 0.0
    %4117 = vmatpush.msra.mxu0 0.0
    %4118 = vmatpush.msra.mxu0 %v4029
    %4119 = vmatpush.msra.mxu0 %v4027
    %4120 = vmatpush.msra.mxu0 %v4025
    %4121 = vmatpush.msra.mxu0 %v4023
    %4122 = vmatmul.f32.gmra.mxu0 %v4032
    %v4123 = vpop.f32.mrf.mxu0
    %v4124 = vadd.f32 0.0, %v4123
    %4125 = vmatmul.f32.gmra.mxu0 %v4035
    %v4126 = vpop.f32.mrf.mxu0
    %v4127 = vadd.f32 0.0, %v4126
    %4128 = vmatmul.f32.gmra.mxu0 %v4038
    %v4129 = vpop.f32.mrf.mxu0
    %v4130 = vadd.f32 0.0, %v4129
    %4131 = vmatmul.f32.gmra.mxu0 %v4041
    %v4132 = vpop.f32.mrf.mxu0
    %v4133 = vadd.f32 0.0, %v4132
    %4134 = vmatmul.f32.gmra.mxu0 %v4044
    %v4135 = vpop.f32.mrf.mxu0
    %v4136 = vadd.f32 0.0, %v4135
    %4137 = vmatmul.f32.gmra.mxu0 %v4047
    %v4138 = vpop.f32.mrf.mxu0
    %v4139 = vadd.f32 0.0, %v4138
    %4140 = vmatmul.f32.gmra.mxu0 %v4050
    %v4141 = vpop.f32.mrf.mxu0
    %v4142 = vadd.f32 0.0, %v4141
    %4143 = vmatmul.f32.gmra.mxu0 %v4053
    %v4144 = vpop.f32.mrf.mxu0
    %v4145 = vadd.f32 0.0, %v4144
    %4146 = vmatmul.f32.gmra.mxu0 %v4056
    %v4147 = vpop.f32.mrf.mxu0
    %v4148 = vadd.f32 0.0, %v4147
    %4149 = vmatmul.f32.gmra.mxu0 %v4059
    %v4150 = vpop.f32.mrf.mxu0
    %v4151 = vadd.f32 0.0, %v4150
    %4152 = vmatmul.f32.gmra.mxu0 %v4062
    %v4153 = vpop.f32.mrf.mxu0
    %v4154 = vadd.f32 0.0, %v4153
    %4155 = vmatmul.f32.gmra.mxu0 %v4065
    %v4156 = vpop.f32.mrf.mxu0
    %v4157 = vadd.f32 0.0, %v4156
    %4158 = vmatmul.f32.gmra.mxu0 %v4068
    %v4159 = vpop.f32.mrf.mxu0
    %v4160 = vadd.f32 0.0, %v4159
    %4161 = vmatmul.f32.gmra.mxu0 %v4071
    %v4162 = vpop.f32.mrf.mxu0
    %v4163 = vadd.f32 0.0, %v4162
    %4164 = vmatmul.f32.gmra.mxu0 %v4074
    %v4165 = vpop.f32.mrf.mxu0
    %v4166 = vadd.f32 0.0, %v4165
    %4167 = vmatmul.f32.gmra.mxu0 %v4077
    %v4168 = vpop.f32.mrf.mxu0
    %v4169 = vadd.f32 0.0, %v4168
    %4170 = vmatmul.f32.gmra.mxu0 %v4080
    %v4171 = vpop.f32.mrf.mxu0
    %v4172 = vadd.f32 0.0, %v4171
    %4173 = vmatmul.f32.gmra.mxu0 %v4083
    %v4174 = vpop.f32.mrf.mxu0
    %v4175 = vadd.f32 0.0, %v4174
    %4176 = vmatmul.f32.gmra.mxu0 %v4086
    %v4177 = vpop.f32.mrf.mxu0
    %v4178 = vadd.f32 0.0, %v4177
    %4179 = vmatmul.f32.gmra.mxu0 %v4089
    %v4180 = vpop.f32.mrf.mxu0
    %v4181 = vadd.f32 0.0, %v4180
    %4182 = vmatmul.f32.gmra.mxu0 %v4092
    %v4183 = vpop.f32.mrf.mxu0
    %v4184 = vadd.f32 0.0, %v4183
    %4185 = vmatmul.f32.gmra.mxu0 %v4095
    %v4186 = vpop.f32.mrf.mxu0
    %v4187 = vadd.f32 0.0, %v4186
    %4188 = vmatmul.f32.gmra.mxu0 %v4098
    %v4189 = vpop.f32.mrf.mxu0
    %v4190 = vadd.f32 0.0, %v4189
    %4191 = vmatmul.f32.gmra.mxu0 %v4101
    %v4192 = vpop.f32.mrf.mxu0
    %v4193 = vadd.f32 0.0, %v4192
    %4194 = vmatmul.f32.gmra.mxu0 %v4104
    %v4195 = vpop.f32.mrf.mxu0
    %4196 = vdwg.mxu0
    %4197 = vmatpush.msra.mxu0 0.0
    %4198 = vmatpush.msra.mxu0 0.0
    %4199 = vmatpush.msra.mxu0 0.0
    %4200 = vmatpush.msra.mxu0 0.0
    %4201 = vmatpush.msra.mxu0 0.0
    %4202 = vmatpush.msra.mxu0 0.0
    %4203 = vmatpush.msra.mxu0 0.0
    %4204 = vmatpush.msra.mxu0 0.0
    %4205 = vmatpush.msra.mxu0 0.0
    %4206 = vmatpush.msra.mxu0 0.0
    %4207 = vmatpush.msra.mxu0 0.0
    %4208 = vmatpush.msra.mxu0 0.0
    %4209 = vmatpush.msra.mxu0 %v4030
    %4210 = vmatpush.msra.mxu0 %v4028
    %4211 = vmatpush.msra.mxu0 %v4026
    %4212 = vmatpush.msra.mxu0 %v4024
    %4213 = vmatmul.f32.gmra.mxu0 %v4032
    %v4214 = vpop.f32.mrf.mxu0
    %4215 = vmatmul.f32.gmra.mxu0 %v4035
    %v4216 = vpop.f32.mrf.mxu0
    %v4217 = vadd.f32 0.0, %v4216
    %4218 = vmatmul.f32.gmra.mxu0 %v4038
    %v4219 = vpop.f32.mrf.mxu0
    %v4220 = vadd.f32 0.0, %v4219
    %4221 = vmatmul.f32.gmra.mxu0 %v4041
    %v4222 = vpop.f32.mrf.mxu0
    %v4223 = vadd.f32 0.0, %v4222
    %4224 = vmatmul.f32.gmra.mxu0 %v4044
    %v4225 = vpop.f32.mrf.mxu0
    %v4226 = vadd.f32 0.0, %v4225
    %4227 = vmatmul.f32.gmra.mxu0 %v4047
    %v4228 = vpop.f32.mrf.mxu0
    %v4229 = vadd.f32 0.0, %v4228
    %4230 = vmatmul.f32.gmra.mxu0 %v4050
    %v4231 = vpop.f32.mrf.mxu0
    %v4232 = vadd.f32 0.0, %v4231
    %4233 = vmatmul.f32.gmra.mxu0 %v4053
    %v4234 = vpop.f32.mrf.mxu0
    %v4235 = vadd.f32 0.0, %v4234
    %4236 = vmatmul.f32.gmra.mxu0 %v4056
    %v4237 = vpop.f32.mrf.mxu0
    %v4238 = vadd.f32 0.0, %v4237
    %4239 = vmatmul.f32.gmra.mxu0 %v4059
    %v4240 = vpop.f32.mrf.mxu0
    %v4241 = vadd.f32 0.0, %v4240
    %4242 = vmatmul.f32.gmra.mxu0 %v4062
    %v4243 = vpop.f32.mrf.mxu0
    %v4244 = vadd.f32 0.0, %v4243
    %4245 = vmatmul.f32.gmra.mxu0 %v4065
    %v4246 = vpop.f32.mrf.mxu0
    %v4247 = vadd.f32 0.0, %v4246
    %4248 = vmatmul.f32.gmra.mxu0 %v4068
    %v4249 = vpop.f32.mrf.mxu0
    %v4250 = vadd.f32 0.0, %v4249
    %4251 = vmatmul.f32.gmra.mxu0 %v4071
    %v4252 = vpop.f32.mrf.mxu0
    %v4253 = vadd.f32 0.0, %v4252
    %4254 = vmatmul.f32.gmra.mxu0 %v4074
    %v4255 = vpop.f32.mrf.mxu0
    %v4256 = vadd.f32 0.0, %v4255
    %4257 = vmatmul.f32.gmra.mxu0 %v4077
    %v4258 = vpop.f32.mrf.mxu0
    %v4259 = vadd.f32 0.0, %v4258
    %4260 = vmatmul.f32.gmra.mxu0 %v4080
    %v4261 = vpop.f32.mrf.mxu0
    %v4262 = vadd.f32 0.0, %v4261
    %4263 = vmatmul.f32.gmra.mxu0 %v4083
    %v4264 = vpop.f32.mrf.mxu0
    %v4265 = vadd.f32 0.0, %v4264
    %4266 = vmatmul.f32.gmra.mxu0 %v4086
    %v4267 = vpop.f32.mrf.mxu0
    %v4268 = vadd.f32 0.0, %v4267
    %4269 = vmatmul.f32.gmra.mxu0 %v4089
    %v4270 = vpop.f32.mrf.mxu0
    %v4271 = vadd.f32 0.0, %v4270
    %4272 = vmatmul.f32.gmra.mxu0 %v4092
    %v4273 = vpop.f32.mrf.mxu0
    %v4274 = vadd.f32 0.0, %v4273
    %4275 = vmatmul.f32.gmra.mxu0 %v4095
    %v4276 = vpop.f32.mrf.mxu0
    %v4277 = vadd.f32 0.0, %v4276
    %4278 = vmatmul.f32.gmra.mxu0 %v4098
    %v4279 = vpop.f32.mrf.mxu0
    %v4280 = vadd.f32 0.0, %v4279
    %4281 = vmatmul.f32.gmra.mxu0 %v4101
    %v4282 = vpop.f32.mrf.mxu0
    %v4283 = vadd.f32 0.0, %v4282
    %4284 = vmatmul.f32.gmra.mxu0 %v4104
    %v4285 = vpop.f32.mrf.mxu0
    %v4286 = vadd.f32 0.0, %v4285
    %4287 = vdwg.mxu0
    %v4288 = vld [vmem:[%s5] sm:$0x1]
    %v4289 = vld [vmem:[%s6] sm:$0x1]
    %v4314 = vrot.slane %v4124, 1
    %v4315 = vrot.slane %v4127, 1
    %v4316 = vsel %vm706, %v4314, %v4315
    %v4317 = vrot.slane %v4130, 1
    %v4318 = vsel %vm706, %v4315, %v4317
    %v4319 = vrot.slane %v4133, 1
    %v4320 = vsel %vm706, %v4317, %v4319
    %v4321 = vrot.slane %v4136, 1
    %v4322 = vsel %vm706, %v4319, %v4321
    %v4323 = vrot.slane %v4139, 1
    %v4324 = vsel %vm706, %v4321, %v4323
    %v4325 = vrot.slane %v4142, 1
    %v4326 = vsel %vm706, %v4323, %v4325
    %v4327 = vrot.slane %v4145, 1
    %v4328 = vsel %vm706, %v4325, %v4327
    %v4329 = vrot.slane %v4148, 1
    %v4330 = vsel %vm706, %v4327, %v4329
    %v4331 = vrot.slane %v4151, 1
    %v4332 = vsel %vm706, %v4329, %v4331
    %v4333 = vrot.slane %v4154, 1
    %v4334 = vsel %vm706, %v4331, %v4333
    %v4335 = vrot.slane %v4157, 1
    %v4336 = vsel %vm706, %v4333, %v4335
    %v4337 = vrot.slane %v4160, 1
    %v4338 = vsel %vm706, %v4335, %v4337
    %v4339 = vrot.slane %v4163, 1
    %v4340 = vsel %vm706, %v4337, %v4339
    %v4341 = vrot.slane %v4166, 1
    %v4342 = vsel %vm706, %v4339, %v4341
    %v4343 = vrot.slane %v4169, 1
    %v4344 = vsel %vm706, %v4341, %v4343
    %v4345 = vrot.slane %v4172, 1
    %v4346 = vsel %vm706, %v4343, %v4345
    %v4347 = vrot.slane %v4175, 1
    %v4348 = vsel %vm706, %v4345, %v4347
    %v4349 = vrot.slane %v4178, 1
    %v4350 = vsel %vm706, %v4347, %v4349
    %v4351 = vrot.slane %v4181, 1
    %v4352 = vsel %vm706, %v4349, %v4351
    %v4353 = vrot.slane %v4184, 1
    %v4354 = vsel %vm706, %v4351, %v4353
    %v4355 = vrot.slane %v4187, 1
    %v4356 = vsel %vm706, %v4353, %v4355
    %v4357 = vrot.slane %v4190, 1
    %v4358 = vsel %vm706, %v4355, %v4357
    %v4359 = vrot.slane %v4193, 1
    %v4360 = vsel %vm706, %v4357, %v4359
    %4361 = vrot.lane.b32.xlu0 %v4316, 64
    %v4362 = vpop.permute.xlu0 %4361
    %4363 = vrot.lane.b32.xlu0 %v4318, 64
    %v4364 = vpop.permute.xlu0 %4363
    %4365 = vrot.lane.b32.xlu0 %v4320, 64
    %v4366 = vpop.permute.xlu0 %4365
    %4367 = vrot.lane.b32.xlu0 %v4322, 64
    %v4368 = vpop.permute.xlu0 %4367
    %4369 = vrot.lane.b32.xlu0 %v4324, 64
    %v4370 = vpop.permute.xlu0 %4369
    %4371 = vrot.lane.b32.xlu0 %v4326, 64
    %v4372 = vpop.permute.xlu0 %4371
    %4373 = vrot.lane.b32.xlu0 %v4328, 64
    %v4374 = vpop.permute.xlu0 %4373
    %4375 = vrot.lane.b32.xlu0 %v4330, 64
    %v4376 = vpop.permute.xlu0 %4375
    %4377 = vrot.lane.b32.xlu0 %v4332, 64
    %v4378 = vpop.permute.xlu0 %4377
    %4379 = vrot.lane.b32.xlu0 %v4334, 64
    %v4380 = vpop.permute.xlu0 %4379
    %4381 = vrot.lane.b32.xlu0 %v4336, 64
    %v4382 = vpop.permute.xlu0 %4381
    %4383 = vrot.lane.b32.xlu0 %v4338, 64
    %v4384 = vpop.permute.xlu0 %4383
    %4385 = vrot.lane.b32.xlu0 %v4340, 64
    %v4386 = vpop.permute.xlu0 %4385
    %4387 = vrot.lane.b32.xlu0 %v4342, 64
    %v4388 = vpop.permute.xlu0 %4387
    %4389 = vrot.lane.b32.xlu0 %v4344, 64
    %v4390 = vpop.permute.xlu0 %4389
    %4391 = vrot.lane.b32.xlu0 %v4346, 64
    %v4392 = vpop.permute.xlu0 %4391
    %4393 = vrot.lane.b32.xlu0 %v4348, 64
    %v4394 = vpop.permute.xlu0 %4393
    %4395 = vrot.lane.b32.xlu0 %v4350, 64
    %v4396 = vpop.permute.xlu0 %4395
    %4397 = vrot.lane.b32.xlu0 %v4352, 64
    %v4398 = vpop.permute.xlu0 %4397
    %4399 = vrot.lane.b32.xlu0 %v4354, 64
    %v4400 = vpop.permute.xlu0 %4399
    %4401 = vrot.lane.b32.xlu0 %v4356, 64
    %v4402 = vpop.permute.xlu0 %4401
    %4403 = vrot.lane.b32.xlu0 %v4358, 64
    %v4404 = vpop.permute.xlu0 %4403
    %4405 = vrot.lane.b32.xlu0 %v4360, 64
    %v4406 = vpop.permute.xlu0 %4405
    %4407 = vrot.lane.b32.xlu0 %v4359, 64
    %v4408 = vpop.permute.xlu0 %4407
    %v4433 = vadd.f32 %v4124, %v4362
    %v4434 = vadd.f32 %v4127, %v4364
    %v4435 = vadd.f32 %v4130, %v4366
    %v4436 = vadd.f32 %v4133, %v4368
    %v4437 = vadd.f32 %v4136, %v4370
    %v4438 = vadd.f32 %v4139, %v4372
    %v4439 = vadd.f32 %v4142, %v4374
    %v4440 = vadd.f32 %v4145, %v4376
    %v4441 = vadd.f32 %v4148, %v4378
    %v4442 = vadd.f32 %v4151, %v4380
    %v4443 = vadd.f32 %v4154, %v4382
    %v4444 = vadd.f32 %v4157, %v4384
    %v4445 = vadd.f32 %v4160, %v4386
    %v4446 = vadd.f32 %v4163, %v4388
    %v4447 = vadd.f32 %v4166, %v4390
    %v4448 = vadd.f32 %v4169, %v4392
    %v4449 = vadd.f32 %v4172, %v4394
    %v4450 = vadd.f32 %v4175, %v4396
    %v4451 = vadd.f32 %v4178, %v4398
    %v4452 = vadd.f32 %v4181, %v4400
    %v4453 = vadd.f32 %v4184, %v4402
    %v4454 = vadd.f32 %v4187, %v4404
    %v4455 = vadd.f32 %v4190, %v4406
    %v4456 = vadd.f32 %v4193, %v4408
    %v4481 = vrot.slane %v4217, 2
    %v4482 = vrot.slane %v4220, 2
    %v4483 = vsel %vm1182, %v4481, %v4482
    %v4484 = vrot.slane %v4223, 2
    %v4485 = vsel %vm1182, %v4482, %v4484
    %v4486 = vrot.slane %v4226, 2
    %v4487 = vsel %vm1182, %v4484, %v4486
    %v4488 = vrot.slane %v4229, 2
    %v4489 = vsel %vm1182, %v4486, %v4488
    %v4490 = vrot.slane %v4232, 2
    %v4491 = vsel %vm1182, %v4488, %v4490
    %v4492 = vrot.slane %v4235, 2
    %v4493 = vsel %vm1182, %v4490, %v4492
    %v4494 = vrot.slane %v4238, 2
    %v4495 = vsel %vm1182, %v4492, %v4494
    %v4496 = vrot.slane %v4241, 2
    %v4497 = vsel %vm1182, %v4494, %v4496
    %v4498 = vrot.slane %v4244, 2
    %v4499 = vsel %vm1182, %v4496, %v4498
    %v4500 = vrot.slane %v4247, 2
    %v4501 = vsel %vm1182, %v4498, %v4500
    %v4502 = vrot.slane %v4250, 2
    %v4503 = vsel %vm1182, %v4500, %v4502
    %v4504 = vrot.slane %v4253, 2
    %v4505 = vsel %vm1182, %v4502, %v4504
    %v4506 = vrot.slane %v4256, 2
    %v4507 = vsel %vm1182, %v4504, %v4506
    %v4508 = vrot.slane %v4259, 2
    %v4509 = vsel %vm1182, %v4506, %v4508
    %v4510 = vrot.slane %v4262, 2
    %v4511 = vsel %vm1182, %v4508, %v4510
    %v4512 = vrot.slane %v4265, 2
    %v4513 = vsel %vm1182, %v4510, %v4512
    %v4514 = vrot.slane %v4268, 2
    %v4515 = vsel %vm1182, %v4512, %v4514
    %v4516 = vrot.slane %v4271, 2
    %v4517 = vsel %vm1182, %v4514, %v4516
    %v4518 = vrot.slane %v4274, 2
    %v4519 = vsel %vm1182, %v4516, %v4518
    %v4520 = vrot.slane %v4277, 2
    %v4521 = vsel %vm1182, %v4518, %v4520
    %v4522 = vrot.slane %v4280, 2
    %v4523 = vsel %vm1182, %v4520, %v4522
    %v4524 = vrot.slane %v4283, 2
    %v4525 = vsel %vm1182, %v4522, %v4524
    %v4526 = vrot.slane %v4286, 2
    %v4527 = vsel %vm1182, %v4524, %v4526
    %v4552 = vadd.f32 %v4433, %v4483
    %v4553 = vadd.f32 %v4434, %v4485
    %v4554 = vadd.f32 %v4435, %v4487
    %v4555 = vadd.f32 %v4436, %v4489
    %v4556 = vadd.f32 %v4437, %v4491
    %v4557 = vadd.f32 %v4438, %v4493
    %v4558 = vadd.f32 %v4439, %v4495
    %v4559 = vadd.f32 %v4440, %v4497
    %v4560 = vadd.f32 %v4441, %v4499
    %v4561 = vadd.f32 %v4442, %v4501
    %v4562 = vadd.f32 %v4443, %v4503
    %v4563 = vadd.f32 %v4444, %v4505
    %v4564 = vadd.f32 %v4445, %v4507
    %v4565 = vadd.f32 %v4446, %v4509
    %v4566 = vadd.f32 %v4447, %v4511
    %v4567 = vadd.f32 %v4448, %v4513
    %v4568 = vadd.f32 %v4449, %v4515
    %v4569 = vadd.f32 %v4450, %v4517
    %v4570 = vadd.f32 %v4451, %v4519
    %v4571 = vadd.f32 %v4452, %v4521
    %v4572 = vadd.f32 %v4453, %v4523
    %v4573 = vadd.f32 %v4454, %v4525
    %v4574 = vadd.f32 %v4455, %v4527
    %v4575 = vadd.f32 %v4456, %v4526
    %v4576 = vrot.slane %v4217, 3
    %v4577 = vrot.slane %v4220, 3
    %v4578 = vsel %vm1656, %v4576, %v4577
    %v4579 = vrot.slane %v4223, 3
    %v4580 = vsel %vm1656, %v4577, %v4579
    %v4581 = vrot.slane %v4226, 3
    %v4582 = vsel %vm1656, %v4579, %v4581
    %v4583 = vrot.slane %v4229, 3
    %v4584 = vsel %vm1656, %v4581, %v4583
    %v4585 = vrot.slane %v4232, 3
    %v4586 = vsel %vm1656, %v4583, %v4585
    %v4587 = vrot.slane %v4235, 3
    %v4588 = vsel %vm1656, %v4585, %v4587
    %v4589 = vrot.slane %v4238, 3
    %v4590 = vsel %vm1656, %v4587, %v4589
    %v4591 = vrot.slane %v4241, 3
    %v4592 = vsel %vm1656, %v4589, %v4591
    %v4593 = vrot.slane %v4244, 3
    %v4594 = vsel %vm1656, %v4591, %v4593
    %v4595 = vrot.slane %v4247, 3
    %v4596 = vsel %vm1656, %v4593, %v4595
    %v4597 = vrot.slane %v4250, 3
    %v4598 = vsel %vm1656, %v4595, %v4597
    %v4599 = vrot.slane %v4253, 3
    %v4600 = vsel %vm1656, %v4597, %v4599
    %v4601 = vrot.slane %v4256, 3
    %v4602 = vsel %vm1656, %v4599, %v4601
    %v4603 = vrot.slane %v4259, 3
    %v4604 = vsel %vm1656, %v4601, %v4603
    %v4605 = vrot.slane %v4262, 3
    %v4606 = vsel %vm1656, %v4603, %v4605
    %v4607 = vrot.slane %v4265, 3
    %v4608 = vsel %vm1656, %v4605, %v4607
    %v4609 = vrot.slane %v4268, 3
    %v4610 = vsel %vm1656, %v4607, %v4609
    %v4611 = vrot.slane %v4271, 3
    %v4612 = vsel %vm1656, %v4609, %v4611
    %v4613 = vrot.slane %v4274, 3
    %v4614 = vsel %vm1656, %v4611, %v4613
    %v4615 = vrot.slane %v4277, 3
    %v4616 = vsel %vm1656, %v4613, %v4615
    %v4617 = vrot.slane %v4280, 3
    %v4618 = vsel %vm1656, %v4615, %v4617
    %v4619 = vrot.slane %v4283, 3
    %v4620 = vsel %vm1656, %v4617, %v4619
    %v4621 = vrot.slane %v4286, 3
    %v4622 = vsel %vm1656, %v4619, %v4621
    %4623 = vrot.lane.b32.xlu0 %v4578, 64
    %v4624 = vpop.permute.xlu0 %4623
    %4625 = vrot.lane.b32.xlu0 %v4580, 64
    %v4626 = vpop.permute.xlu0 %4625
    %4627 = vrot.lane.b32.xlu0 %v4582, 64
    %v4628 = vpop.permute.xlu0 %4627
    %4629 = vrot.lane.b32.xlu0 %v4584, 64
    %v4630 = vpop.permute.xlu0 %4629
    %4631 = vrot.lane.b32.xlu0 %v4586, 64
    %v4632 = vpop.permute.xlu0 %4631
    %4633 = vrot.lane.b32.xlu0 %v4588, 64
    %v4634 = vpop.permute.xlu0 %4633
    %4635 = vrot.lane.b32.xlu0 %v4590, 64
    %v4636 = vpop.permute.xlu0 %4635
    %4637 = vrot.lane.b32.xlu0 %v4592, 64
    %v4638 = vpop.permute.xlu0 %4637
    %4639 = vrot.lane.b32.xlu0 %v4594, 64
    %v4640 = vpop.permute.xlu0 %4639
    %4641 = vrot.lane.b32.xlu0 %v4596, 64
    %v4642 = vpop.permute.xlu0 %4641
    %4643 = vrot.lane.b32.xlu0 %v4598, 64
    %v4644 = vpop.permute.xlu0 %4643
    %4645 = vrot.lane.b32.xlu0 %v4600, 64
    %v4646 = vpop.permute.xlu0 %4645
    %4647 = vrot.lane.b32.xlu0 %v4602, 64
    %v4648 = vpop.permute.xlu0 %4647
    %4649 = vrot.lane.b32.xlu0 %v4604, 64
    %v4650 = vpop.permute.xlu0 %4649
    %4651 = vrot.lane.b32.xlu0 %v4606, 64
    %v4652 = vpop.permute.xlu0 %4651
    %4653 = vrot.lane.b32.xlu0 %v4608, 64
    %v4654 = vpop.permute.xlu0 %4653
    %4655 = vrot.lane.b32.xlu0 %v4610, 64
    %v4656 = vpop.permute.xlu0 %4655
    %4657 = vrot.lane.b32.xlu0 %v4612, 64
    %v4658 = vpop.permute.xlu0 %4657
    %4659 = vrot.lane.b32.xlu0 %v4614, 64
    %v4660 = vpop.permute.xlu0 %4659
    %4661 = vrot.lane.b32.xlu0 %v4616, 64
    %v4662 = vpop.permute.xlu0 %4661
    %4663 = vrot.lane.b32.xlu0 %v4618, 64
    %v4664 = vpop.permute.xlu0 %4663
    %4665 = vrot.lane.b32.xlu0 %v4620, 64
    %v4666 = vpop.permute.xlu0 %4665
    %4667 = vrot.lane.b32.xlu0 %v4622, 64
    %v4668 = vpop.permute.xlu0 %4667
    %4669 = vrot.lane.b32.xlu0 %v4621, 64
    %v4670 = vpop.permute.xlu0 %4669
    %v4695 = vadd.f32 %v4552, %v4624
    %v4696 = vadd.f32 %v4553, %v4626
    %v4697 = vadd.f32 %v4554, %v4628
    %v4698 = vadd.f32 %v4555, %v4630
    %v4699 = vadd.f32 %v4556, %v4632
    %v4700 = vadd.f32 %v4557, %v4634
    %v4701 = vadd.f32 %v4558, %v4636
    %v4702 = vadd.f32 %v4559, %v4638
    %v4703 = vadd.f32 %v4560, %v4640
    %v4704 = vadd.f32 %v4561, %v4642
    %v4705 = vadd.f32 %v4562, %v4644
    %v4706 = vadd.f32 %v4563, %v4646
    %v4707 = vadd.f32 %v4564, %v4648
    %v4708 = vadd.f32 %v4565, %v4650
    %v4709 = vadd.f32 %v4566, %v4652
    %v4710 = vadd.f32 %v4567, %v4654
    %v4711 = vadd.f32 %v4568, %v4656
    %v4712 = vadd.f32 %v4569, %v4658
    %v4713 = vadd.f32 %v4570, %v4660
    %v4714 = vadd.f32 %v4571, %v4662
    %v4715 = vadd.f32 %v4572, %v4664
    %v4716 = vadd.f32 %v4573, %v4666
    %v4717 = vadd.f32 %v4574, %v4668
    %v4718 = vadd.f32 %v4575, %v4670
    %vm4719 = vcmask 523264
    %v4720 = vsel %vm4719, %v4695, 0.0
    %v4721 = vsel %vm4719, %v4696, 0.0
    %v4722 = vadd.f32 %v4720, %v4721
    %v4723 = vsel %vm4719, %v4697, 0.0
    %v4724 = vadd.f32 %v4722, %v4723
    %v4725 = vsel %vm4719, %v4698, 0.0
    %v4726 = vadd.f32 %v4724, %v4725
    %v4727 = vsel %vm4719, %v4699, 0.0
    %v4728 = vadd.f32 %v4726, %v4727
    %v4729 = vsel %vm4719, %v4700, 0.0
    %v4730 = vadd.f32 %v4728, %v4729
    %v4731 = vsel %vm4719, %v4701, 0.0
    %v4732 = vadd.f32 %v4730, %v4731
    %v4733 = vsel %vm4719, %v4702, 0.0
    %v4734 = vadd.f32 %v4732, %v4733
    %v4735 = vsel %vm4719, %v4703, 0.0
    %v4736 = vadd.f32 %v4734, %v4735
    %v4737 = vsel %vm4719, %v4704, 0.0
    %v4738 = vadd.f32 %v4736, %v4737
    %v4739 = vsel %vm4719, %v4705, 0.0
    %v4740 = vadd.f32 %v4738, %v4739
    %v4741 = vsel %vm4719, %v4706, 0.0
    %v4742 = vadd.f32 %v4740, %v4741
    %v4743 = vsel %vm4719, %v4707, 0.0
    %v4744 = vadd.f32 %v4742, %v4743
    %v4745 = vsel %vm4719, %v4708, 0.0
    %v4746 = vadd.f32 %v4744, %v4745
    %v4747 = vsel %vm4719, %v4709, 0.0
    %v4748 = vadd.f32 %v4746, %v4747
    %v4749 = vsel %vm4719, %v4710, 0.0
    %v4750 = vadd.f32 %v4748, %v4749
    %v4751 = vsel %vm4719, %v4711, 0.0
    %v4752 = vadd.f32 %v4750, %v4751
    %v4753 = vsel %vm4719, %v4712, 0.0
    %v4754 = vadd.f32 %v4752, %v4753
    %v4755 = vsel %vm4719, %v4713, 0.0
    %v4756 = vadd.f32 %v4754, %v4755
    %v4757 = vsel %vm4719, %v4714, 0.0
    %v4758 = vadd.f32 %v4756, %v4757
    %v4759 = vsel %vm4719, %v4715, 0.0
    %v4760 = vadd.f32 %v4758, %v4759
    %v4761 = vsel %vm4719, %v4716, 0.0
    %v4762 = vadd.f32 %v4760, %v4761
    %v4763 = vsel %vm4719, %v4717, 0.0
    %v4764 = vadd.f32 %v4762, %v4763
    %vm4765 = vcmask 520192
    %v4766 = vsel %vm4765, %v4718, 0.0
    %v4767 = vadd.f32 %v4764, %v4766
    %v4768 = vrot.slane %v4767, 4
    %v4769 = vadd.f32 %v4767, %v4768
    %v4770 = vrot.slane %v4769, 2
    %v4771 = vadd.f32 %v4769, %v4770
    %v4772 = vrot.slane %v4771, 1
    %v4773 = vadd.f32 %v4771, %v4772
    %v4774 = vmul.f32 %v4773, 0.0061728396
    %v4775 = vmul.f32 %v4695, %v4695
    %v4776 = vmul.f32 %v4696, %v4696
    %v4777 = vmul.f32 %v4697, %v4697
    %v4778 = vmul.f32 %v4698, %v4698
    %v4779 = vmul.f32 %v4699, %v4699
    %v4780 = vmul.f32 %v4700, %v4700
    %v4781 = vmul.f32 %v4701, %v4701
    %v4782 = vmul.f32 %v4702, %v4702
    %v4783 = vmul.f32 %v4703, %v4703
    %v4784 = vmul.f32 %v4704, %v4704
    %v4785 = vmul.f32 %v4705, %v4705
    %v4786 = vmul.f32 %v4706, %v4706
    %v4787 = vmul.f32 %v4707, %v4707
    %v4788 = vmul.f32 %v4708, %v4708
    %v4789 = vmul.f32 %v4709, %v4709
    %v4790 = vmul.f32 %v4710, %v4710
    %v4791 = vmul.f32 %v4711, %v4711
    %v4792 = vmul.f32 %v4712, %v4712
    %v4793 = vmul.f32 %v4713, %v4713
    %v4794 = vmul.f32 %v4714, %v4714
    %v4795 = vmul.f32 %v4715, %v4715
    %v4796 = vmul.f32 %v4716, %v4716
    %v4797 = vmul.f32 %v4717, %v4717
    %v4798 = vmul.f32 %v4718, %v4718
    %v4799 = vsel %vm4719, %v4775, 0.0
    %v4800 = vsel %vm4719, %v4776, 0.0
    %v4801 = vadd.f32 %v4799, %v4800
    %v4802 = vsel %vm4719, %v4777, 0.0
    %v4803 = vadd.f32 %v4801, %v4802
    %v4804 = vsel %vm4719, %v4778, 0.0
    %v4805 = vadd.f32 %v4803, %v4804
    %v4806 = vsel %vm4719, %v4779, 0.0
    %v4807 = vadd.f32 %v4805, %v4806
    %v4808 = vsel %vm4719, %v4780, 0.0
    %v4809 = vadd.f32 %v4807, %v4808
    %v4810 = vsel %vm4719, %v4781, 0.0
    %v4811 = vadd.f32 %v4809, %v4810
    %v4812 = vsel %vm4719, %v4782, 0.0
    %v4813 = vadd.f32 %v4811, %v4812
    %v4814 = vsel %vm4719, %v4783, 0.0
    %v4815 = vadd.f32 %v4813, %v4814
    %v4816 = vsel %vm4719, %v4784, 0.0
    %v4817 = vadd.f32 %v4815, %v4816
    %v4818 = vsel %vm4719, %v4785, 0.0
    %v4819 = vadd.f32 %v4817, %v4818
    %v4820 = vsel %vm4719, %v4786, 0.0
    %v4821 = vadd.f32 %v4819, %v4820
    %v4822 = vsel %vm4719, %v4787, 0.0
    %v4823 = vadd.f32 %v4821, %v4822
    %v4824 = vsel %vm4719, %v4788, 0.0
    %v4825 = vadd.f32 %v4823, %v4824
    %v4826 = vsel %vm4719, %v4789, 0.0
    %v4827 = vadd.f32 %v4825, %v4826
    %v4828 = vsel %vm4719, %v4790, 0.0
    %v4829 = vadd.f32 %v4827, %v4828
    %v4830 = vsel %vm4719, %v4791, 0.0
    %v4831 = vadd.f32 %v4829, %v4830
    %v4832 = vsel %vm4719, %v4792, 0.0
    %v4833 = vadd.f32 %v4831, %v4832
    %v4834 = vsel %vm4719, %v4793, 0.0
    %v4835 = vadd.f32 %v4833, %v4834
    %v4836 = vsel %vm4719, %v4794, 0.0
    %v4837 = vadd.f32 %v4835, %v4836
    %v4838 = vsel %vm4719, %v4795, 0.0
    %v4839 = vadd.f32 %v4837, %v4838
    %v4840 = vsel %vm4719, %v4796, 0.0
    %v4841 = vadd.f32 %v4839, %v4840
    %v4842 = vsel %vm4719, %v4797, 0.0
    %v4843 = vadd.f32 %v4841, %v4842
    %v4844 = vsel %vm4765, %v4798, 0.0
    %v4845 = vadd.f32 %v4843, %v4844
    %v4846 = vrot.slane %v4845, 4
    %v4847 = vadd.f32 %v4845, %v4846
    %v4848 = vrot.slane %v4847, 2
    %v4849 = vadd.f32 %v4847, %v4848
    %v4850 = vrot.slane %v4849, 1
    %v4851 = vadd.f32 %v4849, %v4850
    %v4852 = vmul.f32 %v4851, 0.0061728396
    %v4853 = vmul.f32 %v4774, %v4774
    %v4854 = vsub.f32 %v4852, %v4853
    %v4855 = vsub.f32 %v4695, %v4774
    %v4856 = vsub.f32 %v4696, %v4774
    %v4857 = vsub.f32 %v4697, %v4774
    %v4858 = vsub.f32 %v4698, %v4774
    %v4859 = vsub.f32 %v4699, %v4774
    %v4860 = vsub.f32 %v4700, %v4774
    %v4861 = vsub.f32 %v4701, %v4774
    %v4862 = vsub.f32 %v4702, %v4774
    %v4863 = vsub.f32 %v4703, %v4774
    %v4864 = vsub.f32 %v4704, %v4774
    %v4865 = vsub.f32 %v4705, %v4774
    %v4866 = vsub.f32 %v4706, %v4774
    %v4867 = vsub.f32 %v4707, %v4774
    %v4868 = vsub.f32 %v4708, %v4774
    %v4869 = vsub.f32 %v4709, %v4774
    %v4870 = vsub.f32 %v4710, %v4774
    %v4871 = vsub.f32 %v4711, %v4774
    %v4872 = vsub.f32 %v4712, %v4774
    %v4873 = vsub.f32 %v4713, %v4774
    %v4874 = vsub.f32 %v4714, %v4774
    %v4875 = vsub.f32 %v4715, %v4774
    %v4876 = vsub.f32 %v4716, %v4774
    %v4877 = vsub.f32 %v4717, %v4774
    %v4878 = vsub.f32 %v4718, %v4774
    %v4879 = vadd.f32 %v4854, 1e-05
    %v4880 = vrsqrt.pop %v4879
    %v4881 = vmul.f32 %v4880, %v4879
    %v4882 = vmul.f32 %v4881, %v4880
    %v4883 = vmul.f32 0.5, %v4882
    %v4884 = vsub.f32 1.5, %v4883
    %v4885 = vmul.f32 %v4880, %v4884
    %vm4886 = vweird.f32 %v4879
    %vm4887 = vweird.f32 %v4880
    %vm4888 = vmor %vm4886, %vm4887
    %v4889 = vsel %vm4888, %v4880, %v4885
    %v4890 = vmul.f32 %v4855, %v4889
    %v4891 = vmul.f32 %v4856, %v4889
    %v4892 = vmul.f32 %v4857, %v4889
    %v4893 = vmul.f32 %v4858, %v4889
    %v4894 = vmul.f32 %v4859, %v4889
    %v4895 = vmul.f32 %v4860, %v4889
    %v4896 = vmul.f32 %v4861, %v4889
    %v4897 = vmul.f32 %v4862, %v4889
    %v4898 = vmul.f32 %v4863, %v4889
    %v4899 = vmul.f32 %v4864, %v4889
    %v4900 = vmul.f32 %v4865, %v4889
    %v4901 = vmul.f32 %v4866, %v4889
    %v4902 = vmul.f32 %v4867, %v4889
    %v4903 = vmul.f32 %v4868, %v4889
    %v4904 = vmul.f32 %v4869, %v4889
    %v4905 = vmul.f32 %v4870, %v4889
    %v4906 = vmul.f32 %v4871, %v4889
    %v4907 = vmul.f32 %v4872, %v4889
    %v4908 = vmul.f32 %v4873, %v4889
    %v4909 = vmul.f32 %v4874, %v4889
    %v4910 = vmul.f32 %v4875, %v4889
    %v4911 = vmul.f32 %v4876, %v4889
    %v4912 = vmul.f32 %v4877, %v4889
    %v4913 = vmul.f32 %v4878, %v4889
    %v4915 = vperm.slane %v4288, 0
    %v4917 = vmul.f32 %v4890, %v4915
    %v4918 = vmul.f32 %v4891, %v4915
    %v4919 = vmul.f32 %v4892, %v4915
    %v4920 = vmul.f32 %v4893, %v4915
    %v4921 = vmul.f32 %v4894, %v4915
    %v4922 = vmul.f32 %v4895, %v4915
    %v4923 = vmul.f32 %v4896, %v4915
    %v4924 = vmul.f32 %v4897, %v4915
    %v4925 = vmul.f32 %v4898, %v4915
    %v4926 = vmul.f32 %v4899, %v4915
    %v4927 = vmul.f32 %v4900, %v4915
    %v4928 = vmul.f32 %v4901, %v4915
    %v4929 = vmul.f32 %v4902, %v4915
    %v4930 = vmul.f32 %v4903, %v4915
    %v4931 = vmul.f32 %v4904, %v4915
    %v4932 = vmul.f32 %v4905, %v4915
    %v4933 = vmul.f32 %v4906, %v4915
    %v4934 = vmul.f32 %v4907, %v4915
    %v4935 = vmul.f32 %v4908, %v4915
    %v4936 = vmul.f32 %v4909, %v4915
    %v4937 = vmul.f32 %v4910, %v4915
    %v4938 = vmul.f32 %v4911, %v4915
    %v4939 = vmul.f32 %v4912, %v4915
    %v4940 = vmul.f32 %v4913, %v4915
    %v4942 = vperm.slane %v4289, 0
    %v4944 = vadd.f32 %v4917, %v4942
    %v4945 = vadd.f32 %v4918, %v4942
    %v4946 = vadd.f32 %v4919, %v4942
    %v4947 = vadd.f32 %v4920, %v4942
    %v4948 = vadd.f32 %v4921, %v4942
    %v4949 = vadd.f32 %v4922, %v4942
    %v4950 = vadd.f32 %v4923, %v4942
    %v4951 = vadd.f32 %v4924, %v4942
    %v4952 = vadd.f32 %v4925, %v4942
    %v4953 = vadd.f32 %v4926, %v4942
    %v4954 = vadd.f32 %v4927, %v4942
    %v4955 = vadd.f32 %v4928, %v4942
    %v4956 = vadd.f32 %v4929, %v4942
    %v4957 = vadd.f32 %v4930, %v4942
    %v4958 = vadd.f32 %v4931, %v4942
    %v4959 = vadd.f32 %v4932, %v4942
    %v4960 = vadd.f32 %v4933, %v4942
    %v4961 = vadd.f32 %v4934, %v4942
    %v4962 = vadd.f32 %v4935, %v4942
    %v4963 = vadd.f32 %v4936, %v4942
    %v4964 = vadd.f32 %v4937, %v4942
    %v4965 = vadd.f32 %v4938, %v4942
    %v4966 = vadd.f32 %v4939, %v4942
    %v4967 = vadd.f32 %v4940, %v4942
    %v4968 = vmax.f32 %v4944, 0.0
    %v4969 = vmax.f32 %v4945, 0.0
    %v4970 = vmax.f32 %v4946, 0.0
    %v4971 = vmax.f32 %v4947, 0.0
    %v4972 = vmax.f32 %v4948, 0.0
    %v4973 = vmax.f32 %v4949, 0.0
    %v4974 = vmax.f32 %v4950, 0.0
    %v4975 = vmax.f32 %v4951, 0.0
    %v4976 = vmax.f32 %v4952, 0.0
    %v4977 = vmax.f32 %v4953, 0.0
    %v4978 = vmax.f32 %v4954, 0.0
    %v4979 = vmax.f32 %v4955, 0.0
    %v4980 = vmax.f32 %v4956, 0.0
    %v4981 = vmax.f32 %v4957, 0.0
    %v4982 = vmax.f32 %v4958, 0.0
    %v4983 = vmax.f32 %v4959, 0.0
    %v4984 = vmax.f32 %v4960, 0.0
    %v4985 = vmax.f32 %v4961, 0.0
    %v4986 = vmax.f32 %v4962, 0.0
    %v4987 = vmax.f32 %v4963, 0.0
    %v4988 = vmax.f32 %v4964, 0.0
    %v4989 = vmax.f32 %v4965, 0.0
    %v4990 = vmax.f32 %v4966, 0.0
    %v4991 = vmax.f32 %v4967, 0.0
    %v5012 = vrot.slane %v4968, 1
    %v5013 = vrot.slane %v4969, 1
    %v5014 = vsel %vm706, %v5012, %v5013
    %v5015 = vrot.slane %v4970, 1
    %v5016 = vrot.slane %v4971, 1
    %v5017 = vsel %vm706, %v5015, %v5016
    %v5018 = vrot.slane %v4972, 1
    %v5019 = vsel %vm706, %v5016, %v5018
    %v5020 = vrot.slane %v4973, 1
    %v5021 = vrot.slane %v4974, 1
    %v5022 = vsel %vm706, %v5020, %v5021
    %v5023 = vrot.slane %v4975, 1
    %v5024 = vrot.slane %v4976, 1
    %v5025 = vsel %vm706, %v5023, %v5024
    %v5026 = vrot.slane %v4977, 1
    %v5027 = vsel %vm706, %v5024, %v5026
    %v5028 = vrot.slane %v4980, 1
    %v5029 = vrot.slane %v4981, 1
    %v5030 = vsel %vm706, %v5028, %v5029
    %v5031 = vrot.slane %v4982, 1
    %v5032 = vsel %vm706, %v5029, %v5031
    %v5033 = vrot.slane %v4983, 1
    %v5034 = vrot.slane %v4984, 1
    %v5035 = vsel %vm706, %v5033, %v5034
    %v5036 = vrot.slane %v4985, 1
    %v5037 = vrot.slane %v4986, 1
    %v5038 = vsel %vm706, %v5036, %v5037
    %v5039 = vrot.slane %v4987, 1
    %v5040 = vsel %vm706, %v5037, %v5039
    %v5041 = vrot.slane %v4988, 1
    %v5042 = vrot.slane %v4989, 1
    %v5043 = vsel %vm706, %v5041, %v5042
    %v5056 = vmax.f32 %v4968, %v5014
    %v5057 = vmax.f32 %v4970, %v5017
    %v5058 = vmax.f32 %v4971, %v5019
    %v5059 = vmax.f32 %v4973, %v5022
    %v5060 = vmax.f32 %v4975, %v5025
    %v5061 = vmax.f32 %v4976, %v5027
    %v5062 = vmax.f32 %v4980, %v5030
    %v5063 = vmax.f32 %v4981, %v5032
    %v5064 = vmax.f32 %v4983, %v5035
    %v5065 = vmax.f32 %v4985, %v5038
    %v5066 = vmax.f32 %v4986, %v5040
    %v5067 = vmax.f32 %v4988, %v5043
    %v5072 = vsel %vm706, %v5013, %v5015
    %v5073 = vsel %vm706, %v5018, %v5020
    %v5074 = vsel %vm706, %v5021, %v5023
    %v5075 = vrot.slane %v4978, 1
    %v5076 = vsel %vm706, %v5026, %v5075
    %v5077 = vrot.slane %v4979, 1
    %v5078 = vsel %vm706, %v5075, %v5077
    %v5079 = vsel %vm706, %v5031, %v5033
    %v5080 = vsel %vm706, %v5034, %v5036
    %v5081 = vsel %vm706, %v5039, %v5041
    %v5082 = vrot.slane %v4990, 1
    %v5083 = vsel %vm706, %v5042, %v5082
    %v5084 = vrot.slane %v4991, 1
    %v5085 = vsel %vm706, %v5082, %v5084
    %v5096 = vmax.f32 %v4969, %v5072
    %v5097 = vmax.f32 %v4972, %v5073
    %v5098 = vmax.f32 %v4974, %v5074
    %v5099 = vmax.f32 %v4977, %v5076
    %v5100 = vmax.f32 %v4978, %v5078
    %v5101 = vmax.f32 %v4982, %v5079
    %v5102 = vmax.f32 %v4984, %v5080
    %v5103 = vmax.f32 %v4987, %v5081
    %v5104 = vmax.f32 %v4989, %v5083
    %v5105 = vmax.f32 %v4990, %v5085
    %v5126 = vrot.slane %v5096, 2
    %v5127 = vrot.slane %v5057, 2
    %v5128 = vsel %vm1182, %v5126, %v5127
    %v5129 = vrot.slane %v5058, 2
    %v5130 = vrot.slane %v5097, 2
    %v5131 = vsel %vm1182, %v5129, %v5130
    %v5132 = vrot.slane %v5059, 2
    %v5133 = vsel %vm1182, %v5130, %v5132
    %v5134 = vrot.slane %v5098, 2
    %v5135 = vrot.slane %v5060, 2
    %v5136 = vsel %vm1182, %v5134, %v5135
    %v5137 = vrot.slane %v5061, 2
    %v5138 = vrot.slane %v5099, 2
    %v5139 = vsel %vm1182, %v5137, %v5138
    %v5140 = vrot.slane %v5100, 2
    %v5141 = vsel %vm1182, %v5138, %v5140
    %v5142 = vrot.slane %v5063, 2
    %v5143 = vrot.slane %v5101, 2
    %v5144 = vsel %vm1182, %v5142, %v5143
    %v5145 = vrot.slane %v5064, 2
    %v5146 = vsel %vm1182, %v5143, %v5145
    %v5147 = vrot.slane %v5102, 2
    %v5148 = vrot.slane %v5065, 2
    %v5149 = vsel %vm1182, %v5147, %v5148
    %v5150 = vrot.slane %v5066, 2
    %v5151 = vrot.slane %v5103, 2
    %v5152 = vsel %vm1182, %v5150, %v5151
    %v5153 = vrot.slane %v5067, 2
    %v5154 = vsel %vm1182, %v5151, %v5153
    %v5155 = vrot.slane %v5104, 2
    %v5156 = vrot.slane %v5105, 2
    %v5157 = vsel %vm1182, %v5155, %v5156
    %v5170 = vmax.f32 %v5056, %v5128
    %v5171 = vmax.f32 %v5057, %v5131
    %v5172 = vmax.f32 %v5058, %v5133
    %v5173 = vmax.f32 %v5059, %v5136
    %v5174 = vmax.f32 %v5060, %v5139
    %v5175 = vmax.f32 %v5061, %v5141
    %v5176 = vmax.f32 %v5062, %v5144
    %v5177 = vmax.f32 %v5063, %v5146
    %v5178 = vmax.f32 %v5064, %v5149
    %v5179 = vmax.f32 %v5065, %v5152
    %v5180 = vmax.f32 %v5066, %v5154
    %v5181 = vmax.f32 %v5067, %v5157
    %vm5182 = vcmask 516096
    %5183 = vst.msk [vmem:[#allocation3] sm:$0x1] %vm5182, %v5170
    %5185 = vst.sshfl [vmem:[#allocation1] sm:$0xff pattern:$0x73625140] %v5170
    %s5186 = scalar_lea.vmem [#allocation1], 1
    %v5187 = vld [vmem:[%s5186] ss:$4 sm:$0xff]
    %5188 = vrot.lane.b32.xlu0 %v5187, 64
    %v5189 = vpop.permute.xlu0 %5188
    %vm5191 = vcmask 1040896
    %5192 = vst.msk [vmem:[#allocation3] sm:$0x1] %vm5191, %v5189
    %5193 = vst.sshfl [vmem:[#allocation1] sm:$0xff pattern:$0x73625140] %v5170
    %s5194 = scalar_lea.vmem [#allocation1], 2
    %v5195 = vld [vmem:[%s5194] ss:$4 sm:$0xff]
    %5197 = vst.msk [vmem:[#allocation3 + $0x2] sm:$0x1] %vm5182, %v5195
    %5198 = vst.sshfl [vmem:[#allocation1] sm:$0xff pattern:$0x73625140] %v5170
    %s5199 = scalar_lea.vmem [#allocation1], 3
    %v5200 = vld [vmem:[%s5199] ss:$4 sm:$0xff]
    %5201 = vrot.lane.b32.xlu0 %v5200, 64
    %v5202 = vpop.permute.xlu0 %5201
    %5204 = vst.msk [vmem:[#allocation3 + $0x2] sm:$0x1] %vm5191, %v5202
    %5206 = vst.sshfl [vmem:[#allocation1] sm:$0xff pattern:$0x73625140] %v5171
    %s5207 = scalar_lea.vmem [#allocation1], 2
    %v5208 = vld [vmem:[%s5207] ss:$4 sm:$0xff]
    %5210 = vst.msk [vmem:[#allocation3 + $0x4] sm:$0x1] %vm5182, %v5208
    %5211 = vst.sshfl [vmem:[#allocation1] sm:$0xff pattern:$0x73625140] %v5171
    %s5212 = scalar_lea.vmem [#allocation1], 3
    %v5213 = vld [vmem:[%s5212] ss:$4 sm:$0xff]
    %5214 = vrot.lane.b32.xlu0 %v5213, 64
    %v5215 = vpop.permute.xlu0 %5214
    %5217 = vst.msk [vmem:[#allocation3 + $0x4] sm:$0x1] %vm5191, %v5215
    %5218 = vst.msk [vmem:[#allocation3 + $0x6] sm:$0x1] %vm5182, %v5172
    %5220 = vst.sshfl [vmem:[#allocation1] sm:$0xff pattern:$0x73625140] %v5172
    %s5221 = scalar_lea.vmem [#allocation1], 1
    %v5222 = vld [vmem:[%s5221] ss:$4 sm:$0xff]
    %5223 = vrot.lane.b32.xlu0 %v5222, 64
    %v5224 = vpop.permute.xlu0 %5223
    %5226 = vst.msk [vmem:[#allocation3 + $0x6] sm:$0x1] %vm5191, %v5224
    %5227 = vst.msk [vmem:[#allocation3 + $0x8] sm:$0x1] %vm5182, %v5173
    %5229 = vst.sshfl [vmem:[#allocation1] sm:$0xff pattern:$0x73625140] %v5173
    %s5230 = scalar_lea.vmem [#allocation1], 1
    %v5231 = vld [vmem:[%s5230] ss:$4 sm:$0xff]
    %5232 = vrot.lane.b32.xlu0 %v5231, 64
    %v5233 = vpop.permute.xlu0 %5232
    %5235 = vst.msk [vmem:[#allocation3 + $0x8] sm:$0x1] %vm5191, %v5233
    %5236 = vst.sshfl [vmem:[#allocation1] sm:$0xff pattern:$0x73625140] %v5173
    %s5237 = scalar_lea.vmem [#allocation1], 2
    %v5238 = vld [vmem:[%s5237] ss:$4 sm:$0xff]
    %5240 = vst.msk [vmem:[#allocation3 + $0xa] sm:$0x1] %vm5182, %v5238
    %5241 = vst.sshfl [vmem:[#allocation1] sm:$0xff pattern:$0x73625140] %v5173
    %s5242 = scalar_lea.vmem [#allocation1], 3
    %v5243 = vld [vmem:[%s5242] ss:$4 sm:$0xff]
    %5244 = vrot.lane.b32.xlu0 %v5243, 64
    %v5245 = vpop.permute.xlu0 %5244
    %5247 = vst.msk [vmem:[#allocation3 + $0xa] sm:$0x1] %vm5191, %v5245
    %5249 = vst.sshfl [vmem:[#allocation1] sm:$0xff pattern:$0x73625140] %v5174
    %s5250 = scalar_lea.vmem [#allocation1], 2
    %v5251 = vld [vmem:[%s5250] ss:$4 sm:$0xff]
    %5253 = vst.msk [vmem:[#allocation3 + $0xc] sm:$0x1] %vm5182, %v5251
    %5254 = vst.sshfl [vmem:[#allocation1] sm:$0xff pattern:$0x73625140] %v5174
    %s5255 = scalar_lea.vmem [#allocation1], 3
    %v5256 = vld [vmem:[%s5255] ss:$4 sm:$0xff]
    %5257 = vrot.lane.b32.xlu0 %v5256, 64
    %v5258 = vpop.permute.xlu0 %5257
    %5260 = vst.msk [vmem:[#allocation3 + $0xc] sm:$0x1] %vm5191, %v5258
    %5261 = vst.msk [vmem:[#allocation3 + $0xe] sm:$0x1] %vm5182, %v5175
    %5263 = vst.sshfl [vmem:[#allocation1] sm:$0xff pattern:$0x73625140] %v5175
    %s5264 = scalar_lea.vmem [#allocation1], 1
    %v5265 = vld [vmem:[%s5264] ss:$4 sm:$0xff]
    %5266 = vrot.lane.b32.xlu0 %v5265, 64
    %v5267 = vpop.permute.xlu0 %5266
    %5269 = vst.msk [vmem:[#allocation3 + $0xe] sm:$0x1] %vm5191, %v5267
    %5271 = vst.sshfl [vmem:[#allocation1] sm:$0xff pattern:$0x73625140] %v5176
    %s5272 = scalar_lea.vmem [#allocation1], 2
    %v5273 = vld [vmem:[%s5272] ss:$4 sm:$0xff]
    %5275 = vst.msk [vmem:[#allocation3 + $0x1] sm:$0x1] %vm5182, %v5273
    %5276 = vst.sshfl [vmem:[#allocation1] sm:$0xff pattern:$0x73625140] %v5176
    %s5277 = scalar_lea.vmem [#allocation1], 3
    %v5278 = vld [vmem:[%s5277] ss:$4 sm:$0xff]
    %5279 = vrot.lane.b32.xlu0 %v5278, 64
    %v5280 = vpop.permute.xlu0 %5279
    %5282 = vst.msk [vmem:[#allocation3 + $0x1] sm:$0x1] %vm5191, %v5280
    %5283 = vst.msk [vmem:[#allocation3 + $0x3] sm:$0x1] %vm5182, %v5177
    %5285 = vst.sshfl [vmem:[#allocation1] sm:$0xff pattern:$0x73625140] %v5177
    %s5286 = scalar_lea.vmem [#allocation1], 1
    %v5287 = vld [vmem:[%s5286] ss:$4 sm:$0xff]
    %5288 = vrot.lane.b32.xlu0 %v5287, 64
    %v5289 = vpop.permute.xlu0 %5288
    %5291 = vst.msk [vmem:[#allocation3 + $0x3] sm:$0x1] %vm5191, %v5289
    %5292 = vst.msk [vmem:[#allocation3 + $0x5] sm:$0x1] %vm5182, %v5178
    %5294 = vst.sshfl [vmem:[#allocation1] sm:$0xff pattern:$0x73625140] %v5178
    %s5295 = scalar_lea.vmem [#allocation1], 1
    %v5296 = vld [vmem:[%s5295] ss:$4 sm:$0xff]
    %5297 = vrot.lane.b32.xlu0 %v5296, 64
    %v5298 = vpop.permute.xlu0 %5297
    %5300 = vst.msk [vmem:[#allocation3 + $0x5] sm:$0x1] %vm5191, %v5298
    %5301 = vst.sshfl [vmem:[#allocation1] sm:$0xff pattern:$0x73625140] %v5178
    %s5302 = scalar_lea.vmem [#allocation1], 2
    %v5303 = vld [vmem:[%s5302] ss:$4 sm:$0xff]
    %5305 = vst.msk [vmem:[#allocation3 + $0x7] sm:$0x1] %vm5182, %v5303
    %5306 = vst.sshfl [vmem:[#allocation1] sm:$0xff pattern:$0x73625140] %v5178
    %s5307 = scalar_lea.vmem [#allocation1], 3
    %v5308 = vld [vmem:[%s5307] ss:$4 sm:$0xff]
    %5309 = vrot.lane.b32.xlu0 %v5308, 64
    %v5310 = vpop.permute.xlu0 %5309
    %5312 = vst.msk [vmem:[#allocation3 + $0x7] sm:$0x1] %vm5191, %v5310
    %5314 = vst.sshfl [vmem:[#allocation1] sm:$0xff pattern:$0x73625140] %v5179
    %s5315 = scalar_lea.vmem [#allocation1], 2
    %v5316 = vld [vmem:[%s5315] ss:$4 sm:$0xff]
    %5318 = vst.msk [vmem:[#allocation3 + $0x9] sm:$0x1] %vm5182, %v5316
    %5319 = vst.sshfl [vmem:[#allocation1] sm:$0xff pattern:$0x73625140] %v5179
    %s5320 = scalar_lea.vmem [#allocation1], 3
    %v5321 = vld [vmem:[%s5320] ss:$4 sm:$0xff]
    %5322 = vrot.lane.b32.xlu0 %v5321, 64
    %v5323 = vpop.permute.xlu0 %5322
    %5325 = vst.msk [vmem:[#allocation3 + $0x9] sm:$0x1] %vm5191, %v5323
    %5326 = vst.msk [vmem:[#allocation3 + $0xb] sm:$0x1] %vm5182, %v5180
    %5328 = vst.sshfl [vmem:[#allocation1] sm:$0xff pattern:$0x73625140] %v5180
    %s5329 = scalar_lea.vmem [#allocation1], 1
    %v5330 = vld [vmem:[%s5329] ss:$4 sm:$0xff]
    %5331 = vrot.lane.b32.xlu0 %v5330, 64
    %v5332 = vpop.permute.xlu0 %5331
    %5334 = vst.msk [vmem:[#allocation3 + $0xb] sm:$0x1] %vm5191, %v5332
    %5335 = vst.msk [vmem:[#allocation3 + $0xd] sm:$0x1] %vm5182, %v5181
    %5337 = vst.sshfl [vmem:[#allocation1] sm:$0xff pattern:$0x73625140] %v5181
    %s5338 = scalar_lea.vmem [#allocation1], 1
    %v5339 = vld [vmem:[%s5338] ss:$4 sm:$0xff]
    %5340 = vrot.lane.b32.xlu0 %v5339, 64
    %v5341 = vpop.permute.xlu0 %5340
    %5343 = vst.msk [vmem:[#allocation3 + $0xd] sm:$0x1] %vm5191, %v5341
    %5344 = vst.sshfl [vmem:[#allocation1] sm:$0xff pattern:$0x73625140] %v5181
    %s5345 = scalar_lea.vmem [#allocation1], 2
    %v5346 = vld [vmem:[%s5345] ss:$4 sm:$0xff]
    %5348 = vst.msk [vmem:[#allocation3 + $0xf] sm:$0x1] %vm5182, %v5346
    %5349 = vst.sshfl [vmem:[#allocation1] sm:$0xff pattern:$0x73625140] %v5181
    %s5350 = scalar_lea.vmem [#allocation1], 3
    %v5351 = vld [vmem:[%s5350] ss:$4 sm:$0xff]
    %5352 = vrot.lane.b32.xlu0 %v5351, 64
    %v5353 = vpop.permute.xlu0 %5352
    %5355 = vst.msk [vmem:[#allocation3 + $0xf] sm:$0x1] %vm5191, %v5353
    %v5356 = vld [vmem:[#allocation3] sm:$0xff]
    %v5357 = vld [vmem:[#allocation3 + $0x8] sm:$0xff]
    %v5358 = vld [vmem:[%s7] sm:$0xff]
    %v5359 = vld [vmem:[%s7 + $0x8] sm:$0xff]
    %v5360 = vld [vmem:[%s7 + $0x10] sm:$0xff]
    %v5361 = vld [vmem:[%s7 + $0x18] sm:$0xff]
    %v5362 = vld [vmem:[%s7 + $0x20] sm:$0xff]
    %v5363 = vld [vmem:[%s7 + $0x28] sm:$0xff]
    %v5364 = vld [vmem:[%s7 + $0x30] sm:$0xff]
    %v5365 = vld [vmem:[%s7 + $0x38] sm:$0xff]
    %v5366 = vld [vmem:[%s7 + $0x40] sm:$0xff]
    %v5367 = vld [vmem:[%s7 + $0x48] sm:$0xff]
    %v5368 = vld [vmem:[%s7 + $0x50] sm:$0xff]
    %v5369 = vld [vmem:[%s7 + $0x58] sm:$0xff]
    %v5370 = vld [vmem:[%s7 + $0x60] sm:$0xff]
    %v5371 = vld [vmem:[%s7 + $0x68] sm:$0xff]
    %v5372 = vld [vmem:[%s7 + $0x70] sm:$0xff]
    %v5373 = vld [vmem:[%s7 + $0x78] sm:$0xff]
    %v5374 = vld [vmem:[%s7 + $0x80] sm:$0xff]
    %v5375 = vld [vmem:[%s7 + $0x88] sm:$0xff]
    %v5376 = vld [vmem:[%s7 + $0x90] sm:$0xff]
    %v5377 = vld [vmem:[%s7 + $0x98] sm:$0xff]
    %v5378 = vld [vmem:[%s7 + $0xa0] sm:$0xff]
    %v5379 = vld [vmem:[%s7 + $0xa8] sm:$0xff]
    %v5380 = vld [vmem:[%s7 + $0xb0] sm:$0xff]
    %v5381 = vld [vmem:[%s7 + $0xb8] sm:$0xff]
    %v5382 = vld [vmem:[%s7 + $0xc0] sm:$0xff]
    %v5383 = vld [vmem:[%s7 + $0xc8] sm:$0xff]
    %v5384 = vld [vmem:[%s7 + $0xd0] sm:$0xff]
    %v5385 = vld [vmem:[%s7 + $0xd8] sm:$0xff]
    %v5386 = vld [vmem:[%s7 + $0xe0] sm:$0xff]
    %v5387 = vld [vmem:[%s7 + $0xe8] sm:$0xff]
    %v5388 = vld [vmem:[%s7 + $0xf0] sm:$0xff]
    %v5389 = vld [vmem:[%s7 + $0xf8] sm:$0xff]
    %v5390 = vld [vmem:[%s7 + $0x100] sm:$0xff]
    %v5391 = vld [vmem:[%s7 + $0x108] sm:$0xff]
    %v5392 = vld [vmem:[%s7 + $0x110] sm:$0xff]
    %v5393 = vld [vmem:[%s7 + $0x118] sm:$0xff]
    %v5394 = vld [vmem:[%s7 + $0x120] sm:$0xff]
    %v5395 = vld [vmem:[%s7 + $0x128] sm:$0xff]
    %v5396 = vld [vmem:[%s7 + $0x130] sm:$0xff]
    %v5397 = vld [vmem:[%s7 + $0x138] sm:$0xff]
    %v5398 = vld [vmem:[%s7 + $0x140] sm:$0xff]
    %v5399 = vld [vmem:[%s7 + $0x148] sm:$0xff]
    %v5400 = vld [vmem:[%s7 + $0x150] sm:$0xff]
    %v5401 = vld [vmem:[%s7 + $0x158] sm:$0xff]
    %v5402 = vld [vmem:[%s7 + $0x160] sm:$0xff]
    %v5403 = vld [vmem:[%s7 + $0x168] sm:$0xff]
    %v5404 = vld [vmem:[%s7 + $0x170] sm:$0xff]
    %v5405 = vld [vmem:[%s7 + $0x178] sm:$0xff]
    %v5406 = vld [vmem:[%s7 + $0x180] sm:$0xff]
    %v5407 = vld [vmem:[%s7 + $0x188] sm:$0xff]
    %v5408 = vld [vmem:[%s7 + $0x190] sm:$0xff]
    %v5409 = vld [vmem:[%s7 + $0x198] sm:$0xff]
    %v5410 = vld [vmem:[%s7 + $0x1a0] sm:$0xff]
    %v5411 = vld [vmem:[%s7 + $0x1a8] sm:$0xff]
    %v5412 = vld [vmem:[%s7 + $0x1b0] sm:$0xff]
    %v5413 = vld [vmem:[%s7 + $0x1b8] sm:$0xff]
    %v5414 = vld [vmem:[%s7 + $0x1c0] sm:$0xff]
    %v5415 = vld [vmem:[%s7 + $0x1c8] sm:$0xff]
    %v5416 = vld [vmem:[%s7 + $0x1d0] sm:$0xff]
    %v5417 = vld [vmem:[%s7 + $0x1d8] sm:$0xff]
    %v5418 = vld [vmem:[%s7 + $0x1e0] sm:$0xff]
    %v5419 = vld [vmem:[%s7 + $0x1e8] sm:$0xff]
    %v5420 = vld [vmem:[%s7 + $0x1f0] sm:$0xff]
    %v5421 = vld [vmem:[%s7 + $0x1f8] sm:$0xff]
    %v5422 = vld [vmem:[%s7 + $0x200] sm:$0xff]
    %v5423 = vld [vmem:[%s7 + $0x208] sm:$0xff]
    %v5424 = vld [vmem:[%s7 + $0x210] sm:$0xff]
    %v5425 = vld [vmem:[%s7 + $0x218] sm:$0xff]
    %v5426 = vld [vmem:[%s7 + $0x220] sm:$0xff]
    %v5427 = vld [vmem:[%s7 + $0x228] sm:$0xff]
    %v5428 = vld [vmem:[%s7 + $0x230] sm:$0xff]
    %v5429 = vld [vmem:[%s7 + $0x238] sm:$0xff]
    %v5430 = vld [vmem:[%s7 + $0x240] sm:$0xff]
    %v5431 = vld [vmem:[%s7 + $0x248] sm:$0xff]
    %v5432 = vld [vmem:[%s7 + $0x250] sm:$0xff]
    %v5433 = vld [vmem:[%s7 + $0x258] sm:$0xff]
    %v5434 = vld [vmem:[%s7 + $0x260] sm:$0xff]
    %v5435 = vld [vmem:[%s7 + $0x268] sm:$0xff]
    %v5436 = vld [vmem:[%s7 + $0x270] sm:$0xff]
    %v5437 = vld [vmem:[%s7 + $0x278] sm:$0xff]
    %v5438 = vld [vmem:[%s7 + $0x280] sm:$0xff]
    %v5439 = vld [vmem:[%s7 + $0x288] sm:$0xff]
    %v5440 = vld [vmem:[%s7 + $0x290] sm:$0xff]
    %v5441 = vld [vmem:[%s7 + $0x298] sm:$0xff]
    %v5442 = vld [vmem:[%s7 + $0x2a0] sm:$0xff]
    %v5443 = vld [vmem:[%s7 + $0x2a8] sm:$0xff]
    %v5444 = vld [vmem:[%s7 + $0x2b0] sm:$0xff]
    %v5445 = vld [vmem:[%s7 + $0x2b8] sm:$0xff]
    %v5446 = vld [vmem:[%s7 + $0x2c0] sm:$0xff]
    %v5447 = vld [vmem:[%s7 + $0x2c8] sm:$0xff]
    %v5448 = vld [vmem:[%s7 + $0x2d0] sm:$0xff]
    %v5449 = vld [vmem:[%s7 + $0x2d8] sm:$0xff]
    %v5450 = vld [vmem:[%s7 + $0x2e0] sm:$0xff]
    %v5451 = vld [vmem:[%s7 + $0x2e8] sm:$0xff]
    %v5452 = vld [vmem:[%s7 + $0x2f0] sm:$0xff]
    %v5453 = vld [vmem:[%s7 + $0x2f8] sm:$0xff]
    %v5454 = vld [vmem:[%s7 + $0x300] sm:$0xff]
    %v5455 = vld [vmem:[%s7 + $0x308] sm:$0xff]
    %v5456 = vld [vmem:[%s7 + $0x310] sm:$0xff]
    %v5457 = vld [vmem:[%s7 + $0x318] sm:$0xff]
    %v5458 = vld [vmem:[%s7 + $0x320] sm:$0xff]
    %v5459 = vld [vmem:[%s7 + $0x328] sm:$0xff]
    %v5460 = vld [vmem:[%s7 + $0x330] sm:$0xff]
    %v5461 = vld [vmem:[%s7 + $0x338] sm:$0xff]
    %v5462 = vld [vmem:[%s7 + $0x340] sm:$0xff]
    %v5463 = vld [vmem:[%s7 + $0x348] sm:$0xff]
    %v5464 = vld [vmem:[%s7 + $0x350] sm:$0xff]
    %v5465 = vld [vmem:[%s7 + $0x358] sm:$0xff]
    %v5466 = vld [vmem:[%s7 + $0x360] sm:$0xff]
    %v5467 = vld [vmem:[%s7 + $0x368] sm:$0xff]
    %v5468 = vld [vmem:[%s7 + $0x370] sm:$0xff]
    %v5469 = vld [vmem:[%s7 + $0x378] sm:$0xff]
    %v5470 = vld [vmem:[%s7 + $0x380] sm:$0xff]
    %v5471 = vld [vmem:[%s7 + $0x388] sm:$0xff]
    %v5472 = vld [vmem:[%s7 + $0x390] sm:$0xff]
    %v5473 = vld [vmem:[%s7 + $0x398] sm:$0xff]
    %v5474 = vld [vmem:[%s7 + $0x3a0] sm:$0xff]
    %v5475 = vld [vmem:[%s7 + $0x3a8] sm:$0xff]
    %v5476 = vld [vmem:[%s7 + $0x3b0] sm:$0xff]
    %v5477 = vld [vmem:[%s7 + $0x3b8] sm:$0xff]
    %v5478 = vld [vmem:[%s7 + $0x3c0] sm:$0xff]
    %v5479 = vld [vmem:[%s7 + $0x3c8] sm:$0xff]
    %v5480 = vld [vmem:[%s7 + $0x3d0] sm:$0xff]
    %v5481 = vld [vmem:[%s7 + $0x3d8] sm:$0xff]
    %v5482 = vld [vmem:[%s7 + $0x3e0] sm:$0xff]
    %v5483 = vld [vmem:[%s7 + $0x3e8] sm:$0xff]
    %v5484 = vld [vmem:[%s7 + $0x3f0] sm:$0xff]
    %v5485 = vld [vmem:[%s7 + $0x3f8] sm:$0xff]
    %v5486 = vld [vmem:[%s8] sm:$0x1]
    %v5488 = vperm.slane %v5486, 0
    %5492 = vst [vmem:[#allocation1] ss:$4 sm:$0xff] %v5356
    %s5493 = scalar_lea.vmem [#allocation1], 32
    %5494 = vst [vmem:[%s5493] ss:$4 sm:$0xff] %v5357
    %v5495 = vld.sshfl [vmem:[#allocation1] sm:$0xff pattern:$0x73625140]
    %v5496 = vld.sshfl [vmem:[#allocation1 + $0x8] sm:$0xff pattern:$0x73625140]
    %v5497 = vld.sshfl [vmem:[#allocation1 + $0x10] sm:$0xff pattern:$0x73625140]
    %v5498 = vld.sshfl [vmem:[#allocation1 + $0x18] sm:$0xff pattern:$0x73625140]
    %v5499 = vld.sshfl [vmem:[#allocation1 + $0x20] sm:$0xff pattern:$0x73625140]
    %v5500 = vld.sshfl [vmem:[#allocation1 + $0x28] sm:$0xff pattern:$0x73625140]
    %v5501 = vld.sshfl [vmem:[#allocation1 + $0x30] sm:$0xff pattern:$0x73625140]
    %v5502 = vld.sshfl [vmem:[#allocation1 + $0x38] sm:$0xff pattern:$0x73625140]
    %5511 = vmatpush.msra.mxu0 %v5373
    %5512 = vmatpush.msra.mxu0 %v5372
    %5513 = vmatpush.msra.mxu0 %v5371
    %5514 = vmatpush.msra.mxu0 %v5370
    %5515 = vmatpush.msra.mxu0 %v5369
    %5516 = vmatpush.msra.mxu0 %v5368
    %5517 = vmatpush.msra.mxu0 %v5367
    %5518 = vmatpush.msra.mxu0 %v5366
    %5519 = vmatpush.msra.mxu0 %v5365
    %5520 = vmatpush.msra.mxu0 %v5364
    %5521 = vmatpush.msra.mxu0 %v5363
    %5522 = vmatpush.msra.mxu0 %v5362
    %5523 = vmatpush.msra.mxu0 %v5361
    %5524 = vmatpush.msra.mxu0 %v5360
    %5525 = vmatpush.msra.mxu0 %v5359
    %5526 = vmatpush.msra.mxu0 %v5358
    %5527 = vmatmul.f32.gmra.mxu0 %v5495
    %v5528 = vpop.f32.mrf.mxu0
    %v5529 = vadd.f32 %v5488, %v5528
    %5530 = vdwg.mxu0
    %5531 = vmatpush.msra.mxu0 %v5389
    %5532 = vmatpush.msra.mxu0 %v5388
    %5533 = vmatpush.msra.mxu0 %v5387
    %5534 = vmatpush.msra.mxu0 %v5386
    %5535 = vmatpush.msra.mxu0 %v5385
    %5536 = vmatpush.msra.mxu0 %v5384
    %5537 = vmatpush.msra.mxu0 %v5383
    %5538 = vmatpush.msra.mxu0 %v5382
    %5539 = vmatpush.msra.mxu0 %v5381
    %5540 = vmatpush.msra.mxu0 %v5380
    %5541 = vmatpush.msra.mxu0 %v5379
    %5542 = vmatpush.msra.mxu0 %v5378
    %5543 = vmatpush.msra.mxu0 %v5377
    %5544 = vmatpush.msra.mxu0 %v5376
    %5545 = vmatpush.msra.mxu0 %v5375
    %5546 = vmatpush.msra.mxu0 %v5374
    %5547 = vmatmul.f32.gmra.mxu0 %v5496
    %v5548 = vpop.f32.mrf.mxu0
    %v5549 = vadd.f32 %v5529, %v5548
    %5550 = vdwg.mxu0
    %5551 = vmatpush.msra.mxu0 %v5405
    %5552 = vmatpush.msra.mxu0 %v5404
    %5553 = vmatpush.msra.mxu0 %v5403
    %5554 = vmatpush.msra.mxu0 %v5402
    %5555 = vmatpush.msra.mxu0 %v5401
    %5556 = vmatpush.msra.mxu0 %v5400
    %5557 = vmatpush.msra.mxu0 %v5399
    %5558 = vmatpush.msra.mxu0 %v5398
    %5559 = vmatpush.msra.mxu0 %v5397
    %5560 = vmatpush.msra.mxu0 %v5396
    %5561 = vmatpush.msra.mxu0 %v5395
    %5562 = vmatpush.msra.mxu0 %v5394
    %5563 = vmatpush.msra.mxu0 %v5393
    %5564 = vmatpush.msra.mxu0 %v5392
    %5565 = vmatpush.msra.mxu0 %v5391
    %5566 = vmatpush.msra.mxu0 %v5390
    %5567 = vmatmul.f32.gmra.mxu0 %v5497
    %v5568 = vpop.f32.mrf.mxu0
    %v5569 = vadd.f32 %v5549, %v5568
    %5570 = vdwg.mxu0
    %5571 = vmatpush.msra.mxu0 %v5421
    %5572 = vmatpush.msra.mxu0 %v5420
    %5573 = vmatpush.msra.mxu0 %v5419
    %5574 = vmatpush.msra.mxu0 %v5418
    %5575 = vmatpush.msra.mxu0 %v5417
    %5576 = vmatpush.msra.mxu0 %v5416
    %5577 = vmatpush.msra.mxu0 %v5415
    %5578 = vmatpush.msra.mxu0 %v5414
    %5579 = vmatpush.msra.mxu0 %v5413
    %5580 = vmatpush.msra.mxu0 %v5412
    %5581 = vmatpush.msra.mxu0 %v5411
    %5582 = vmatpush.msra.mxu0 %v5410
    %5583 = vmatpush.msra.mxu0 %v5409
    %5584 = vmatpush.msra.mxu0 %v5408
    %5585 = vmatpush.msra.mxu0 %v5407
    %5586 = vmatpush.msra.mxu0 %v5406
    %5587 = vmatmul.f32.gmra.mxu0 %v5498
    %v5588 = vpop.f32.mrf.mxu0
    %v5589 = vadd.f32 %v5569, %v5588
    %5590 = vdwg.mxu0
    %5591 = vmatpush.msra.mxu0 %v5437
    %5592 = vmatpush.msra.mxu0 %v5436
    %5593 = vmatpush.msra.mxu0 %v5435
    %5594 = vmatpush.msra.mxu0 %v5434
    %5595 = vmatpush.msra.mxu0 %v5433
    %5596 = vmatpush.msra.mxu0 %v5432
    %5597 = vmatpush.msra.mxu0 %v5431
    %5598 = vmatpush.msra.mxu0 %v5430
    %5599 = vmatpush.msra.mxu0 %v5429
    %5600 = vmatpush.msra.mxu0 %v5428
    %5601 = vmatpush.msra.mxu0 %v5427
    %5602 = vmatpush.msra.mxu0 %v5426
    %5603 = vmatpush.msra.mxu0 %v5425
    %5604 = vmatpush.msra.mxu0 %v5424
    %5605 = vmatpush.msra.mxu0 %v5423
    %5606 = vmatpush.msra.mxu0 %v5422
    %5607 = vmatmul.f32.gmra.mxu0 %v5499
    %v5608 = vpop.f32.mrf.mxu0
    %v5609 = vadd.f32 %v5589, %v5608
    %5610 = vdwg.mxu0
    %5611 = vmatpush.msra.mxu0 %v5453
    %5612 = vmatpush.msra.mxu0 %v5452
    %5613 = vmatpush.msra.mxu0 %v5451
    %5614 = vmatpush.msra.mxu0 %v5450
    %5615 = vmatpush.msra.mxu0 %v5449
    %5616 = vmatpush.msra.mxu0 %v5448
    %5617 = vmatpush.msra.mxu0 %v5447
    %5618 = vmatpush.msra.mxu0 %v5446
    %5619 = vmatpush.msra.mxu0 %v5445
    %5620 = vmatpush.msra.mxu0 %v5444
    %5621 = vmatpush.msra.mxu0 %v5443
    %5622 = vmatpush.msra.mxu0 %v5442
    %5623 = vmatpush.msra.mxu0 %v5441
    %5624 = vmatpush.msra.mxu0 %v5440
    %5625 = vmatpush.msra.mxu0 %v5439
    %5626 = vmatpush.msra.mxu0 %v5438
    %5627 = vmatmul.f32.gmra.mxu0 %v5500
    %v5628 = vpop.f32.mrf.mxu0
    %v5629 = vadd.f32 %v5609, %v5628
    %5630 = vdwg.mxu0
    %5631 = vmatpush.msra.mxu0 %v5469
    %5632 = vmatpush.msra.mxu0 %v5468
    %5633 = vmatpush.msra.mxu0 %v5467
    %5634 = vmatpush.msra.mxu0 %v5466
    %5635 = vmatpush.msra.mxu0 %v5465
    %5636 = vmatpush.msra.mxu0 %v5464
    %5637 = vmatpush.msra.mxu0 %v5463
    %5638 = vmatpush.msra.mxu0 %v5462
    %5639 = vmatpush.msra.mxu0 %v5461
    %5640 = vmatpush.msra.mxu0 %v5460
    %5641 = vmatpush.msra.mxu0 %v5459
    %5642 = vmatpush.msra.mxu0 %v5458
    %5643 = vmatpush.msra.mxu0 %v5457
    %5644 = vmatpush.msra.mxu0 %v5456
    %5645 = vmatpush.msra.mxu0 %v5455
    %5646 = vmatpush.msra.mxu0 %v5454
    %5647 = vmatmul.f32.gmra.mxu0 %v5501
    %v5648 = vpop.f32.mrf.mxu0
    %v5649 = vadd.f32 %v5629, %v5648
    %5650 = vdwg.mxu0
    %5651 = vmatpush.msra.mxu0 %v5485
    %5652 = vmatpush.msra.mxu0 %v5484
    %5653 = vmatpush.msra.mxu0 %v5483
    %5654 = vmatpush.msra.mxu0 %v5482
    %5655 = vmatpush.msra.mxu0 %v5481
    %5656 = vmatpush.msra.mxu0 %v5480
    %5657 = vmatpush.msra.mxu0 %v5479
    %5658 = vmatpush.msra.mxu0 %v5478
    %5659 = vmatpush.msra.mxu0 %v5477
    %5660 = vmatpush.msra.mxu0 %v5476
    %5661 = vmatpush.msra.mxu0 %v5475
    %5662 = vmatpush.msra.mxu0 %v5474
    %5663 = vmatpush.msra.mxu0 %v5473
    %5664 = vmatpush.msra.mxu0 %v5472
    %5665 = vmatpush.msra.mxu0 %v5471
    %5666 = vmatpush.msra.mxu0 %v5470
    %5667 = vmatmul.f32.gmra.mxu0 %v5502
    %v5668 = vpop.f32.mrf.mxu0
    %v5669 = vadd.f32 %v5649, %v5668
    %5670 = vdwg.mxu0
    %v5671 = vmax.f32 %v5669, 0.0
    %v5672 = vld [vmem:[%s9] sm:$0xff]
    %v5673 = vld [vmem:[%s9 + $0x8] sm:$0xff]
    %v5674 = vld [vmem:[%s9 + $0x10] sm:$0xff]
    %v5675 = vld [vmem:[%s9 + $0x18] sm:$0xff]
    %v5676 = vld [vmem:[%s10] sm:$0x1]
    %v5678 = vperm.slane %v5676, 0
    %v5681 = vsel %vm2130, %v5671, 0
    %5683 = vmatpush.msra.mxu0 0.0
    %5684 = vmatpush.msra.mxu0 0.0
    %5685 = vmatpush.msra.mxu0 0.0
    %5686 = vmatpush.msra.mxu0 0.0
    %5687 = vmatpush.msra.mxu0 0.0
    %5688 = vmatpush.msra.mxu0 0.0
    %5689 = vmatpush.msra.mxu0 0.0
    %5690 = vmatpush.msra.mxu0 0.0
    %5691 = vmatpush.msra.mxu0 0.0
    %5692 = vmatpush.msra.mxu0 0.0
    %5693 = vmatpush.msra.mxu0 0.0
    %5694 = vmatpush.msra.mxu0 0.0
    %5695 = vmatpush.msra.mxu0 %v5675
    %5696 = vmatpush.msra.mxu0 %v5674
    %5697 = vmatpush.msra.mxu0 %v5673
    %5698 = vmatpush.msra.mxu0 %v5672
    %5699 = vmatmul.f32.gmra.mxu0 %v5681
    %v5700 = vpop.f32.mrf.mxu0
    %v5701 = vadd.f32 %v5678, %v5700
    %5702 = vdwg.mxu0
    %vm5703 = vcmask 25600
    %5704 = vst.msk [vmem:[#allocation4] sm:$0x3] %vm5703, %v5701
    // Predicated region
    $region46: #{convnet_forward.1} parent=1 // pred_check
      _
    $region47: #{convnet_forward.1} parent=1 // pred_check_branch
      %5706 = sbr.rel (0) target = $region49
    $region48: #{convnet_forward.1} parent=1 // pred_region
      %5708 = vsyncadd [#allocation5], 0
      %s5710 = sshll.u32 [#allocation4], 4
      %s5711 = int_to_ptr.vmem [resolvable:$true] %s5710
      %s5712 = sshll.u32 %s11, 4
      %s5713 = int_to_ptr.hbm [resolvable:$true] %s5712
      %5715 = dma.vmem_to_hbm [thread:$0]  %s5711, 32, %s5713, [#allocation5]
    $region49: #{convnet_forward.1} parent=1 // pred_fallthru
      _
    // Predicated region
    $region50: #{convnet_forward.1} parent=1 // pred_check
      _
    $region51: #{convnet_forward.1} parent=1 // pred_check_branch
      %5717 = sbr.rel (0) target = $region53
    $region52: #{convnet_forward.1} parent=1 // pred_region
      %5719 = dma.done [#allocation5], 32
    $region53: #{convnet_forward.1} parent=1 // pred_fallthru
      _
    %5720 = vsyncpa [#allocation5], 1

</llo_original>
